<compile_context>
chip_gen: v5e
topology: v5e:2x2
jax: 0.10.0
libtpu: 0.0.40
codegen_flags: <defaults>
</compile_context>

<pallas_src>
import functools
import math

import jax
import jax.numpy as jnp
from jax import lax
from jax.experimental import pallas as pl
from jax.experimental.pallas import tpu as pltpu

# Matmul operand dtype for the MXU (accumulation stays f32 via preferred_element_type).
MXU_DTYPE = jnp.bfloat16
# Explicit scoped-VMEM request (>= v5e's 16 MiB default, <= v7x's 64 MiB physical).
VMEM_LIMIT = 32 * 1024 * 1024


def _round_up(x, m):
    return ((x + m - 1) // m) * m


def _pick_tile(dim, target, align):
    """Largest multiple of `align` that divides `dim` and is <= target, else the full dim."""
    if dim <= target:
        return dim
    t = (target // align) * align
    while t >= align:
        if dim % t == 0:
            return t
        t -= align
    return dim


# ----------------------------------------------------------------------------
# Fused (pre-norm) linear:  y = [Norm(x)] @ W + b
#   - norm + bf16 cast done once per M-tile (bf16 VMEM scratch, reused over N tiles)
#   - M padded to x8, N padded to x128 in the wrapper (lane-dense stores, bounded
#     weight blocks for the vocab projection)
# ----------------------------------------------------------------------------
def _fused_linear_kernel(*refs, use_norm, eps, k_dim):
    it = iter(refs)
    x_ref = next(it)
    w_ref = next(it)
    b_ref = next(it)
    a_ref = next(it) if use_norm else None
    g_ref = next(it) if use_norm else None
    o_ref = next(it)
    xb_ref = next(it)        # (tm, K) bf16 scratch: normed / cast x, reused across j

    @pl.when(pl.program_id(1) == 0)
    def _():
        x = x_ref[...].astype(jnp.float32)
        if use_norm:
            mean = jnp.mean(x, axis=-1, keepdims=True)
            diff = x - mean
            # torch.Tensor.std() is unbiased (N-1 denominator)
            var = jnp.sum(diff * diff, axis=-1, keepdims=True) / (k_dim - 1)
            x = a_ref[...] * diff / (jnp.sqrt(var) + eps) + g_ref[...]
        xb_ref[...] = x.astype(MXU_DTYPE)

    y = jnp.dot(xb_ref[...], w_ref[...].astype(MXU_DTYPE),
                preferred_element_type=jnp.float32) + b_ref[...]
    o_ref[...] = y.astype(o_ref.dtype)


def fused_linear(x, w, b, norm=None, out_dtype=jnp.float32,
                 tm_target=256, tn_target=512):
    """x: (M, K), w: (K, N) bf16, b: (N,) f32 -> (M, N) out_dtype."""
    M, K = x.shape
    N = w.shape[1]
    Mp, Np = _round_up(M, 8), _round_up(N, 128)
    if Mp != M:
        x = jnp.pad(x, ((0, Mp - M), (0, 0)))
    if Np != N:
        w = jnp.pad(w, ((0, 0), (0, Np - N)))
        b = jnp.pad(b, (0, Np - N))
    tm = _pick_tile(Mp, tm_target, 8)
    tn = _pick_tile(Np, tn_target, 128)

    in_specs = [
        pl.BlockSpec((tm, K), lambda i, j: (i, 0)),
        pl.BlockSpec((K, tn), lambda i, j: (0, j)),
        pl.BlockSpec((1, tn), lambda i, j: (0, j)),
    ]
    args = [x, w, b.reshape(1, Np)]
    if norm is not None:
        in_specs += [pl.BlockSpec((1, K), lambda i, j: (0, 0)),
                     pl.BlockSpec((1, K), lambda i, j: (0, 0))]
        args += [norm["alpha"].reshape(1, K), norm["bias"].reshape(1, K)]

    out = pl.pallas_call(
        functools.partial(_fused_linear_kernel, use_norm=norm is not None,
                          eps=1e-6, k_dim=K),
        grid=(Mp // tm, Np // tn),
        in_specs=in_specs,
        out_specs=pl.BlockSpec((tm, tn), lambda i, j: (i, j)),
        out_shape=jax.ShapeDtypeStruct((Mp, Np), out_dtype),
        scratch_shapes=[pltpu.VMEM((tm, K), MXU_DTYPE)],
        compiler_params=pltpu.CompilerParams(
            # j axis reuses the scratch filled at j==0 -> must stay sequential
            dimension_semantics=("parallel", "arbitrary"),
            vmem_limit_bytes=VMEM_LIMIT),
    )(*args)
    if Mp != M or Np != N:
        out = out[:M, :N]
    return out


# ----------------------------------------------------------------------------
# Fully fused FFN block:  out = x + Linear2(ReLU(Linear1(Norm(x))))
#   normed x cached once per M-tile as bf16; d_ff is an in-VMEM reduction axis.
# ----------------------------------------------------------------------------
def _ffn_kernel(x_ref, a_ref, g_ref, w1_ref, b1_ref, w2_ref, b2_ref, o_ref,
                xn_ref, acc_ref, *, eps, d):
    f = pl.program_id(1)

    @pl.when(f == 0)
    def _():
        x = x_ref[...]
        mean = jnp.mean(x, axis=-1, keepdims=True)
        diff = x - mean
        var = jnp.sum(diff * diff, axis=-1, keepdims=True) / (d - 1)
        xn = a_ref[...] * diff / (jnp.sqrt(var) + eps) + g_ref[...]
        xn_ref[...] = xn.astype(MXU_DTYPE)          # bf16 scratch: cast once
        acc_ref[...] = jnp.zeros_like(acc_ref)

    h = jnp.dot(xn_ref[...], w1_ref[...].astype(MXU_DTYPE),
                preferred_element_type=jnp.float32) + b1_ref[...]
    h = jnp.maximum(h, 0.0)
    acc_ref[...] += jnp.dot(h.astype(MXU_DTYPE), w2_ref[...].astype(MXU_DTYPE),
                            preferred_element_type=jnp.float32)

    @pl.when(f == pl.num_programs(1) - 1)
    def _():
        o_ref[...] = (acc_ref[...] + b2_ref[...] + x_ref[...]).astype(o_ref.dtype)


def fused_ffn(x2d, norm_p, ff_p, tm_target=256, tf_target=1024):
    """x2d: (M, D) f32 -> (M, D) f32; the (M, d_ff) intermediate stays in VMEM."""
    M, D = x2d.shape
    F = ff_p["w1"].shape[1]
    Mp, Fp = _round_up(M, 8), _round_up(F, 128)
    x_in = jnp.pad(x2d, ((0, Mp - M), (0, 0))) if Mp != M else x2d
    w1, b1, w2 = ff_p["w1"], ff_p["b1"], ff_p["w2"]
    if Fp != F:
        # zero-padded hidden columns: ReLU(0) @ zero rows of w2 contribute nothing
        w1 = jnp.pad(w1, ((0, 0), (0, Fp - F)))
        b1 = jnp.pad(b1, (0, Fp - F))
        w2 = jnp.pad(w2, ((0, Fp - F), (0, 0)))
    tm = _pick_tile(Mp, tm_target, 8)
    tf = _pick_tile(Fp, tf_target, 128)

    out = pl.pallas_call(
        functools.partial(_ffn_kernel, eps=1e-6, d=D),
        grid=(Mp // tm, Fp // tf),
        in_specs=[
            pl.BlockSpec((tm, D), lambda i, f: (i, 0)),
            pl.BlockSpec((1, D), lambda i, f: (0, 0)),
            pl.BlockSpec((1, D), lambda i, f: (0, 0)),
            pl.BlockSpec((D, tf), lambda i, f: (0, f)),
            pl.BlockSpec((1, tf), lambda i, f: (0, f)),
            pl.BlockSpec((tf, D), lambda i, f: (f, 0)),
            pl.BlockSpec((1, D), lambda i, f: (0, 0)),
        ],
        out_specs=pl.BlockSpec((tm, D), lambda i, f: (i, 0)),
        out_shape=jax.ShapeDtypeStruct((Mp, D), jnp.float32),
        scratch_shapes=[pltpu.VMEM((tm, D), MXU_DTYPE),     # normed x (bf16)
                        pltpu.VMEM((tm, D), jnp.float32)],  # accumulator
        compiler_params=pltpu.CompilerParams(
            dimension_semantics=("parallel", "arbitrary"),
            vmem_limit_bytes=VMEM_LIMIT),
    )(x_in, norm_p["alpha"].reshape(1, D), norm_p["bias"].reshape(1, D),
      w1, b1.reshape(1, Fp), w2, ff_p["b2"].reshape(1, D))
    return out[:M] if Mp != M else out


# ----------------------------------------------------------------------------
# Multi-head attention on packed bf16 projection slabs, one batch element per
# grid step, with the output projection (Wo, bo) and residual add fused in.
# ----------------------------------------------------------------------------
def _attn_body(q_ref, kv_ref, m_ref, wo_ref, bo_ref, r_ref, o_ref, ctx_ref,
               *, heads, dk, scale, q_off, k_off, v_off):
    Lq = o_ref.shape[1]
    Lk = kv_ref.shape[1]
    # additive mask bias, computed + broadcast ONCE (not per head)
    bias = jnp.where(m_ref[0] == 0, jnp.float32(-1e9), jnp.float32(0.0))
    bias = jnp.broadcast_to(bias, (Lq, Lk))
    scale_b = jnp.array(scale, dtype=MXU_DTYPE)

    # TODO(synk): heads processed one at a time (dk-deep matmuls under-fill the
    # 256-wide v6e/v7x MXU); head batching / Lk tiling left for larger shapes.
    for h in range(heads):
        qs = slice(q_off + h * dk, q_off + (h + 1) * dk)
        ks = slice(k_off + h * dk, k_off + (h + 1) * dk)
        vs = slice(v_off + h * dk, v_off + (h + 1) * dk)
        q = q_ref[0, :, qs] * scale_b                      # (Lq, dk) bf16, scale folded in
        s = lax.dot_general(q, kv_ref[0, :, ks],           # contract dk of both (no kT)
                            (((1,), (1,)), ((), ())),
                            preferred_element_type=jnp.float32)
        s = s + bias
        s = s - jnp.max(s, axis=-1, keepdims=True)
        e = jnp.exp(s)
        p = e * pl.reciprocal(jnp.sum(e, axis=-1, keepdims=True), approx=True)
        pv = jnp.dot(p.astype(MXU_DTYPE), kv_ref[0, :, vs],
                     preferred_element_type=jnp.float32)
        ctx_ref[:, h * dk:(h + 1) * dk] = pv.astype(MXU_DTYPE)   # per-head store

    # fused output projection + bias + residual -> single f32 store
    y = jnp.dot(ctx_ref[...], wo_ref[...], preferred_element_type=jnp.float32)
    o_ref[0] = (y + bo_ref[...] + r_ref[0]).astype(o_ref.dtype)


def _self_attn_kernel(qkv_ref, m_ref, wo_ref, bo_ref, r_ref, o_ref, ctx_ref,
                      *, heads, dk, scale):
    _attn_body(qkv_ref, qkv_ref, m_ref, wo_ref, bo_ref, r_ref, o_ref, ctx_ref,
               heads=heads, dk=dk, scale=scale,
               q_off=0, k_off=heads * dk, v_off=2 * heads * dk)


def _cross_attn_kernel(q_ref, kv_ref, m_ref, wo_ref, bo_ref, r_ref, o_ref, ctx_ref,
                       *, heads, dk, scale):
    _attn_body(q_ref, kv_ref, m_ref, wo_ref, bo_ref, r_ref, o_ref, ctx_ref,
               heads=heads, dk=dk, scale=scale,
               q_off=0, k_off=0, v_off=heads * dk)


def self_attention(qkv, mask, wo, bo, residual, heads, dk):
    """qkv: (B, Lq, 3*D) bf16 packed Q|K|V; mask: (B, Lm, Lq) int (0 == masked);
    returns residual + attn(...) @ wo + bo as (B, Lq, D) f32."""
    B, Lq, D3 = qkv.shape
    D = heads * dk
    Lm, Lk = mask.shape[1], mask.shape[2]
    return pl.pallas_call(
        functools.partial(_self_attn_kernel, heads=heads, dk=dk,
                          scale=1.0 / math.sqrt(dk)),
        grid=(B,),
        in_specs=[
            pl.BlockSpec((1, Lq, D3), lambda b: (b, 0, 0)),
            pl.BlockSpec((1, Lm, Lk), lambda b: (b, 0, 0)),
            pl.BlockSpec((D, D), lambda b: (0, 0)),
            pl.BlockSpec((1, D), lambda b: (0, 0)),
            pl.BlockSpec((1, Lq, D), lambda b: (b, 0, 0)),
        ],
        out_specs=pl.BlockSpec((1, Lq, D), lambda b: (b, 0, 0)),
        out_shape=jax.ShapeDtypeStruct((B, Lq, D), jnp.float32),
        scratch_shapes=[pltpu.VMEM((Lq, D), MXU_DTYPE)],
        compiler_params=pltpu.CompilerParams(
            dimension_semantics=("parallel",),
            vmem_limit_bytes=VMEM_LIMIT),
    )(qkv, mask, wo, bo.reshape(1, D), residual)


def cross_attention(q, kv, mask, wo, bo, residual, heads, dk):
    """q: (B, Lq, D) bf16; kv: (B, Lk, 2*D) bf16 packed K|V; mask: (B, Lm, Lk);
    returns residual + attn(...) @ wo + bo as (B, Lq, D) f32."""
    B, Lq, D = q.shape
    Lk = kv.shape[1]
    Lm = mask.shape[1]
    return pl.pallas_call(
        functools.partial(_cross_attn_kernel, heads=heads, dk=dk,
                          scale=1.0 / math.sqrt(dk)),
        grid=(B,),
        in_specs=[
            pl.BlockSpec((1, Lq, D), lambda b: (b, 0, 0)),
            pl.BlockSpec((1, Lk, 2 * D), lambda b: (b, 0, 0)),
            pl.BlockSpec((1, Lm, Lk), lambda b: (b, 0, 0)),
            pl.BlockSpec((D, D), lambda b: (0, 0)),
            pl.BlockSpec((1, D), lambda b: (0, 0)),
            pl.BlockSpec((1, Lq, D), lambda b: (b, 0, 0)),
        ],
        out_specs=pl.BlockSpec((1, Lq, D), lambda b: (b, 0, 0)),
        out_shape=jax.ShapeDtypeStruct((B, Lq, D), jnp.float32),
        scratch_shapes=[pltpu.VMEM((Lq, D), MXU_DTYPE)],
        compiler_params=pltpu.CompilerParams(
            dimension_semantics=("parallel",),
            vmem_limit_bytes=VMEM_LIMIT),
    )(q, kv, mask, wo, bo.reshape(1, D), residual)


# ----------------------------------------------------------------------------
# Model glue (embedding / PE / parameter plumbing in plain JAX)
# ----------------------------------------------------------------------------
def make_pe_table(max_len, d_model):
    # SamLynnEvans repo formula: even column i -> sin(pos / 10000^(2i/d)),
    # odd column i+1 -> cos(pos / 10000^(2(i+1)/d)); i.e. exponent 2c/d for every column c.
    pos = jnp.arange(max_len, dtype=jnp.float32)[:, None]
    c = jnp.arange(d_model, dtype=jnp.float32)[None, :]
    angle = pos / jnp.power(10000.0, (2.0 * c) / d_model)
    even = (jnp.arange(d_model) % 2) == 0
    return jnp.where(even[None, :], jnp.sin(angle), jnp.cos(angle))


def embed_pe(embed_table, tokens, d_model, pe_table):
    # TODO(synk): token-embedding gather + PE add stay in plain JAX (the gather has no
    # rectangular-tile BlockSpec pattern; it would need a manual DMA-gather kernel).
    L = tokens.shape[1]
    x = jnp.take(embed_table, tokens, axis=0) * math.sqrt(d_model)
    return x + pe_table[:L][None, :, :]       # dropout == identity (eval)


def transformer_forward(params, encoding, trg, encoding_mask, trg_mask, d_model, heads):
    dec = params["decoder"]
    x = embed_pe(dec["embed"], trg, d_model, params["pe"])     # (B, Lt, D) f32
    B, Lt, D = x.shape
    Ls = encoding.shape[1]
    dk = D // heads
    e2d = encoding.reshape(B * Ls, D)
    x2d = x.reshape(B * Lt, D)

    for lp in dec["layers"]:
        # ---- self attention:  x = x + W_o(attn(norm1(x), trg_mask)) ----
        qkv = fused_linear(x2d, lp["attn1"]["wqkv"], lp["attn1"]["bqkv"],
                           norm=lp["norm1"], out_dtype=MXU_DTYPE)
        x2d = self_attention(qkv.reshape(B, Lt, 3 * D), trg_mask,
                             lp["attn1"]["wo"], lp["attn1"]["bo"],
                             x2d.reshape(B, Lt, D), heads, dk).reshape(B * Lt, D)
        # ---- cross attention: x = x + W_o(attn(norm2(x), encoding, encoding, src_mask)) ----
        q = fused_linear(x2d, lp["attn2"]["wq"], lp["attn2"]["bq"],
                         norm=lp["norm2"], out_dtype=MXU_DTYPE)
        kv = fused_linear(e2d, lp["attn2"]["wkv"], lp["attn2"]["bkv"],
                          out_dtype=MXU_DTYPE)
        x2d = cross_attention(q.reshape(B, Lt, D), kv.reshape(B, Ls, 2 * D),
                              encoding_mask, lp["attn2"]["wo"], lp["attn2"]["bo"],
                              x2d.reshape(B, Lt, D), heads, dk).reshape(B * Lt, D)
        # ---- feed-forward: x = x + FFN(norm3(x)), fully fused ----
        x2d = fused_ffn(x2d, lp["norm3"], lp["ff"])

    # final decoder Norm fused into the output projection (nn.Linear(d_model, trg_vocab));
    # vocab is padded to x128 lane-dense tiles inside fused_linear, tm raised to cut
    # re-streaming of the (d_model, vocab) weight.
    logits = fused_linear(x2d, params["out_w"], params["out_b"], norm=dec["norm"],
                          out_dtype=jnp.float32, tm_target=512)
    return logits.reshape(B, Lt, -1)


# ----------------------------------------------------------------------------
# Deterministic parameter init (shapes follow the PyTorch __init__; weights bf16)
# ----------------------------------------------------------------------------
def init_params(key, trg_vocab, d_model, N, heads, d_ff, max_len=200):
    keys = iter(jax.random.split(key, 256))

    def w(shape):
        return (jax.random.normal(next(keys), shape, jnp.float32) * 0.1).astype(MXU_DTYPE)

    def b(n):
        return jnp.zeros((n,), jnp.float32)

    def norm_p():
        return {"alpha": jnp.ones((d_model,), jnp.float32),
                "bias": jnp.zeros((d_model,), jnp.float32)}

    def self_attn_p():   # packed Wq|Wk|Wv
        return {"wqkv": w((d_model, 3 * d_model)), "bqkv": b(3 * d_model),
                "wo": w((d_model, d_model)), "bo": b(d_model)}

    def cross_attn_p():  # Wq separate, packed Wk|Wv (applied to the encoding)
        return {"wq": w((d_model, d_model)), "bq": b(d_model),
                "wkv": w((d_model, 2 * d_model)), "bkv": b(2 * d_model),
                "wo": w((d_model, d_model)), "bo": b(d_model)}

    def ff_p():
        return {"w1": w((d_model, d_ff)), "b1": b(d_ff),
                "w2": w((d_ff, d_model)), "b2": b(d_model)}

    layers = [{"norm1": norm_p(), "norm2": norm_p(), "norm3": norm_p(),
               "attn1": self_attn_p(), "attn2": cross_attn_p(), "ff": ff_p()}
              for _ in range(N)]
    dec = {"embed": jax.random.normal(next(keys), (trg_vocab, d_model), jnp.float32) * 0.1,
           "layers": layers, "norm": norm_p()}
    return {"decoder": dec,
            "out_w": w((d_model, trg_vocab)), "out_b": b(trg_vocab),
            "pe": make_pe_table(max_len, d_model)}


# ----------------------------------------------------------------------------
if __name__ == "__main__":
    # small shapes consistent with the module
    B, Ls, Lt = 2, 16, 8
    trg_vocab = 96
    d_model, N, heads = 64, 2, 4
    d_ff = 128   # tutorial default is 2048; kept small for the synthetic test

    key = jax.random.PRNGKey(0)
    kp, ke, kt = jax.random.split(key, 3)
    params = init_params(kp, trg_vocab, d_model, N, heads, d_ff)

    encoding = jax.random.normal(ke, (B, Ls, d_model), jnp.float32)   # pre-computed encoder output
    trg = jax.random.randint(kt, (B, Lt), 0, trg_vocab, dtype=jnp.int32)
    encoding_mask = jnp.ones((B, 1, Ls), dtype=jnp.int32)
    trg_mask = jnp.broadcast_to(
        jnp.tril(jnp.ones((Lt, Lt), dtype=jnp.int32))[None], (B, Lt, Lt))

    fwd = jax.jit(functools.partial(transformer_forward, d_model=d_model, heads=heads))
    out = fwd(params, encoding, trg, encoding_mask, trg_mask)
    out = jax.block_until_ready(out)

    assert out.shape == (B, Lt, trg_vocab), out.shape
    assert bool(jnp.all(jnp.isfinite(out)))
    print("KERNEL_OK")
</pallas_src>

<mosaic_0001>
module attributes {stable_mosaic.version = 11 : i64} {
  func.func @_fused_linear_kernel(%arg0: i32, %arg1: i32, %arg2: memref<16x64xf32, #tpu.memory_space<vmem>>, %arg3: memref<64x256xbf16, #tpu.memory_space<vmem>>, %arg4: memref<1x256xf32, #tpu.memory_space<vmem>>, %arg5: memref<1x64xf32, #tpu.memory_space<vmem>>, %arg6: memref<1x64xf32, #tpu.memory_space<vmem>>, %arg7: memref<16x256xbf16, #tpu.memory_space<vmem>>, %arg8: memref<16x64xbf16, #tpu.memory_space<vmem>>) attributes {dimension_semantics = [#tpu.dimension_semantics<parallel>, #tpu.dimension_semantics<arbitrary>], iteration_bounds = array<i64: 1, 1>, scalar_prefetch = 0 : i64, scratch_operands = 1 : i64, tpu.core_type = #tpu.core_type<tc>, window_params = [{transform_indices = @transform_0, window_bounds = array<i64: 16, 64>}, {transform_indices = @transform_1, window_bounds = array<i64: 64, 256>}, {transform_indices = @transform_2, window_bounds = array<i64: 1, 256>}, {pipeline_mode = #tpu.pipeline_mode<synchronous>, transform_indices = @transform_3, window_bounds = array<i64: 1, 64>}, {pipeline_mode = #tpu.pipeline_mode<synchronous>, transform_indices = @transform_4, window_bounds = array<i64: 1, 64>}, {transform_indices = @transform_5, window_bounds = array<i64: 16, 256>}]} {
    %c0_i32 = arith.constant 0 : i32
    %0 = arith.cmpi eq, %arg1, %c0_i32 : i32
    %1 = arith.extui %0 : i1 to i32
    %c0_i32_0 = arith.constant 0 : i32
    %2 = arith.cmpi ne, %1, %c0_i32_0 : i32
    scf.if %2 {
      %c0_8 = arith.constant 0 : index
      %c0_9 = arith.constant 0 : index
      %11 = vector.load %arg2[%c0_8, %c0_9] : memref<16x64xf32, #tpu.memory_space<vmem>>, vector<16x64xf32>
      %cst_10 = arith.constant dense<0.000000e+00> : vector<16xf32>
      %12 = vector.multi_reduction <add>, %11, %cst_10 [1] : vector<16x64xf32> to vector<16xf32>
      %13 = vector.shape_cast %12 : vector<16xf32> to vector<16x1xf32>
      %cst_11 = arith.constant 6.400000e+01 : f32
      %14 = vector.broadcast %cst_11 : f32 to vector<16x1xf32>
      %15 = arith.divf %13, %14 : vector<16x1xf32>
      %16 = vector.broadcast %15 : vector<16x1xf32> to vector<16x64xf32>
      %17 = arith.subf %11, %16 : vector<16x64xf32>
      %18 = arith.mulf %17, %17 : vector<16x64xf32>
      %cst_12 = arith.constant dense<0.000000e+00> : vector<16xf32>
      %19 = vector.multi_reduction <add>, %18, %cst_12 [1] : vector<16x64xf32> to vector<16xf32>
      %20 = vector.shape_cast %19 : vector<16xf32> to vector<16x1xf32>
      %cst_13 = arith.constant 6.300000e+01 : f32
      %21 = vector.broadcast %cst_13 : f32 to vector<16x1xf32>
      %22 = arith.divf %20, %21 : vector<16x1xf32>
      %c0_14 = arith.constant 0 : index
      %c0_15 = arith.constant 0 : index
      %23 = vector.load %arg5[%c0_14, %c0_15] : memref<1x64xf32, #tpu.memory_space<vmem>>, vector<1x64xf32>
      %24 = vector.broadcast %23 : vector<1x64xf32> to vector<16x64xf32>
      %25 = arith.mulf %24, %17 : vector<16x64xf32>
      %26 = math.sqrt %22 : vector<16x1xf32>
      %cst_16 = arith.constant 9.99999997E-7 : f32
      %27 = vector.broadcast %cst_16 : f32 to vector<16x1xf32>
      %28 = arith.addf %26, %27 : vector<16x1xf32>
      %29 = vector.broadcast %28 : vector<16x1xf32> to vector<16x64xf32>
      %30 = arith.divf %25, %29 : vector<16x64xf32>
      %c0_17 = arith.constant 0 : index
      %c0_18 = arith.constant 0 : index
      %31 = vector.load %arg6[%c0_17, %c0_18] : memref<1x64xf32, #tpu.memory_space<vmem>>, vector<1x64xf32>
      %32 = vector.broadcast %31 : vector<1x64xf32> to vector<16x64xf32>
      %33 = arith.addf %30, %32 : vector<16x64xf32>
      %34 = arith.truncf %33 : vector<16x64xf32> to vector<16x64xbf16>
      %c0_19 = arith.constant 0 : index
      %c0_20 = arith.constant 0 : index
      %35 = vector.load %arg8[%c0_19, %c0_20] : memref<16x64xbf16, #tpu.memory_space<vmem>>, vector<16x64xbf16>
      tpu.vector_store %arg8[%c0_19, %c0_20], %34 {strides = array<i32>} : memref<16x64xbf16, #tpu.memory_space<vmem>>, vector<16x64xbf16>,
    } else {
    }
    %c0 = arith.constant 0 : index
    %c0_1 = arith.constant 0 : index
    %3 = vector.load %arg8[%c0, %c0_1] : memref<16x64xbf16, #tpu.memory_space<vmem>>, vector<16x64xbf16>
    %c0_2 = arith.constant 0 : index
    %c0_3 = arith.constant 0 : index
    %4 = vector.load %arg3[%c0_2, %c0_3] : memref<64x256xbf16, #tpu.memory_space<vmem>>, vector<64x256xbf16>
    %cst = arith.constant dense<0.000000e+00> : vector<16x256xf32>
    %5 = tpu.matmul %3, %4, %cst {dimension_numbers = #tpu.dot_dimension_numbers<[1], [0], [0], [1], [0, 0, 1, 1], [], []>} : vector<16x64xbf16>, vector<64x256xbf16>, vector<16x256xf32> -> vector<16x256xf32>
    %c0_4 = arith.constant 0 : index
    %c0_5 = arith.constant 0 : index
    %6 = vector.load %arg4[%c0_4, %c0_5] : memref<1x256xf32, #tpu.memory_space<vmem>>, vector<1x256xf32>
    %7 = vector.broadcast %6 : vector<1x256xf32> to vector<16x256xf32>
    %8 = arith.addf %5, %7 : vector<16x256xf32>
    %9 = arith.truncf %8 : vector<16x256xf32> to vector<16x256xbf16>
    %c0_6 = arith.constant 0 : index
    %c0_7 = arith.constant 0 : index
    %10 = vector.load %arg7[%c0_6, %c0_7] : memref<16x256xbf16, #tpu.memory_space<vmem>>, vector<16x256xbf16>
    tpu.vector_store %arg7[%c0_6, %c0_7], %9 {strides = array<i32>} : memref<16x256xbf16, #tpu.memory_space<vmem>>, vector<16x256xbf16>,
    return
  }
  func.func @transform_0(%arg0: i32, %arg1: i32) -> (i32, i32) {
    %c0_i32 = arith.constant 0 : i32
    %c0_i32_0 = arith.constant 0 : i32
    return %arg0, %c0_i32 : i32, i32
  }
  func.func @transform_1(%arg0: i32, %arg1: i32) -> (i32, i32) {
    %c0_i32 = arith.constant 0 : i32
    %c0_i32_0 = arith.constant 0 : i32
    return %c0_i32, %arg1 : i32, i32
  }
  func.func @transform_2(%arg0: i32, %arg1: i32) -> (i32, i32) {
    %c0_i32 = arith.constant 0 : i32
    %c0_i32_0 = arith.constant 0 : i32
    return %c0_i32, %arg1 : i32, i32
  }
  func.func @transform_3(%arg0: i32, %arg1: i32) -> (i32, i32) {
    %c0_i32 = arith.constant 0 : i32
    %c0_i32_0 = arith.constant 0 : i32
    %c0_i32_1 = arith.constant 0 : i32
    return %c0_i32, %c0_i32_0 : i32, i32
  }
  func.func @transform_4(%arg0: i32, %arg1: i32) -> (i32, i32) {
    %c0_i32 = arith.constant 0 : i32
    %c0_i32_0 = arith.constant 0 : i32
    %c0_i32_1 = arith.constant 0 : i32
    return %c0_i32, %c0_i32_0 : i32, i32
  }
  func.func @transform_5(%arg0: i32, %arg1: i32) -> (i32, i32) {
    %c0_i32 = arith.constant 0 : i32
    return %arg0, %arg1 : i32, i32
  }
}

module attributes {stable_mosaic.version = 11 : i64} {
  func.func @_self_attn_kernel(%arg0: i32, %arg1: memref<1x8x192xbf16, #tpu.memory_space<vmem>>, %arg2: memref<1x8x8xi32, #tpu.memory_space<vmem>>, %arg3: memref<64x64xbf16, #tpu.memory_space<vmem>>, %arg4: memref<1x64xf32, #tpu.memory_space<vmem>>, %arg5: memref<1x8x64xf32, #tpu.memory_space<vmem>>, %arg6: memref<1x8x64xf32, #tpu.memory_space<vmem>>, %arg7: memref<8x64xbf16, #tpu.memory_space<vmem>>) attributes {dimension_semantics = [#tpu.dimension_semantics<parallel>], iteration_bounds = array<i64: 2>, scalar_prefetch = 0 : i64, scratch_operands = 1 : i64, tpu.core_type = #tpu.core_type<tc>, window_params = [{transform_indices = @transform_0, window_bounds = array<i64: 1, 8, 192>}, {transform_indices = @transform_1, window_bounds = array<i64: 1, 8, 8>}, {pipeline_mode = #tpu.pipeline_mode<synchronous>, transform_indices = @transform_2, window_bounds = array<i64: 64, 64>}, {pipeline_mode = #tpu.pipeline_mode<synchronous>, transform_indices = @transform_3, window_bounds = array<i64: 1, 64>}, {transform_indices = @transform_4, window_bounds = array<i64: 1, 8, 64>}, {transform_indices = @transform_5, window_bounds = array<i64: 1, 8, 64>}]} {
    %c0 = arith.constant 0 : index
    %c0_0 = arith.constant 0 : index
    %c0_1 = arith.constant 0 : index
    %0 = vector.load %arg2[%c0, %c0_0, %c0_1] : memref<1x8x8xi32, #tpu.memory_space<vmem>>, vector<1x8x8xi32>
    %1 = vector.shape_cast %0 : vector<1x8x8xi32> to vector<8x8xi32>
    %c0_i32 = arith.constant 0 : i32
    %2 = vector.broadcast %c0_i32 : i32 to vector<8x8xi32>
    %3 = arith.cmpi eq, %1, %2 : vector<8x8xi32>
    %cst = arith.constant -1.000000e+09 : f32
    %cst_2 = arith.constant 0.000000e+00 : f32
    %4 = vector.broadcast %cst : f32 to vector<8x8xf32>
    %5 = vector.broadcast %cst_2 : f32 to vector<8x8xf32>
    %6 = arith.select %3, %4, %5 : vector<8x8xi1>, vector<8x8xf32>
    %c0_3 = arith.constant 0 : index
    %c0_4 = arith.constant 0 : index
    %c0_5 = arith.constant 0 : index
    %7 = vector.load %arg1[%c0_3, %c0_4, %c0_5] : memref<1x8x192xbf16, #tpu.memory_space<vmem>>, vector<1x8x16xbf16>
    %8 = vector.shape_cast %7 : vector<1x8x16xbf16> to vector<8x16xbf16>
    %cst_6 = arith.constant 2.500000e-01 : bf16
    %9 = vector.broadcast %cst_6 : bf16 to vector<8x16xbf16>
    %10 = arith.mulf %8, %9 : vector<8x16xbf16>
    %c0_7 = arith.constant 0 : index
    %c0_8 = arith.constant 0 : index
    %c64 = arith.constant 64 : index
    %11 = vector.load %arg1[%c0_7, %c0_8, %c64] : memref<1x8x192xbf16, #tpu.memory_space<vmem>>, vector<1x8x16xbf16>
    %12 = vector.shape_cast %11 : vector<1x8x16xbf16> to vector<8x16xbf16>
    %cst_9 = arith.constant dense<0.000000e+00> : vector<8x8xf32>
    %13 = tpu.matmul %10, %12, %cst_9 {dimension_numbers = #tpu.dot_dimension_numbers<[1], [1], [0], [0], [0, 0, 1, 0], [], []>} : vector<8x16xbf16>, vector<8x16xbf16>, vector<8x8xf32> -> vector<8x8xf32>
    %14 = arith.addf %13, %6 : vector<8x8xf32>
    %cst_10 = arith.constant dense<0xFF800000> : vector<8xf32>
    %15 = vector.multi_reduction <maximumf>, %14, %cst_10 [1] : vector<8x8xf32> to vector<8xf32>
    %16 = vector.shape_cast %15 : vector<8xf32> to vector<8x1xf32>
    %17 = vector.broadcast %16 : vector<8x1xf32> to vector<8x8xf32>
    %18 = arith.subf %14, %17 : vector<8x8xf32>
    %19 = math.exp %18 : vector<8x8xf32>
    %cst_11 = arith.constant dense<0.000000e+00> : vector<8xf32>
    %20 = vector.multi_reduction <add>, %19, %cst_11 [1] : vector<8x8xf32> to vector<8xf32>
    %21 = vector.shape_cast %20 : vector<8xf32> to vector<8x1xf32>
    %22 = tpu.reciprocal %21 {approx = true} : vector<8x1xf32> -> vector<8x1xf32>
    %23 = vector.broadcast %22 : vector<8x1xf32> to vector<8x8xf32>
    %24 = arith.mulf %19, %23 : vector<8x8xf32>
    %25 = arith.truncf %24 : vector<8x8xf32> to vector<8x8xbf16>
    %c0_12 = arith.constant 0 : index
    %c0_13 = arith.constant 0 : index
    %c128 = arith.constant 128 : index
    %26 = vector.load %arg1[%c0_12, %c0_13, %c128] : memref<1x8x192xbf16, #tpu.memory_space<vmem>>, vector<1x8x16xbf16>
    %27 = vector.shape_cast %26 : vector<1x8x16xbf16> to vector<8x16xbf16>
    %cst_14 = arith.constant dense<0.000000e+00> : vector<8x16xf32>
    %28 = tpu.matmul %25, %27, %cst_14 {dimension_numbers = #tpu.dot_dimension_numbers<[1], [0], [0], [1], [0, 0, 1, 1], [], []>} : vector<8x8xbf16>, vector<8x16xbf16>, vector<8x16xf32> -> vector<8x16xf32>
    %29 = arith.truncf %28 : vector<8x16xf32> to vector<8x16xbf16>
    %c0_15 = arith.constant 0 : index
    %c0_16 = arith.constant 0 : index
    %30 = vector.load %arg7[%c0_15, %c0_16] : memref<8x64xbf16, #tpu.memory_space<vmem>>, vector<8x16xbf16>
    tpu.vector_store %arg7[%c0_15, %c0_16], %29 {strides = array<i32>} : memref<8x64xbf16, #tpu.memory_space<vmem>>, vector<8x16xbf16>,
    %c0_17 = arith.constant 0 : index
    %c0_18 = arith.constant 0 : index
    %c16 = arith.constant 16 : index
    %31 = vector.load %arg1[%c0_17, %c0_18, %c16] : memref<1x8x192xbf16, #tpu.memory_space<vmem>>, vector<1x8x16xbf16>
    %32 = vector.shape_cast %31 : vector<1x8x16xbf16> to vector<8x16xbf16>
    %cst_19 = arith.constant 2.500000e-01 : bf16
    %33 = vector.broadcast %cst_19 : bf16 to vector<8x16xbf16>
    %34 = arith.mulf %32, %33 : vector<8x16xbf16>
    %c0_20 = arith.constant 0 : index
    %c0_21 = arith.constant 0 : index
    %c80 = arith.constant 80 : index
    %35 = vector.load %arg1[%c0_20, %c0_21, %c80] : memref<1x8x192xbf16, #tpu.memory_space<vmem>>, vector<1x8x16xbf16>
    %36 = vector.shape_cast %35 : vector<1x8x16xbf16> to vector<8x16xbf16>
    %cst_22 = arith.constant dense<0.000000e+00> : vector<8x8xf32>
    %37 = tpu.matmul %34, %36, %cst_22 {dimension_numbers = #tpu.dot_dimension_numbers<[1], [1], [0], [0], [0, 0, 1, 0], [], []>} : vector<8x16xbf16>, vector<8x16xbf16>, vector<8x8xf32> -> vector<8x8xf32>
    %38 = arith.addf %37, %6 : vector<8x8xf32>
    %cst_23 = arith.constant dense<0xFF800000> : vector<8xf32>
    %39 = vector.multi_reduction <maximumf>, %38, %cst_23 [1] : vector<8x8xf32> to vector<8xf32>
    %40 = vector.shape_cast %39 : vector<8xf32> to vector<8x1xf32>
    %41 = vector.broadcast %40 : vector<8x1xf32> to vector<8x8xf32>
    %42 = arith.subf %38, %41 : vector<8x8xf32>
    %43 = math.exp %42 : vector<8x8xf32>
    %cst_24 = arith.constant dense<0.000000e+00> : vector<8xf32>
    %44 = vector.multi_reduction <add>, %43, %cst_24 [1] : vector<8x8xf32> to vector<8xf32>
    %45 = vector.shape_cast %44 : vector<8xf32> to vector<8x1xf32>
    %46 = tpu.reciprocal %45 {approx = true} : vector<8x1xf32> -> vector<8x1xf32>
    %47 = vector.broadcast %46 : vector<8x1xf32> to vector<8x8xf32>
    %48 = arith.mulf %43, %47 : vector<8x8xf32>
    %49 = arith.truncf %48 : vector<8x8xf32> to vector<8x8xbf16>
    %c0_25 = arith.constant 0 : index
    %c0_26 = arith.constant 0 : index
    %c144 = arith.constant 144 : index
    %50 = vector.load %arg1[%c0_25, %c0_26, %c144] : memref<1x8x192xbf16, #tpu.memory_space<vmem>>, vector<1x8x16xbf16>
    %51 = vector.shape_cast %50 : vector<1x8x16xbf16> to vector<8x16xbf16>
    %cst_27 = arith.constant dense<0.000000e+00> : vector<8x16xf32>
    %52 = tpu.matmul %49, %51, %cst_27 {dimension_numbers = #tpu.dot_dimension_numbers<[1], [0], [0], [1], [0, 0, 1, 1], [], []>} : vector<8x8xbf16>, vector<8x16xbf16>, vector<8x16xf32> -> vector<8x16xf32>
    %53 = arith.truncf %52 : vector<8x16xf32> to vector<8x16xbf16>
    %c0_28 = arith.constant 0 : index
    %c16_29 = arith.constant 16 : index
    %54 = vector.load %arg7[%c0_28, %c16_29] : memref<8x64xbf16, #tpu.memory_space<vmem>>, vector<8x16xbf16>
    tpu.vector_store %arg7[%c0_28, %c16_29], %53 {strides = array<i32>} : memref<8x64xbf16, #tpu.memory_space<vmem>>, vector<8x16xbf16>,
    %c0_30 = arith.constant 0 : index
    %c0_31 = arith.constant 0 : index
    %c32 = arith.constant 32 : index
    %55 = vector.load %arg1[%c0_30, %c0_31, %c32] : memref<1x8x192xbf16, #tpu.memory_space<vmem>>, vector<1x8x16xbf16>
    %56 = vector.shape_cast %55 : vector<1x8x16xbf16> to vector<8x16xbf16>
    %cst_32 = arith.constant 2.500000e-01 : bf16
    %57 = vector.broadcast %cst_32 : bf16 to vector<8x16xbf16>
    %58 = arith.mulf %56, %57 : vector<8x16xbf16>
    %c0_33 = arith.constant 0 : index
    %c0_34 = arith.constant 0 : index
    %c96 = arith.constant 96 : index
    %59 = vector.load %arg1[%c0_33, %c0_34, %c96] : memref<1x8x192xbf16, #tpu.memory_space<vmem>>, vector<1x8x16xbf16>
    %60 = vector.shape_cast %59 : vector<1x8x16xbf16> to vector<8x16xbf16>
    %cst_35 = arith.constant dense<0.000000e+00> : vector<8x8xf32>
    %61 = tpu.matmul %58, %60, %cst_35 {dimension_numbers = #tpu.dot_dimension_numbers<[1], [1], [0], [0], [0, 0, 1, 0], [], []>} : vector<8x16xbf16>, vector<8x16xbf16>, vector<8x8xf32> -> vector<8x8xf32>
    %62 = arith.addf %61, %6 : vector<8x8xf32>
    %cst_36 = arith.constant dense<0xFF800000> : vector<8xf32>
    %63 = vector.multi_reduction <maximumf>, %62, %cst_36 [1] : vector<8x8xf32> to vector<8xf32>
    %64 = vector.shape_cast %63 : vector<8xf32> to vector<8x1xf32>
    %65 = vector.broadcast %64 : vector<8x1xf32> to vector<8x8xf32>
    %66 = arith.subf %62, %65 : vector<8x8xf32>
    %67 = math.exp %66 : vector<8x8xf32>
    %cst_37 = arith.constant dense<0.000000e+00> : vector<8xf32>
    %68 = vector.multi_reduction <add>, %67, %cst_37 [1] : vector<8x8xf32> to vector<8xf32>
    %69 = vector.shape_cast %68 : vector<8xf32> to vector<8x1xf32>
    %70 = tpu.reciprocal %69 {approx = true} : vector<8x1xf32> -> vector<8x1xf32>
    %71 = vector.broadcast %70 : vector<8x1xf32> to vector<8x8xf32>
    %72 = arith.mulf %67, %71 : vector<8x8xf32>
    %73 = arith.truncf %72 : vector<8x8xf32> to vector<8x8xbf16>
    %c0_38 = arith.constant 0 : index
    %c0_39 = arith.constant 0 : index
    %c160 = arith.constant 160 : index
    %74 = vector.load %arg1[%c0_38, %c0_39, %c160] : memref<1x8x192xbf16, #tpu.memory_space<vmem>>, vector<1x8x16xbf16>
    %75 = vector.shape_cast %74 : vector<1x8x16xbf16> to vector<8x16xbf16>
    %cst_40 = arith.constant dense<0.000000e+00> : vector<8x16xf32>
    %76 = tpu.matmul %73, %75, %cst_40 {dimension_numbers = #tpu.dot_dimension_numbers<[1], [0], [0], [1], [0, 0, 1, 1], [], []>} : vector<8x8xbf16>, vector<8x16xbf16>, vector<8x16xf32> -> vector<8x16xf32>
    %77 = arith.truncf %76 : vector<8x16xf32> to vector<8x16xbf16>
    %c0_41 = arith.constant 0 : index
    %c32_42 = arith.constant 32 : index
    %78 = vector.load %arg7[%c0_41, %c32_42] : memref<8x64xbf16, #tpu.memory_space<vmem>>, vector<8x16xbf16>
    tpu.vector_store %arg7[%c0_41, %c32_42], %77 {strides = array<i32>} : memref<8x64xbf16, #tpu.memory_space<vmem>>, vector<8x16xbf16>,
    %c0_43 = arith.constant 0 : index
    %c0_44 = arith.constant 0 : index
    %c48 = arith.constant 48 : index
    %79 = vector.load %arg1[%c0_43, %c0_44, %c48] : memref<1x8x192xbf16, #tpu.memory_space<vmem>>, vector<1x8x16xbf16>
    %80 = vector.shape_cast %79 : vector<1x8x16xbf16> to vector<8x16xbf16>
    %cst_45 = arith.constant 2.500000e-01 : bf16
    %81 = vector.broadcast %cst_45 : bf16 to vector<8x16xbf16>
    %82 = arith.mulf %80, %81 : vector<8x16xbf16>
    %c0_46 = arith.constant 0 : index
    %c0_47 = arith.constant 0 : index
    %c112 = arith.constant 112 : index
    %83 = vector.load %arg1[%c0_46, %c0_47, %c112] : memref<1x8x192xbf16, #tpu.memory_space<vmem>>, vector<1x8x16xbf16>
    %84 = vector.shape_cast %83 : vector<1x8x16xbf16> to vector<8x16xbf16>
    %cst_48 = arith.constant dense<0.000000e+00> : vector<8x8xf32>
    %85 = tpu.matmul %82, %84, %cst_48 {dimension_numbers = #tpu.dot_dimension_numbers<[1], [1], [0], [0], [0, 0, 1, 0], [], []>} : vector<8x16xbf16>, vector<8x16xbf16>, vector<8x8xf32> -> vector<8x8xf32>
    %86 = arith.addf %85, %6 : vector<8x8xf32>
    %cst_49 = arith.constant dense<0xFF800000> : vector<8xf32>
    %87 = vector.multi_reduction <maximumf>, %86, %cst_49 [1] : vector<8x8xf32> to vector<8xf32>
    %88 = vector.shape_cast %87 : vector<8xf32> to vector<8x1xf32>
    %89 = vector.broadcast %88 : vector<8x1xf32> to vector<8x8xf32>
    %90 = arith.subf %86, %89 : vector<8x8xf32>
    %91 = math.exp %90 : vector<8x8xf32>
    %cst_50 = arith.constant dense<0.000000e+00> : vector<8xf32>
    %92 = vector.multi_reduction <add>, %91, %cst_50 [1] : vector<8x8xf32> to vector<8xf32>
    %93 = vector.shape_cast %92 : vector<8xf32> to vector<8x1xf32>
    %94 = tpu.reciprocal %93 {approx = true} : vector<8x1xf32> -> vector<8x1xf32>
    %95 = vector.broadcast %94 : vector<8x1xf32> to vector<8x8xf32>
    %96 = arith.mulf %91, %95 : vector<8x8xf32>
    %97 = arith.truncf %96 : vector<8x8xf32> to vector<8x8xbf16>
    %c0_51 = arith.constant 0 : index
    %c0_52 = arith.constant 0 : index
    %c176 = arith.constant 176 : index
    %98 = vector.load %arg1[%c0_51, %c0_52, %c176] : memref<1x8x192xbf16, #tpu.memory_space<vmem>>, vector<1x8x16xbf16>
    %99 = vector.shape_cast %98 : vector<1x8x16xbf16> to vector<8x16xbf16>
    %cst_53 = arith.constant dense<0.000000e+00> : vector<8x16xf32>
    %100 = tpu.matmul %97, %99, %cst_53 {dimension_numbers = #tpu.dot_dimension_numbers<[1], [0], [0], [1], [0, 0, 1, 1], [], []>} : vector<8x8xbf16>, vector<8x16xbf16>, vector<8x16xf32> -> vector<8x16xf32>
    %101 = arith.truncf %100 : vector<8x16xf32> to vector<8x16xbf16>
    %c0_54 = arith.constant 0 : index
    %c48_55 = arith.constant 48 : index
    %102 = vector.load %arg7[%c0_54, %c48_55] : memref<8x64xbf16, #tpu.memory_space<vmem>>, vector<8x16xbf16>
    tpu.vector_store %arg7[%c0_54, %c48_55], %101 {strides = array<i32>} : memref<8x64xbf16, #tpu.memory_space<vmem>>, vector<8x16xbf16>,
    %c0_56 = arith.constant 0 : index
    %c0_57 = arith.constant 0 : index
    %103 = vector.load %arg7[%c0_56, %c0_57] : memref<8x64xbf16, #tpu.memory_space<vmem>>, vector<8x64xbf16>
    %c0_58 = arith.constant 0 : index
    %c0_59 = arith.constant 0 : index
    %104 = vector.load %arg3[%c0_58, %c0_59] : memref<64x64xbf16, #tpu.memory_space<vmem>>, vector<64x64xbf16>
    %cst_60 = arith.constant dense<0.000000e+00> : vector<8x64xf32>
    %105 = tpu.matmul %103, %104, %cst_60 {dimension_numbers = #tpu.dot_dimension_numbers<[1], [0], [0], [1], [0, 0, 1, 1], [], []>} : vector<8x64xbf16>, vector<64x64xbf16>, vector<8x64xf32> -> vector<8x64xf32>
    %c0_61 = arith.constant 0 : index
    %c0_62 = arith.constant 0 : index
    %106 = vector.load %arg4[%c0_61, %c0_62] : memref<1x64xf32, #tpu.memory_space<vmem>>, vector<1x64xf32>
    %107 = vector.broadcast %106 : vector<1x64xf32> to vector<8x64xf32>
    %108 = arith.addf %105, %107 : vector<8x64xf32>
    %c0_63 = arith.constant 0 : index
    %c0_64 = arith.constant 0 : index
    %c0_65 = arith.constant 0 : index
    %109 = vector.load %arg5[%c0_63, %c0_64, %c0_65] : memref<1x8x64xf32, #tpu.memory_space<vmem>>, vector<1x8x64xf32>
    %110 = vector.shape_cast %109 : vector<1x8x64xf32> to vector<8x64xf32>
    %111 = arith.addf %108, %110 : vector<8x64xf32>
    %c0_66 = arith.constant 0 : index
    %c0_67 = arith.constant 0 : index
    %c0_68 = arith.constant 0 : index
    %112 = vector.load %arg6[%c0_66, %c0_67, %c0_68] : memref<1x8x64xf32, #tpu.memory_space<vmem>>, vector<1x8x64xf32>
    %113 = vector.shape_cast %112 : vector<1x8x64xf32> to vector<8x64xf32>
    %114 = vector.shape_cast %111 : vector<8x64xf32> to vector<1x8x64xf32>
    tpu.vector_store %arg6[%c0_66, %c0_67, %c0_68], %114 {strides = array<i32>} : memref<1x8x64xf32, #tpu.memory_space<vmem>>, vector<1x8x64xf32>,
    return
  }
  func.func @transform_0(%arg0: i32) -> (i32, i32, i32) {
    %c0_i32 = arith.constant 0 : i32
    %c0_i32_0 = arith.constant 0 : i32
    %c0_i32_1 = arith.constant 0 : i32
    return %arg0, %c0_i32, %c0_i32_0 : i32, i32, i32
  }
  func.func @transform_1(%arg0: i32) -> (i32, i32, i32) {
    %c0_i32 = arith.constant 0 : i32
    %c0_i32_0 = arith.constant 0 : i32
    %c0_i32_1 = arith.constant 0 : i32
    return %arg0, %c0_i32, %c0_i32_0 : i32, i32, i32
  }
  func.func @transform_2(%arg0: i32) -> (i32, i32) {
    %c0_i32 = arith.constant 0 : i32
    %c0_i32_0 = arith.constant 0 : i32
    %c0_i32_1 = arith.constant 0 : i32
    return %c0_i32, %c0_i32_0 : i32, i32
  }
  func.func @transform_3(%arg0: i32) -> (i32, i32) {
    %c0_i32 = arith.constant 0 : i32
    %c0_i32_0 = arith.constant 0 : i32
    %c0_i32_1 = arith.constant 0 : i32
    return %c0_i32, %c0_i32_0 : i32, i32
  }
  func.func @transform_4(%arg0: i32) -> (i32, i32, i32) {
    %c0_i32 = arith.constant 0 : i32
    %c0_i32_0 = arith.constant 0 : i32
    %c0_i32_1 = arith.constant 0 : i32
    return %arg0, %c0_i32, %c0_i32_0 : i32, i32, i32
  }
  func.func @transform_5(%arg0: i32) -> (i32, i32, i32) {
    %c0_i32 = arith.constant 0 : i32
    %c0_i32_0 = arith.constant 0 : i32
    %c0_i32_1 = arith.constant 0 : i32
    return %arg0, %c0_i32, %c0_i32_0 : i32, i32, i32
  }
}

module attributes {stable_mosaic.version = 11 : i64} {
  func.func @_fused_linear_kernel(%arg0: i32, %arg1: i32, %arg2: memref<16x64xf32, #tpu.memory_space<vmem>>, %arg3: memref<64x128xbf16, #tpu.memory_space<vmem>>, %arg4: memref<1x128xf32, #tpu.memory_space<vmem>>, %arg5: memref<1x64xf32, #tpu.memory_space<vmem>>, %arg6: memref<1x64xf32, #tpu.memory_space<vmem>>, %arg7: memref<16x128xbf16, #tpu.memory_space<vmem>>, %arg8: memref<16x64xbf16, #tpu.memory_space<vmem>>) attributes {dimension_semantics = [#tpu.dimension_semantics<parallel>, #tpu.dimension_semantics<arbitrary>], iteration_bounds = array<i64: 1, 1>, scalar_prefetch = 0 : i64, scratch_operands = 1 : i64, tpu.core_type = #tpu.core_type<tc>, window_params = [{transform_indices = @transform_0, window_bounds = array<i64: 16, 64>}, {transform_indices = @transform_1, window_bounds = array<i64: 64, 128>}, {transform_indices = @transform_2, window_bounds = array<i64: 1, 128>}, {pipeline_mode = #tpu.pipeline_mode<synchronous>, transform_indices = @transform_3, window_bounds = array<i64: 1, 64>}, {pipeline_mode = #tpu.pipeline_mode<synchronous>, transform_indices = @transform_4, window_bounds = array<i64: 1, 64>}, {transform_indices = @transform_5, window_bounds = array<i64: 16, 128>}]} {
    %c0_i32 = arith.constant 0 : i32
    %0 = arith.cmpi eq, %arg1, %c0_i32 : i32
    %1 = arith.extui %0 : i1 to i32
    %c0_i32_0 = arith.constant 0 : i32
    %2 = arith.cmpi ne, %1, %c0_i32_0 : i32
    scf.if %2 {
      %c0_8 = arith.constant 0 : index
      %c0_9 = arith.constant 0 : index
      %11 = vector.load %arg2[%c0_8, %c0_9] : memref<16x64xf32, #tpu.memory_space<vmem>>, vector<16x64xf32>
      %cst_10 = arith.constant dense<0.000000e+00> : vector<16xf32>
      %12 = vector.multi_reduction <add>, %11, %cst_10 [1] : vector<16x64xf32> to vector<16xf32>
      %13 = vector.shape_cast %12 : vector<16xf32> to vector<16x1xf32>
      %cst_11 = arith.constant 6.400000e+01 : f32
      %14 = vector.broadcast %cst_11 : f32 to vector<16x1xf32>
      %15 = arith.divf %13, %14 : vector<16x1xf32>
      %16 = vector.broadcast %15 : vector<16x1xf32> to vector<16x64xf32>
      %17 = arith.subf %11, %16 : vector<16x64xf32>
      %18 = arith.mulf %17, %17 : vector<16x64xf32>
      %cst_12 = arith.constant dense<0.000000e+00> : vector<16xf32>
      %19 = vector.multi_reduction <add>, %18, %cst_12 [1] : vector<16x64xf32> to vector<16xf32>
      %20 = vector.shape_cast %19 : vector<16xf32> to vector<16x1xf32>
      %cst_13 = arith.constant 6.300000e+01 : f32
      %21 = vector.broadcast %cst_13 : f32 to vector<16x1xf32>
      %22 = arith.divf %20, %21 : vector<16x1xf32>
      %c0_14 = arith.constant 0 : index
      %c0_15 = arith.constant 0 : index
      %23 = vector.load %arg5[%c0_14, %c0_15] : memref<1x64xf32, #tpu.memory_space<vmem>>, vector<1x64xf32>
      %24 = vector.broadcast %23 : vector<1x64xf32> to vector<16x64xf32>
      %25 = arith.mulf %24, %17 : vector<16x64xf32>
      %26 = math.sqrt %22 : vector<16x1xf32>
      %cst_16 = arith.constant 9.99999997E-7 : f32
      %27 = vector.broadcast %cst_16 : f32 to vector<16x1xf32>
      %28 = arith.addf %26, %27 : vector<16x1xf32>
      %29 = vector.broadcast %28 : vector<16x1xf32> to vector<16x64xf32>
      %30 = arith.divf %25, %29 : vector<16x64xf32>
      %c0_17 = arith.constant 0 : index
      %c0_18 = arith.constant 0 : index
      %31 = vector.load %arg6[%c0_17, %c0_18] : memref<1x64xf32, #tpu.memory_space<vmem>>, vector<1x64xf32>
      %32 = vector.broadcast %31 : vector<1x64xf32> to vector<16x64xf32>
      %33 = arith.addf %30, %32 : vector<16x64xf32>
      %34 = arith.truncf %33 : vector<16x64xf32> to vector<16x64xbf16>
      %c0_19 = arith.constant 0 : index
      %c0_20 = arith.constant 0 : index
      %35 = vector.load %arg8[%c0_19, %c0_20] : memref<16x64xbf16, #tpu.memory_space<vmem>>, vector<16x64xbf16>
      tpu.vector_store %arg8[%c0_19, %c0_20], %34 {strides = array<i32>} : memref<16x64xbf16, #tpu.memory_space<vmem>>, vector<16x64xbf16>,
    } else {
    }
    %c0 = arith.constant 0 : index
    %c0_1 = arith.constant 0 : index
    %3 = vector.load %arg8[%c0, %c0_1] : memref<16x64xbf16, #tpu.memory_space<vmem>>, vector<16x64xbf16>
    %c0_2 = arith.constant 0 : index
    %c0_3 = arith.constant 0 : index
    %4 = vector.load %arg3[%c0_2, %c0_3] : memref<64x128xbf16, #tpu.memory_space<vmem>>, vector<64x128xbf16>
    %cst = arith.constant dense<0.000000e+00> : vector<16x128xf32>
    %5 = tpu.matmul %3, %4, %cst {dimension_numbers = #tpu.dot_dimension_numbers<[1], [0], [0], [1], [0, 0, 1, 1], [], []>} : vector<16x64xbf16>, vector<64x128xbf16>, vector<16x128xf32> -> vector<16x128xf32>
    %c0_4 = arith.constant 0 : index
    %c0_5 = arith.constant 0 : index
    %6 = vector.load %arg4[%c0_4, %c0_5] : memref<1x128xf32, #tpu.memory_space<vmem>>, vector<1x128xf32>
    %7 = vector.broadcast %6 : vector<1x128xf32> to vector<16x128xf32>
    %8 = arith.addf %5, %7 : vector<16x128xf32>
    %9 = arith.truncf %8 : vector<16x128xf32> to vector<16x128xbf16>
    %c0_6 = arith.constant 0 : index
    %c0_7 = arith.constant 0 : index
    %10 = vector.load %arg7[%c0_6, %c0_7] : memref<16x128xbf16, #tpu.memory_space<vmem>>, vector<16x128xbf16>
    tpu.vector_store %arg7[%c0_6, %c0_7], %9 {strides = array<i32>} : memref<16x128xbf16, #tpu.memory_space<vmem>>, vector<16x128xbf16>,
    return
  }
  func.func @transform_0(%arg0: i32, %arg1: i32) -> (i32, i32) {
    %c0_i32 = arith.constant 0 : i32
    %c0_i32_0 = arith.constant 0 : i32
    return %arg0, %c0_i32 : i32, i32
  }
  func.func @transform_1(%arg0: i32, %arg1: i32) -> (i32, i32) {
    %c0_i32 = arith.constant 0 : i32
    %c0_i32_0 = arith.constant 0 : i32
    return %c0_i32, %arg1 : i32, i32
  }
  func.func @transform_2(%arg0: i32, %arg1: i32) -> (i32, i32) {
    %c0_i32 = arith.constant 0 : i32
    %c0_i32_0 = arith.constant 0 : i32
    return %c0_i32, %arg1 : i32, i32
  }
  func.func @transform_3(%arg0: i32, %arg1: i32) -> (i32, i32) {
    %c0_i32 = arith.constant 0 : i32
    %c0_i32_0 = arith.constant 0 : i32
    %c0_i32_1 = arith.constant 0 : i32
    return %c0_i32, %c0_i32_0 : i32, i32
  }
  func.func @transform_4(%arg0: i32, %arg1: i32) -> (i32, i32) {
    %c0_i32 = arith.constant 0 : i32
    %c0_i32_0 = arith.constant 0 : i32
    %c0_i32_1 = arith.constant 0 : i32
    return %c0_i32, %c0_i32_0 : i32, i32
  }
  func.func @transform_5(%arg0: i32, %arg1: i32) -> (i32, i32) {
    %c0_i32 = arith.constant 0 : i32
    return %arg0, %arg1 : i32, i32
  }
}

module attributes {stable_mosaic.version = 11 : i64} {
  func.func @_fused_linear_kernel(%arg0: i32, %arg1: i32, %arg2: memref<32x64xf32, #tpu.memory_space<vmem>>, %arg3: memref<64x128xbf16, #tpu.memory_space<vmem>>, %arg4: memref<1x128xf32, #tpu.memory_space<vmem>>, %arg5: memref<32x128xbf16, #tpu.memory_space<vmem>>, %arg6: memref<32x64xbf16, #tpu.memory_space<vmem>>) attributes {dimension_semantics = [#tpu.dimension_semantics<parallel>, #tpu.dimension_semantics<arbitrary>], iteration_bounds = array<i64: 1, 1>, scalar_prefetch = 0 : i64, scratch_operands = 1 : i64, tpu.core_type = #tpu.core_type<tc>, window_params = [{transform_indices = @transform_0, window_bounds = array<i64: 32, 64>}, {transform_indices = @transform_1, window_bounds = array<i64: 64, 128>}, {transform_indices = @transform_2, window_bounds = array<i64: 1, 128>}, {transform_indices = @transform_3, window_bounds = array<i64: 32, 128>}]} {
    %c0_i32 = arith.constant 0 : i32
    %0 = arith.cmpi eq, %arg1, %c0_i32 : i32
    %1 = arith.extui %0 : i1 to i32
    %c0_i32_0 = arith.constant 0 : i32
    %2 = arith.cmpi ne, %1, %c0_i32_0 : i32
    scf.if %2 {
      %c0_8 = arith.constant 0 : index
      %c0_9 = arith.constant 0 : index
      %11 = vector.load %arg2[%c0_8, %c0_9] : memref<32x64xf32, #tpu.memory_space<vmem>>, vector<32x64xf32>
      %12 = arith.truncf %11 : vector<32x64xf32> to vector<32x64xbf16>
      %c0_10 = arith.constant 0 : index
      %c0_11 = arith.constant 0 : index
      %13 = vector.load %arg6[%c0_10, %c0_11] : memref<32x64xbf16, #tpu.memory_space<vmem>>, vector<32x64xbf16>
      tpu.vector_store %arg6[%c0_10, %c0_11], %12 {strides = array<i32>} : memref<32x64xbf16, #tpu.memory_space<vmem>>, vector<32x64xbf16>,
    } else {
    }
    %c0 = arith.constant 0 : index
    %c0_1 = arith.constant 0 : index
    %3 = vector.load %arg6[%c0, %c0_1] : memref<32x64xbf16, #tpu.memory_space<vmem>>, vector<32x64xbf16>
    %c0_2 = arith.constant 0 : index
    %c0_3 = arith.constant 0 : index
    %4 = vector.load %arg3[%c0_2, %c0_3] : memref<64x128xbf16, #tpu.memory_space<vmem>>, vector<64x128xbf16>
    %cst = arith.constant dense<0.000000e+00> : vector<32x128xf32>
    %5 = tpu.matmul %3, %4, %cst {dimension_numbers = #tpu.dot_dimension_numbers<[1], [0], [0], [1], [0, 0, 1, 1], [], []>} : vector<32x64xbf16>, vector<64x128xbf16>, vector<32x128xf32> -> vector<32x128xf32>
    %c0_4 = arith.constant 0 : index
    %c0_5 = arith.constant 0 : index
    %6 = vector.load %arg4[%c0_4, %c0_5] : memref<1x128xf32, #tpu.memory_space<vmem>>, vector<1x128xf32>
    %7 = vector.broadcast %6 : vector<1x128xf32> to vector<32x128xf32>
    %8 = arith.addf %5, %7 : vector<32x128xf32>
    %9 = arith.truncf %8 : vector<32x128xf32> to vector<32x128xbf16>
    %c0_6 = arith.constant 0 : index
    %c0_7 = arith.constant 0 : index
    %10 = vector.load %arg5[%c0_6, %c0_7] : memref<32x128xbf16, #tpu.memory_space<vmem>>, vector<32x128xbf16>
    tpu.vector_store %arg5[%c0_6, %c0_7], %9 {strides = array<i32>} : memref<32x128xbf16, #tpu.memory_space<vmem>>, vector<32x128xbf16>,
    return
  }
  func.func @transform_0(%arg0: i32, %arg1: i32) -> (i32, i32) {
    %c0_i32 = arith.constant 0 : i32
    %c0_i32_0 = arith.constant 0 : i32
    return %arg0, %c0_i32 : i32, i32
  }
  func.func @transform_1(%arg0: i32, %arg1: i32) -> (i32, i32) {
    %c0_i32 = arith.constant 0 : i32
    %c0_i32_0 = arith.constant 0 : i32
    return %c0_i32, %arg1 : i32, i32
  }
  func.func @transform_2(%arg0: i32, %arg1: i32) -> (i32, i32) {
    %c0_i32 = arith.constant 0 : i32
    %c0_i32_0 = arith.constant 0 : i32
    return %c0_i32, %arg1 : i32, i32
  }
  func.func @transform_3(%arg0: i32, %arg1: i32) -> (i32, i32) {
    %c0_i32 = arith.constant 0 : i32
    return %arg0, %arg1 : i32, i32
  }
}

module attributes {stable_mosaic.version = 11 : i64} {
  func.func @_cross_attn_kernel(%arg0: i32, %arg1: memref<1x8x64xbf16, #tpu.memory_space<vmem>>, %arg2: memref<1x16x128xbf16, #tpu.memory_space<vmem>>, %arg3: memref<1x1x16xi32, #tpu.memory_space<vmem>>, %arg4: memref<64x64xbf16, #tpu.memory_space<vmem>>, %arg5: memref<1x64xf32, #tpu.memory_space<vmem>>, %arg6: memref<1x8x64xf32, #tpu.memory_space<vmem>>, %arg7: memref<1x8x64xf32, #tpu.memory_space<vmem>>, %arg8: memref<8x64xbf16, #tpu.memory_space<vmem>>) attributes {dimension_semantics = [#tpu.dimension_semantics<parallel>], iteration_bounds = array<i64: 2>, scalar_prefetch = 0 : i64, scratch_operands = 1 : i64, tpu.core_type = #tpu.core_type<tc>, window_params = [{transform_indices = @transform_0, window_bounds = array<i64: 1, 8, 64>}, {transform_indices = @transform_1, window_bounds = array<i64: 1, 16, 128>}, {transform_indices = @transform_2, window_bounds = array<i64: 1, 1, 16>}, {pipeline_mode = #tpu.pipeline_mode<synchronous>, transform_indices = @transform_3, window_bounds = array<i64: 64, 64>}, {pipeline_mode = #tpu.pipeline_mode<synchronous>, transform_indices = @transform_4, window_bounds = array<i64: 1, 64>}, {transform_indices = @transform_5, window_bounds = array<i64: 1, 8, 64>}, {transform_indices = @transform_6, window_bounds = array<i64: 1, 8, 64>}]} {
    %c0 = arith.constant 0 : index
    %c0_0 = arith.constant 0 : index
    %c0_1 = arith.constant 0 : index
    %0 = vector.load %arg3[%c0, %c0_0, %c0_1] : memref<1x1x16xi32, #tpu.memory_space<vmem>>, vector<1x1x16xi32>
    %1 = vector.shape_cast %0 : vector<1x1x16xi32> to vector<1x16xi32>
    %c0_i32 = arith.constant 0 : i32
    %2 = vector.broadcast %c0_i32 : i32 to vector<1x16xi32>
    %3 = arith.cmpi eq, %1, %2 : vector<1x16xi32>
    %cst = arith.constant -1.000000e+09 : f32
    %cst_2 = arith.constant 0.000000e+00 : f32
    %4 = vector.broadcast %cst : f32 to vector<1x16xf32>
    %5 = vector.broadcast %cst_2 : f32 to vector<1x16xf32>
    %6 = arith.select %3, %4, %5 : vector<1x16xi1>, vector<1x16xf32>
    %7 = vector.shape_cast %6 : vector<1x16xf32> to vector<1x16xf32>
    %8 = vector.broadcast %7 : vector<1x16xf32> to vector<8x16xf32>
    %c0_3 = arith.constant 0 : index
    %c0_4 = arith.constant 0 : index
    %c0_5 = arith.constant 0 : index
    %9 = vector.load %arg1[%c0_3, %c0_4, %c0_5] : memref<1x8x64xbf16, #tpu.memory_space<vmem>>, vector<1x8x16xbf16>
    %10 = vector.shape_cast %9 : vector<1x8x16xbf16> to vector<8x16xbf16>
    %cst_6 = arith.constant 2.500000e-01 : bf16
    %11 = vector.broadcast %cst_6 : bf16 to vector<8x16xbf16>
    %12 = arith.mulf %10, %11 : vector<8x16xbf16>
    %c0_7 = arith.constant 0 : index
    %c0_8 = arith.constant 0 : index
    %c0_9 = arith.constant 0 : index
    %13 = vector.load %arg2[%c0_7, %c0_8, %c0_9] : memref<1x16x128xbf16, #tpu.memory_space<vmem>>, vector<1x16x16xbf16>
    %14 = vector.shape_cast %13 : vector<1x16x16xbf16> to vector<16x16xbf16>
    %cst_10 = arith.constant dense<0.000000e+00> : vector<8x16xf32>
    %15 = tpu.matmul %12, %14, %cst_10 {dimension_numbers = #tpu.dot_dimension_numbers<[1], [1], [0], [0], [0, 0, 1, 0], [], []>} : vector<8x16xbf16>, vector<16x16xbf16>, vector<8x16xf32> -> vector<8x16xf32>
    %16 = arith.addf %15, %8 : vector<8x16xf32>
    %cst_11 = arith.constant dense<0xFF800000> : vector<8xf32>
    %17 = vector.multi_reduction <maximumf>, %16, %cst_11 [1] : vector<8x16xf32> to vector<8xf32>
    %18 = vector.shape_cast %17 : vector<8xf32> to vector<8x1xf32>
    %19 = vector.broadcast %18 : vector<8x1xf32> to vector<8x16xf32>
    %20 = arith.subf %16, %19 : vector<8x16xf32>
    %21 = math.exp %20 : vector<8x16xf32>
    %cst_12 = arith.constant dense<0.000000e+00> : vector<8xf32>
    %22 = vector.multi_reduction <add>, %21, %cst_12 [1] : vector<8x16xf32> to vector<8xf32>
    %23 = vector.shape_cast %22 : vector<8xf32> to vector<8x1xf32>
    %24 = tpu.reciprocal %23 {approx = true} : vector<8x1xf32> -> vector<8x1xf32>
    %25 = vector.broadcast %24 : vector<8x1xf32> to vector<8x16xf32>
    %26 = arith.mulf %21, %25 : vector<8x16xf32>
    %27 = arith.truncf %26 : vector<8x16xf32> to vector<8x16xbf16>
    %c0_13 = arith.constant 0 : index
    %c0_14 = arith.constant 0 : index
    %c64 = arith.constant 64 : index
    %28 = vector.load %arg2[%c0_13, %c0_14, %c64] : memref<1x16x128xbf16, #tpu.memory_space<vmem>>, vector<1x16x16xbf16>
    %29 = vector.shape_cast %28 : vector<1x16x16xbf16> to vector<16x16xbf16>
    %cst_15 = arith.constant dense<0.000000e+00> : vector<8x16xf32>
    %30 = tpu.matmul %27, %29, %cst_15 {dimension_numbers = #tpu.dot_dimension_numbers<[1], [0], [0], [1], [0, 0, 1, 1], [], []>} : vector<8x16xbf16>, vector<16x16xbf16>, vector<8x16xf32> -> vector<8x16xf32>
    %31 = arith.truncf %30 : vector<8x16xf32> to vector<8x16xbf16>
    %c0_16 = arith.constant 0 : index
    %c0_17 = arith.constant 0 : index
    %32 = vector.load %arg8[%c0_16, %c0_17] : memref<8x64xbf16, #tpu.memory_space<vmem>>, vector<8x16xbf16>
    tpu.vector_store %arg8[%c0_16, %c0_17], %31 {strides = array<i32>} : memref<8x64xbf16, #tpu.memory_space<vmem>>, vector<8x16xbf16>,
    %c0_18 = arith.constant 0 : index
    %c0_19 = arith.constant 0 : index
    %c16 = arith.constant 16 : index
    %33 = vector.load %arg1[%c0_18, %c0_19, %c16] : memref<1x8x64xbf16, #tpu.memory_space<vmem>>, vector<1x8x16xbf16>
    %34 = vector.shape_cast %33 : vector<1x8x16xbf16> to vector<8x16xbf16>
    %cst_20 = arith.constant 2.500000e-01 : bf16
    %35 = vector.broadcast %cst_20 : bf16 to vector<8x16xbf16>
    %36 = arith.mulf %34, %35 : vector<8x16xbf16>
    %c0_21 = arith.constant 0 : index
    %c0_22 = arith.constant 0 : index
    %c16_23 = arith.constant 16 : index
    %37 = vector.load %arg2[%c0_21, %c0_22, %c16_23] : memref<1x16x128xbf16, #tpu.memory_space<vmem>>, vector<1x16x16xbf16>
    %38 = vector.shape_cast %37 : vector<1x16x16xbf16> to vector<16x16xbf16>
    %cst_24 = arith.constant dense<0.000000e+00> : vector<8x16xf32>
    %39 = tpu.matmul %36, %38, %cst_24 {dimension_numbers = #tpu.dot_dimension_numbers<[1], [1], [0], [0], [0, 0, 1, 0], [], []>} : vector<8x16xbf16>, vector<16x16xbf16>, vector<8x16xf32> -> vector<8x16xf32>
    %40 = arith.addf %39, %8 : vector<8x16xf32>
    %cst_25 = arith.constant dense<0xFF800000> : vector<8xf32>
    %41 = vector.multi_reduction <maximumf>, %40, %cst_25 [1] : vector<8x16xf32> to vector<8xf32>
    %42 = vector.shape_cast %41 : vector<8xf32> to vector<8x1xf32>
    %43 = vector.broadcast %42 : vector<8x1xf32> to vector<8x16xf32>
    %44 = arith.subf %40, %43 : vector<8x16xf32>
    %45 = math.exp %44 : vector<8x16xf32>
    %cst_26 = arith.constant dense<0.000000e+00> : vector<8xf32>
    %46 = vector.multi_reduction <add>, %45, %cst_26 [1] : vector<8x16xf32> to vector<8xf32>
    %47 = vector.shape_cast %46 : vector<8xf32> to vector<8x1xf32>
    %48 = tpu.reciprocal %47 {approx = true} : vector<8x1xf32> -> vector<8x1xf32>
    %49 = vector.broadcast %48 : vector<8x1xf32> to vector<8x16xf32>
    %50 = arith.mulf %45, %49 : vector<8x16xf32>
    %51 = arith.truncf %50 : vector<8x16xf32> to vector<8x16xbf16>
    %c0_27 = arith.constant 0 : index
    %c0_28 = arith.constant 0 : index
    %c80 = arith.constant 80 : index
    %52 = vector.load %arg2[%c0_27, %c0_28, %c80] : memref<1x16x128xbf16, #tpu.memory_space<vmem>>, vector<1x16x16xbf16>
    %53 = vector.shape_cast %52 : vector<1x16x16xbf16> to vector<16x16xbf16>
    %cst_29 = arith.constant dense<0.000000e+00> : vector<8x16xf32>
    %54 = tpu.matmul %51, %53, %cst_29 {dimension_numbers = #tpu.dot_dimension_numbers<[1], [0], [0], [1], [0, 0, 1, 1], [], []>} : vector<8x16xbf16>, vector<16x16xbf16>, vector<8x16xf32> -> vector<8x16xf32>
    %55 = arith.truncf %54 : vector<8x16xf32> to vector<8x16xbf16>
    %c0_30 = arith.constant 0 : index
    %c16_31 = arith.constant 16 : index
    %56 = vector.load %arg8[%c0_30, %c16_31] : memref<8x64xbf16, #tpu.memory_space<vmem>>, vector<8x16xbf16>
    tpu.vector_store %arg8[%c0_30, %c16_31], %55 {strides = array<i32>} : memref<8x64xbf16, #tpu.memory_space<vmem>>, vector<8x16xbf16>,
    %c0_32 = arith.constant 0 : index
    %c0_33 = arith.constant 0 : index
    %c32 = arith.constant 32 : index
    %57 = vector.load %arg1[%c0_32, %c0_33, %c32] : memref<1x8x64xbf16, #tpu.memory_space<vmem>>, vector<1x8x16xbf16>
    %58 = vector.shape_cast %57 : vector<1x8x16xbf16> to vector<8x16xbf16>
    %cst_34 = arith.constant 2.500000e-01 : bf16
    %59 = vector.broadcast %cst_34 : bf16 to vector<8x16xbf16>
    %60 = arith.mulf %58, %59 : vector<8x16xbf16>
    %c0_35 = arith.constant 0 : index
    %c0_36 = arith.constant 0 : index
    %c32_37 = arith.constant 32 : index
    %61 = vector.load %arg2[%c0_35, %c0_36, %c32_37] : memref<1x16x128xbf16, #tpu.memory_space<vmem>>, vector<1x16x16xbf16>
    %62 = vector.shape_cast %61 : vector<1x16x16xbf16> to vector<16x16xbf16>
    %cst_38 = arith.constant dense<0.000000e+00> : vector<8x16xf32>
    %63 = tpu.matmul %60, %62, %cst_38 {dimension_numbers = #tpu.dot_dimension_numbers<[1], [1], [0], [0], [0, 0, 1, 0], [], []>} : vector<8x16xbf16>, vector<16x16xbf16>, vector<8x16xf32> -> vector<8x16xf32>
    %64 = arith.addf %63, %8 : vector<8x16xf32>
    %cst_39 = arith.constant dense<0xFF800000> : vector<8xf32>
    %65 = vector.multi_reduction <maximumf>, %64, %cst_39 [1] : vector<8x16xf32> to vector<8xf32>
    %66 = vector.shape_cast %65 : vector<8xf32> to vector<8x1xf32>
    %67 = vector.broadcast %66 : vector<8x1xf32> to vector<8x16xf32>
    %68 = arith.subf %64, %67 : vector<8x16xf32>
    %69 = math.exp %68 : vector<8x16xf32>
    %cst_40 = arith.constant dense<0.000000e+00> : vector<8xf32>
    %70 = vector.multi_reduction <add>, %69, %cst_40 [1] : vector<8x16xf32> to vector<8xf32>
    %71 = vector.shape_cast %70 : vector<8xf32> to vector<8x1xf32>
    %72 = tpu.reciprocal %71 {approx = true} : vector<8x1xf32> -> vector<8x1xf32>
    %73 = vector.broadcast %72 : vector<8x1xf32> to vector<8x16xf32>
    %74 = arith.mulf %69, %73 : vector<8x16xf32>
    %75 = arith.truncf %74 : vector<8x16xf32> to vector<8x16xbf16>
    %c0_41 = arith.constant 0 : index
    %c0_42 = arith.constant 0 : index
    %c96 = arith.constant 96 : index
    %76 = vector.load %arg2[%c0_41, %c0_42, %c96] : memref<1x16x128xbf16, #tpu.memory_space<vmem>>, vector<1x16x16xbf16>
    %77 = vector.shape_cast %76 : vector<1x16x16xbf16> to vector<16x16xbf16>
    %cst_43 = arith.constant dense<0.000000e+00> : vector<8x16xf32>
    %78 = tpu.matmul %75, %77, %cst_43 {dimension_numbers = #tpu.dot_dimension_numbers<[1], [0], [0], [1], [0, 0, 1, 1], [], []>} : vector<8x16xbf16>, vector<16x16xbf16>, vector<8x16xf32> -> vector<8x16xf32>
    %79 = arith.truncf %78 : vector<8x16xf32> to vector<8x16xbf16>
    %c0_44 = arith.constant 0 : index
    %c32_45 = arith.constant 32 : index
    %80 = vector.load %arg8[%c0_44, %c32_45] : memref<8x64xbf16, #tpu.memory_space<vmem>>, vector<8x16xbf16>
    tpu.vector_store %arg8[%c0_44, %c32_45], %79 {strides = array<i32>} : memref<8x64xbf16, #tpu.memory_space<vmem>>, vector<8x16xbf16>,
    %c0_46 = arith.constant 0 : index
    %c0_47 = arith.constant 0 : index
    %c48 = arith.constant 48 : index
    %81 = vector.load %arg1[%c0_46, %c0_47, %c48] : memref<1x8x64xbf16, #tpu.memory_space<vmem>>, vector<1x8x16xbf16>
    %82 = vector.shape_cast %81 : vector<1x8x16xbf16> to vector<8x16xbf16>
    %cst_48 = arith.constant 2.500000e-01 : bf16
    %83 = vector.broadcast %cst_48 : bf16 to vector<8x16xbf16>
    %84 = arith.mulf %82, %83 : vector<8x16xbf16>
    %c0_49 = arith.constant 0 : index
    %c0_50 = arith.constant 0 : index
    %c48_51 = arith.constant 48 : index
    %85 = vector.load %arg2[%c0_49, %c0_50, %c48_51] : memref<1x16x128xbf16, #tpu.memory_space<vmem>>, vector<1x16x16xbf16>
    %86 = vector.shape_cast %85 : vector<1x16x16xbf16> to vector<16x16xbf16>
    %cst_52 = arith.constant dense<0.000000e+00> : vector<8x16xf32>
    %87 = tpu.matmul %84, %86, %cst_52 {dimension_numbers = #tpu.dot_dimension_numbers<[1], [1], [0], [0], [0, 0, 1, 0], [], []>} : vector<8x16xbf16>, vector<16x16xbf16>, vector<8x16xf32> -> vector<8x16xf32>
    %88 = arith.addf %87, %8 : vector<8x16xf32>
    %cst_53 = arith.constant dense<0xFF800000> : vector<8xf32>
    %89 = vector.multi_reduction <maximumf>, %88, %cst_53 [1] : vector<8x16xf32> to vector<8xf32>
    %90 = vector.shape_cast %89 : vector<8xf32> to vector<8x1xf32>
    %91 = vector.broadcast %90 : vector<8x1xf32> to vector<8x16xf32>
    %92 = arith.subf %88, %91 : vector<8x16xf32>
    %93 = math.exp %92 : vector<8x16xf32>
    %cst_54 = arith.constant dense<0.000000e+00> : vector<8xf32>
    %94 = vector.multi_reduction <add>, %93, %cst_54 [1] : vector<8x16xf32> to vector<8xf32>
    %95 = vector.shape_cast %94 : vector<8xf32> to vector<8x1xf32>
    %96 = tpu.reciprocal %95 {approx = true} : vector<8x1xf32> -> vector<8x1xf32>
    %97 = vector.broadcast %96 : vector<8x1xf32> to vector<8x16xf32>
    %98 = arith.mulf %93, %97 : vector<8x16xf32>
    %99 = arith.truncf %98 : vector<8x16xf32> to vector<8x16xbf16>
    %c0_55 = arith.constant 0 : index
    %c0_56 = arith.constant 0 : index
    %c112 = arith.constant 112 : index
    %100 = vector.load %arg2[%c0_55, %c0_56, %c112] : memref<1x16x128xbf16, #tpu.memory_space<vmem>>, vector<1x16x16xbf16>
    %101 = vector.shape_cast %100 : vector<1x16x16xbf16> to vector<16x16xbf16>
    %cst_57 = arith.constant dense<0.000000e+00> : vector<8x16xf32>
    %102 = tpu.matmul %99, %101, %cst_57 {dimension_numbers = #tpu.dot_dimension_numbers<[1], [0], [0], [1], [0, 0, 1, 1], [], []>} : vector<8x16xbf16>, vector<16x16xbf16>, vector<8x16xf32> -> vector<8x16xf32>
    %103 = arith.truncf %102 : vector<8x16xf32> to vector<8x16xbf16>
    %c0_58 = arith.constant 0 : index
    %c48_59 = arith.constant 48 : index
    %104 = vector.load %arg8[%c0_58, %c48_59] : memref<8x64xbf16, #tpu.memory_space<vmem>>, vector<8x16xbf16>
    tpu.vector_store %arg8[%c0_58, %c48_59], %103 {strides = array<i32>} : memref<8x64xbf16, #tpu.memory_space<vmem>>, vector<8x16xbf16>,
    %c0_60 = arith.constant 0 : index
    %c0_61 = arith.constant 0 : index
    %105 = vector.load %arg8[%c0_60, %c0_61] : memref<8x64xbf16, #tpu.memory_space<vmem>>, vector<8x64xbf16>
    %c0_62 = arith.constant 0 : index
    %c0_63 = arith.constant 0 : index
    %106 = vector.load %arg4[%c0_62, %c0_63] : memref<64x64xbf16, #tpu.memory_space<vmem>>, vector<64x64xbf16>
    %cst_64 = arith.constant dense<0.000000e+00> : vector<8x64xf32>
    %107 = tpu.matmul %105, %106, %cst_64 {dimension_numbers = #tpu.dot_dimension_numbers<[1], [0], [0], [1], [0, 0, 1, 1], [], []>} : vector<8x64xbf16>, vector<64x64xbf16>, vector<8x64xf32> -> vector<8x64xf32>
    %c0_65 = arith.constant 0 : index
    %c0_66 = arith.constant 0 : index
    %108 = vector.load %arg5[%c0_65, %c0_66] : memref<1x64xf32, #tpu.memory_space<vmem>>, vector<1x64xf32>
    %109 = vector.broadcast %108 : vector<1x64xf32> to vector<8x64xf32>
    %110 = arith.addf %107, %109 : vector<8x64xf32>
    %c0_67 = arith.constant 0 : index
    %c0_68 = arith.constant 0 : index
    %c0_69 = arith.constant 0 : index
    %111 = vector.load %arg6[%c0_67, %c0_68, %c0_69] : memref<1x8x64xf32, #tpu.memory_space<vmem>>, vector<1x8x64xf32>
    %112 = vector.shape_cast %111 : vector<1x8x64xf32> to vector<8x64xf32>
    %113 = arith.addf %110, %112 : vector<8x64xf32>
    %c0_70 = arith.constant 0 : index
    %c0_71 = arith.constant 0 : index
    %c0_72 = arith.constant 0 : index
    %114 = vector.load %arg7[%c0_70, %c0_71, %c0_72] : memref<1x8x64xf32, #tpu.memory_space<vmem>>, vector<1x8x64xf32>
    %115 = vector.shape_cast %114 : vector<1x8x64xf32> to vector<8x64xf32>
    %116 = vector.shape_cast %113 : vector<8x64xf32> to vector<1x8x64xf32>
    tpu.vector_store %arg7[%c0_70, %c0_71, %c0_72], %116 {strides = array<i32>} : memref<1x8x64xf32, #tpu.memory_space<vmem>>, vector<1x8x64xf32>,
    return
  }
  func.func @transform_0(%arg0: i32) -> (i32, i32, i32) {
    %c0_i32 = arith.constant 0 : i32
    %c0_i32_0 = arith.constant 0 : i32
    %c0_i32_1 = arith.constant 0 : i32
    return %arg0, %c0_i32, %c0_i32_0 : i32, i32, i32
  }
  func.func @transform_1(%arg0: i32) -> (i32, i32, i32) {
    %c0_i32 = arith.constant 0 : i32
    %c0_i32_0 = arith.constant 0 : i32
    %c0_i32_1 = arith.constant 0 : i32
    return %arg0, %c0_i32, %c0_i32_0 : i32, i32, i32
  }
  func.func @transform_2(%arg0: i32) -> (i32, i32, i32) {
    %c0_i32 = arith.constant 0 : i32
    %c0_i32_0 = arith.constant 0 : i32
    %c0_i32_1 = arith.constant 0 : i32
    return %arg0, %c0_i32, %c0_i32_0 : i32, i32, i32
  }
  func.func @transform_3(%arg0: i32) -> (i32, i32) {
    %c0_i32 = arith.constant 0 : i32
    %c0_i32_0 = arith.constant 0 : i32
    %c0_i32_1 = arith.constant 0 : i32
    return %c0_i32, %c0_i32_0 : i32, i32
  }
  func.func @transform_4(%arg0: i32) -> (i32, i32) {
    %c0_i32 = arith.constant 0 : i32
    %c0_i32_0 = arith.constant 0 : i32
    %c0_i32_1 = arith.constant 0 : i32
    return %c0_i32, %c0_i32_0 : i32, i32
  }
  func.func @transform_5(%arg0: i32) -> (i32, i32, i32) {
    %c0_i32 = arith.constant 0 : i32
    %c0_i32_0 = arith.constant 0 : i32
    %c0_i32_1 = arith.constant 0 : i32
    return %arg0, %c0_i32, %c0_i32_0 : i32, i32, i32
  }
  func.func @transform_6(%arg0: i32) -> (i32, i32, i32) {
    %c0_i32 = arith.constant 0 : i32
    %c0_i32_0 = arith.constant 0 : i32
    %c0_i32_1 = arith.constant 0 : i32
    return %arg0, %c0_i32, %c0_i32_0 : i32, i32, i32
  }
}

module attributes {stable_mosaic.version = 11 : i64} {
  func.func @_ffn_kernel(%arg0: i32, %arg1: i32, %arg2: memref<16x64xf32, #tpu.memory_space<vmem>>, %arg3: memref<1x64xf32, #tpu.memory_space<vmem>>, %arg4: memref<1x64xf32, #tpu.memory_space<vmem>>, %arg5: memref<64x128xbf16, #tpu.memory_space<vmem>>, %arg6: memref<1x128xf32, #tpu.memory_space<vmem>>, %arg7: memref<128x64xbf16, #tpu.memory_space<vmem>>, %arg8: memref<1x64xf32, #tpu.memory_space<vmem>>, %arg9: memref<16x64xf32, #tpu.memory_space<vmem>>, %arg10: memref<16x64xbf16, #tpu.memory_space<vmem>>, %arg11: memref<16x64xf32, #tpu.memory_space<vmem>>) attributes {dimension_semantics = [#tpu.dimension_semantics<parallel>, #tpu.dimension_semantics<arbitrary>], iteration_bounds = array<i64: 1, 1>, scalar_prefetch = 0 : i64, scratch_operands = 2 : i64, tpu.core_type = #tpu.core_type<tc>, window_params = [{transform_indices = @transform_0, window_bounds = array<i64: 16, 64>}, {pipeline_mode = #tpu.pipeline_mode<synchronous>, transform_indices = @transform_1, window_bounds = array<i64: 1, 64>}, {pipeline_mode = #tpu.pipeline_mode<synchronous>, transform_indices = @transform_2, window_bounds = array<i64: 1, 64>}, {transform_indices = @transform_3, window_bounds = array<i64: 64, 128>}, {transform_indices = @transform_4, window_bounds = array<i64: 1, 128>}, {transform_indices = @transform_5, window_bounds = array<i64: 128, 64>}, {pipeline_mode = #tpu.pipeline_mode<synchronous>, transform_indices = @transform_6, window_bounds = array<i64: 1, 64>}, {transform_indices = @transform_7, window_bounds = array<i64: 16, 64>}]} {
    %c0_i32 = arith.constant 0 : i32
    %0 = arith.cmpi eq, %arg1, %c0_i32 : i32
    %1 = arith.extui %0 : i1 to i32
    %c0_i32_0 = arith.constant 0 : i32
    %2 = arith.cmpi ne, %1, %c0_i32_0 : i32
    scf.if %2 {
      %c0_16 = arith.constant 0 : index
      %c0_17 = arith.constant 0 : index
      %20 = vector.load %arg2[%c0_16, %c0_17] : memref<16x64xf32, #tpu.memory_space<vmem>>, vector<16x64xf32>
      %cst_18 = arith.constant dense<0.000000e+00> : vector<16xf32>
      %21 = vector.multi_reduction <add>, %20, %cst_18 [1] : vector<16x64xf32> to vector<16xf32>
      %22 = vector.shape_cast %21 : vector<16xf32> to vector<16x1xf32>
      %cst_19 = arith.constant 6.400000e+01 : f32
      %23 = vector.broadcast %cst_19 : f32 to vector<16x1xf32>
      %24 = arith.divf %22, %23 : vector<16x1xf32>
      %25 = vector.broadcast %24 : vector<16x1xf32> to vector<16x64xf32>
      %26 = arith.subf %20, %25 : vector<16x64xf32>
      %27 = arith.mulf %26, %26 : vector<16x64xf32>
      %cst_20 = arith.constant dense<0.000000e+00> : vector<16xf32>
      %28 = vector.multi_reduction <add>, %27, %cst_20 [1] : vector<16x64xf32> to vector<16xf32>
      %29 = vector.shape_cast %28 : vector<16xf32> to vector<16x1xf32>
      %cst_21 = arith.constant 6.300000e+01 : f32
      %30 = vector.broadcast %cst_21 : f32 to vector<16x1xf32>
      %31 = arith.divf %29, %30 : vector<16x1xf32>
      %c0_22 = arith.constant 0 : index
      %c0_23 = arith.constant 0 : index
      %32 = vector.load %arg3[%c0_22, %c0_23] : memref<1x64xf32, #tpu.memory_space<vmem>>, vector<1x64xf32>
      %33 = vector.broadcast %32 : vector<1x64xf32> to vector<16x64xf32>
      %34 = arith.mulf %33, %26 : vector<16x64xf32>
      %35 = math.sqrt %31 : vector<16x1xf32>
      %cst_24 = arith.constant 9.99999997E-7 : f32
      %36 = vector.broadcast %cst_24 : f32 to vector<16x1xf32>
      %37 = arith.addf %35, %36 : vector<16x1xf32>
      %38 = vector.broadcast %37 : vector<16x1xf32> to vector<16x64xf32>
      %39 = arith.divf %34, %38 : vector<16x64xf32>
      %c0_25 = arith.constant 0 : index
      %c0_26 = arith.constant 0 : index
      %40 = vector.load %arg4[%c0_25, %c0_26] : memref<1x64xf32, #tpu.memory_space<vmem>>, vector<1x64xf32>
      %41 = vector.broadcast %40 : vector<1x64xf32> to vector<16x64xf32>
      %42 = arith.addf %39, %41 : vector<16x64xf32>
      %43 = arith.truncf %42 : vector<16x64xf32> to vector<16x64xbf16>
      %c0_27 = arith.constant 0 : index
      %c0_28 = arith.constant 0 : index
      %44 = vector.load %arg10[%c0_27, %c0_28] : memref<16x64xbf16, #tpu.memory_space<vmem>>, vector<16x64xbf16>
      tpu.vector_store %arg10[%c0_27, %c0_28], %43 {strides = array<i32>} : memref<16x64xbf16, #tpu.memory_space<vmem>>, vector<16x64xbf16>,
      %cst_29 = arith.constant 0.000000e+00 : f32
      %45 = vector.broadcast %cst_29 : f32 to vector<16x64xf32>
      %c0_30 = arith.constant 0 : index
      %c0_31 = arith.constant 0 : index
      %46 = vector.load %arg11[%c0_30, %c0_31] : memref<16x64xf32, #tpu.memory_space<vmem>>, vector<16x64xf32>
      tpu.vector_store %arg11[%c0_30, %c0_31], %45 {strides = array<i32>} : memref<16x64xf32, #tpu.memory_space<vmem>>, vector<16x64xf32>,
    } else {
    }
    %c0 = arith.constant 0 : index
    %c0_1 = arith.constant 0 : index
    %3 = vector.load %arg10[%c0, %c0_1] : memref<16x64xbf16, #tpu.memory_space<vmem>>, vector<16x64xbf16>
    %c0_2 = arith.constant 0 : index
    %c0_3 = arith.constant 0 : index
    %4 = vector.load %arg5[%c0_2, %c0_3] : memref<64x128xbf16, #tpu.memory_space<vmem>>, vector<64x128xbf16>
    %cst = arith.constant dense<0.000000e+00> : vector<16x128xf32>
    %5 = tpu.matmul %3, %4, %cst {dimension_numbers = #tpu.dot_dimension_numbers<[1], [0], [0], [1], [0, 0, 1, 1], [], []>} : vector<16x64xbf16>, vector<64x128xbf16>, vector<16x128xf32> -> vector<16x128xf32>
    %c0_4 = arith.constant 0 : index
    %c0_5 = arith.constant 0 : index
    %6 = vector.load %arg6[%c0_4, %c0_5] : memref<1x128xf32, #tpu.memory_space<vmem>>, vector<1x128xf32>
    %7 = vector.broadcast %6 : vector<1x128xf32> to vector<16x128xf32>
    %8 = arith.addf %5, %7 : vector<16x128xf32>
    %cst_6 = arith.constant 0.000000e+00 : f32
    %9 = vector.broadcast %cst_6 : f32 to vector<16x128xf32>
    %10 = arith.maximumf %8, %9 : vector<16x128xf32>
    %c0_7 = arith.constant 0 : index
    %c0_8 = arith.constant 0 : index
    %11 = vector.load %arg11[%c0_7, %c0_8] : memref<16x64xf32, #tpu.memory_space<vmem>>, vector<16x64xf32>
    %12 = arith.truncf %10 : vector<16x128xf32> to vector<16x128xbf16>
    %c0_9 = arith.constant 0 : index
    %c0_10 = arith.constant 0 : index
    %13 = vector.load %arg7[%c0_9, %c0_10] : memref<128x64xbf16, #tpu.memory_space<vmem>>, vector<128x64xbf16>
    %cst_11 = arith.constant dense<0.000000e+00> : vector<16x64xf32>
    %14 = tpu.matmul %12, %13, %cst_11 {dimension_numbers = #tpu.dot_dimension_numbers<[1], [0], [0], [1], [0, 0, 1, 1], [], []>} : vector<16x128xbf16>, vector<128x64xbf16>, vector<16x64xf32> -> vector<16x64xf32>
    %15 = arith.addf %11, %14 : vector<16x64xf32>
    %c0_12 = arith.constant 0 : index
    %c0_13 = arith.constant 0 : index
    %16 = vector.load %arg11[%c0_12, %c0_13] : memref<16x64xf32, #tpu.memory_space<vmem>>, vector<16x64xf32>
    tpu.vector_store %arg11[%c0_12, %c0_13], %15 {strides = array<i32>} : memref<16x64xf32, #tpu.memory_space<vmem>>, vector<16x64xf32>,
    %c0_i32_14 = arith.constant 0 : i32
    %17 = arith.cmpi eq, %arg1, %c0_i32_14 : i32
    %18 = arith.extui %17 : i1 to i32
    %c0_i32_15 = arith.constant 0 : i32
    %19 = arith.cmpi ne, %18, %c0_i32_15 : i32
    scf.if %19 {
      %c0_16 = arith.constant 0 : index
      %c0_17 = arith.constant 0 : index
      %20 = vector.load %arg11[%c0_16, %c0_17] : memref<16x64xf32, #tpu.memory_space<vmem>>, vector<16x64xf32>
      %c0_18 = arith.constant 0 : index
      %c0_19 = arith.constant 0 : index
      %21 = vector.load %arg8[%c0_18, %c0_19] : memref<1x64xf32, #tpu.memory_space<vmem>>, vector<1x64xf32>
      %22 = vector.broadcast %21 : vector<1x64xf32> to vector<16x64xf32>
      %23 = arith.addf %20, %22 : vector<16x64xf32>
      %c0_20 = arith.constant 0 : index
      %c0_21 = arith.constant 0 : index
      %24 = vector.load %arg2[%c0_20, %c0_21] : memref<16x64xf32, #tpu.memory_space<vmem>>, vector<16x64xf32>
      %25 = arith.addf %23, %24 : vector<16x64xf32>
      %c0_22 = arith.constant 0 : index
      %c0_23 = arith.constant 0 : index
      %26 = vector.load %arg9[%c0_22, %c0_23] : memref<16x64xf32, #tpu.memory_space<vmem>>, vector<16x64xf32>
      tpu.vector_store %arg9[%c0_22, %c0_23], %25 {strides = array<i32>} : memref<16x64xf32, #tpu.memory_space<vmem>>, vector<16x64xf32>,
    } else {
    }
    return
  }
  func.func @transform_0(%arg0: i32, %arg1: i32) -> (i32, i32) {
    %c0_i32 = arith.constant 0 : i32
    %c0_i32_0 = arith.constant 0 : i32
    return %arg0, %c0_i32 : i32, i32
  }
  func.func @transform_1(%arg0: i32, %arg1: i32) -> (i32, i32) {
    %c0_i32 = arith.constant 0 : i32
    %c0_i32_0 = arith.constant 0 : i32
    %c0_i32_1 = arith.constant 0 : i32
    return %c0_i32, %c0_i32_0 : i32, i32
  }
  func.func @transform_2(%arg0: i32, %arg1: i32) -> (i32, i32) {
    %c0_i32 = arith.constant 0 : i32
    %c0_i32_0 = arith.constant 0 : i32
    %c0_i32_1 = arith.constant 0 : i32
    return %c0_i32, %c0_i32_0 : i32, i32
  }
  func.func @transform_3(%arg0: i32, %arg1: i32) -> (i32, i32) {
    %c0_i32 = arith.constant 0 : i32
    %c0_i32_0 = arith.constant 0 : i32
    return %c0_i32, %arg1 : i32, i32
  }
  func.func @transform_4(%arg0: i32, %arg1: i32) -> (i32, i32) {
    %c0_i32 = arith.constant 0 : i32
    %c0_i32_0 = arith.constant 0 : i32
    return %c0_i32, %arg1 : i32, i32
  }
  func.func @transform_5(%arg0: i32, %arg1: i32) -> (i32, i32) {
    %c0_i32 = arith.constant 0 : i32
    %c0_i32_0 = arith.constant 0 : i32
    return %arg1, %c0_i32 : i32, i32
  }
  func.func @transform_6(%arg0: i32, %arg1: i32) -> (i32, i32) {
    %c0_i32 = arith.constant 0 : i32
    %c0_i32_0 = arith.constant 0 : i32
    %c0_i32_1 = arith.constant 0 : i32
    return %c0_i32, %c0_i32_0 : i32, i32
  }
  func.func @transform_7(%arg0: i32, %arg1: i32) -> (i32, i32) {
    %c0_i32 = arith.constant 0 : i32
    %c0_i32_0 = arith.constant 0 : i32
    return %arg0, %c0_i32 : i32, i32
  }
}

module attributes {stable_mosaic.version = 11 : i64} {
  func.func @_fused_linear_kernel(%arg0: i32, %arg1: i32, %arg2: memref<16x64xf32, #tpu.memory_space<vmem>>, %arg3: memref<64x128xbf16, #tpu.memory_space<vmem>>, %arg4: memref<1x128xf32, #tpu.memory_space<vmem>>, %arg5: memref<1x64xf32, #tpu.memory_space<vmem>>, %arg6: memref<1x64xf32, #tpu.memory_space<vmem>>, %arg7: memref<16x128xf32, #tpu.memory_space<vmem>>, %arg8: memref<16x64xbf16, #tpu.memory_space<vmem>>) attributes {dimension_semantics = [#tpu.dimension_semantics<parallel>, #tpu.dimension_semantics<arbitrary>], iteration_bounds = array<i64: 1, 1>, scalar_prefetch = 0 : i64, scratch_operands = 1 : i64, tpu.core_type = #tpu.core_type<tc>, window_params = [{transform_indices = @transform_0, window_bounds = array<i64: 16, 64>}, {transform_indices = @transform_1, window_bounds = array<i64: 64, 128>}, {transform_indices = @transform_2, window_bounds = array<i64: 1, 128>}, {pipeline_mode = #tpu.pipeline_mode<synchronous>, transform_indices = @transform_3, window_bounds = array<i64: 1, 64>}, {pipeline_mode = #tpu.pipeline_mode<synchronous>, transform_indices = @transform_4, window_bounds = array<i64: 1, 64>}, {transform_indices = @transform_5, window_bounds = array<i64: 16, 128>}]} {
    %c0_i32 = arith.constant 0 : i32
    %0 = arith.cmpi eq, %arg1, %c0_i32 : i32
    %1 = arith.extui %0 : i1 to i32
    %c0_i32_0 = arith.constant 0 : i32
    %2 = arith.cmpi ne, %1, %c0_i32_0 : i32
    scf.if %2 {
      %c0_8 = arith.constant 0 : index
      %c0_9 = arith.constant 0 : index
      %10 = vector.load %arg2[%c0_8, %c0_9] : memref<16x64xf32, #tpu.memory_space<vmem>>, vector<16x64xf32>
      %cst_10 = arith.constant dense<0.000000e+00> : vector<16xf32>
      %11 = vector.multi_reduction <add>, %10, %cst_10 [1] : vector<16x64xf32> to vector<16xf32>
      %12 = vector.shape_cast %11 : vector<16xf32> to vector<16x1xf32>
      %cst_11 = arith.constant 6.400000e+01 : f32
      %13 = vector.broadcast %cst_11 : f32 to vector<16x1xf32>
      %14 = arith.divf %12, %13 : vector<16x1xf32>
      %15 = vector.broadcast %14 : vector<16x1xf32> to vector<16x64xf32>
      %16 = arith.subf %10, %15 : vector<16x64xf32>
      %17 = arith.mulf %16, %16 : vector<16x64xf32>
      %cst_12 = arith.constant dense<0.000000e+00> : vector<16xf32>
      %18 = vector.multi_reduction <add>, %17, %cst_12 [1] : vector<16x64xf32> to vector<16xf32>
      %19 = vector.shape_cast %18 : vector<16xf32> to vector<16x1xf32>
      %cst_13 = arith.constant 6.300000e+01 : f32
      %20 = vector.broadcast %cst_13 : f32 to vector<16x1xf32>
      %21 = arith.divf %19, %20 : vector<16x1xf32>
      %c0_14 = arith.constant 0 : index
      %c0_15 = arith.constant 0 : index
      %22 = vector.load %arg5[%c0_14, %c0_15] : memref<1x64xf32, #tpu.memory_space<vmem>>, vector<1x64xf32>
      %23 = vector.broadcast %22 : vector<1x64xf32> to vector<16x64xf32>
      %24 = arith.mulf %23, %16 : vector<16x64xf32>
      %25 = math.sqrt %21 : vector<16x1xf32>
      %cst_16 = arith.constant 9.99999997E-7 : f32
      %26 = vector.broadcast %cst_16 : f32 to vector<16x1xf32>
      %27 = arith.addf %25, %26 : vector<16x1xf32>
      %28 = vector.broadcast %27 : vector<16x1xf32> to vector<16x64xf32>
      %29 = arith.divf %24, %28 : vector<16x64xf32>
      %c0_17 = arith.constant 0 : index
      %c0_18 = arith.constant 0 : index
      %30 = vector.load %arg6[%c0_17, %c0_18] : memref<1x64xf32, #tpu.memory_space<vmem>>, vector<1x64xf32>
      %31 = vector.broadcast %30 : vector<1x64xf32> to vector<16x64xf32>
      %32 = arith.addf %29, %31 : vector<16x64xf32>
      %33 = arith.truncf %32 : vector<16x64xf32> to vector<16x64xbf16>
      %c0_19 = arith.constant 0 : index
      %c0_20 = arith.constant 0 : index
      %34 = vector.load %arg8[%c0_19, %c0_20] : memref<16x64xbf16, #tpu.memory_space<vmem>>, vector<16x64xbf16>
      tpu.vector_store %arg8[%c0_19, %c0_20], %33 {strides = array<i32>} : memref<16x64xbf16, #tpu.memory_space<vmem>>, vector<16x64xbf16>,
    } else {
    }
    %c0 = arith.constant 0 : index
    %c0_1 = arith.constant 0 : index
    %3 = vector.load %arg8[%c0, %c0_1] : memref<16x64xbf16, #tpu.memory_space<vmem>>, vector<16x64xbf16>
    %c0_2 = arith.constant 0 : index
    %c0_3 = arith.constant 0 : index
    %4 = vector.load %arg3[%c0_2, %c0_3] : memref<64x128xbf16, #tpu.memory_space<vmem>>, vector<64x128xbf16>
    %cst = arith.constant dense<0.000000e+00> : vector<16x128xf32>
    %5 = tpu.matmul %3, %4, %cst {dimension_numbers = #tpu.dot_dimension_numbers<[1], [0], [0], [1], [0, 0, 1, 1], [], []>} : vector<16x64xbf16>, vector<64x128xbf16>, vector<16x128xf32> -> vector<16x128xf32>
    %c0_4 = arith.constant 0 : index
    %c0_5 = arith.constant 0 : index
    %6 = vector.load %arg4[%c0_4, %c0_5] : memref<1x128xf32, #tpu.memory_space<vmem>>, vector<1x128xf32>
    %7 = vector.broadcast %6 : vector<1x128xf32> to vector<16x128xf32>
    %8 = arith.addf %5, %7 : vector<16x128xf32>
    %c0_6 = arith.constant 0 : index
    %c0_7 = arith.constant 0 : index
    %9 = vector.load %arg7[%c0_6, %c0_7] : memref<16x128xf32, #tpu.memory_space<vmem>>, vector<16x128xf32>
    tpu.vector_store %arg7[%c0_6, %c0_7], %8 {strides = array<i32>} : memref<16x128xf32, #tpu.memory_space<vmem>>, vector<16x128xf32>,
    return
  }
  func.func @transform_0(%arg0: i32, %arg1: i32) -> (i32, i32) {
    %c0_i32 = arith.constant 0 : i32
    %c0_i32_0 = arith.constant 0 : i32
    return %arg0, %c0_i32 : i32, i32
  }
  func.func @transform_1(%arg0: i32, %arg1: i32) -> (i32, i32) {
    %c0_i32 = arith.constant 0 : i32
    %c0_i32_0 = arith.constant 0 : i32
    return %c0_i32, %arg1 : i32, i32
  }
  func.func @transform_2(%arg0: i32, %arg1: i32) -> (i32, i32) {
    %c0_i32 = arith.constant 0 : i32
    %c0_i32_0 = arith.constant 0 : i32
    return %c0_i32, %arg1 : i32, i32
  }
  func.func @transform_3(%arg0: i32, %arg1: i32) -> (i32, i32) {
    %c0_i32 = arith.constant 0 : i32
    %c0_i32_0 = arith.constant 0 : i32
    %c0_i32_1 = arith.constant 0 : i32
    return %c0_i32, %c0_i32_0 : i32, i32
  }
  func.func @transform_4(%arg0: i32, %arg1: i32) -> (i32, i32) {
    %c0_i32 = arith.constant 0 : i32
    %c0_i32_0 = arith.constant 0 : i32
    %c0_i32_1 = arith.constant 0 : i32
    return %c0_i32, %c0_i32_0 : i32, i32
  }
  func.func @transform_5(%arg0: i32, %arg1: i32) -> (i32, i32) {
    %c0_i32 = arith.constant 0 : i32
    return %arg0, %arg1 : i32, i32
  }
}

</mosaic_0001>

<llo_original>
// kernel: transformer_forward.13
$region0: #{transformer_forward.13}
  #allocation0 [shape = 'u32[]', space=smem, size = 0x4, offset = 0x4, fixed_abs, tag = 'smem constant byte address 0x4 - core index']
  #allocation1 [shape = 'u32[72,128]{1,0:T(1,128)}', space=vmem, size = 0x9000, scoped, tag = 'internal scratch']
  #allocation2 [shape = 'bf16[16,64]{1,0:T(8,128)(2,1)}', space=vmem, size = 0x1000, scoped, tag = 'scratch operand']
  %s0 = inlined_call_operand.vmem [shape: f32[16,64], index: 0, kind: input, shape index: {}]
  %s1 = inlined_call_operand.vmem [shape: bf16[64,256], index: 1, kind: input, shape index: {}]
  %s2 = inlined_call_operand.vmem [shape: f32[1,256], index: 2, kind: input, shape index: {}]
  %s3 = inlined_call_operand.vmem [shape: f32[1,64], index: 3, kind: input, shape index: {}]
  %s4 = inlined_call_operand.vmem [shape: f32[1,64], index: 4, kind: input, shape index: {}]
  %s5 = inlined_call_operand.vmem [shape: bf16[16,256], index: 5, kind: output, shape index: {}]
  %s6 = sld [smem:[#allocation0]]
  $region34: #{transformer_forward.13} parent=0
    _
  %s8 = ssub.s32 1, %s6
  %s9 = scalar_select 0, %s8, %s6
  // Predicated region
  $region2: #{transformer_forward.13} parent=0 // pred_check
    _
  $region3: #{transformer_forward.13} parent=0 // pred_check_branch
    %11 = sbr.rel (0) target = $region5
  $region4: #{transformer_forward.13} parent=0 // pred_region
    _
  $region5: #{transformer_forward.13} parent=0 // pred_fallthru
    _
  // Predicated region
  $region6: #{transformer_forward.13} parent=0 // pred_check
    _
  $region7: #{transformer_forward.13} parent=0 // pred_check_branch
    %13 = sbr.rel (0) target = $region9
  $region8: #{transformer_forward.13} parent=0 // pred_region
    _
  $region9: #{transformer_forward.13} parent=0 // pred_fallthru
    _
  // Predicated region
  $region10: #{transformer_forward.13} parent=0 // pred_check
    _
  $region11: #{transformer_forward.13} parent=0 // pred_check_branch
    %15 = sbr.rel (0) target = $region13
  $region12: #{transformer_forward.13} parent=0 // pred_region
    _
  $region13: #{transformer_forward.13} parent=0 // pred_fallthru
    _
  // Predicated region
  $region14: #{transformer_forward.13} parent=0 // pred_check
    _
  $region15: #{transformer_forward.13} parent=0 // pred_check_branch
    %17 = sbr.rel (0) target = $region17
  $region16: #{transformer_forward.13} parent=0 // pred_region
    _
  $region17: #{transformer_forward.13} parent=0 // pred_fallthru
    _
  // Predicated region
  $region18: #{transformer_forward.13} parent=0 // pred_check
    _
  $region19: #{transformer_forward.13} parent=0 // pred_check_branch
    %19 = sbr.rel (0) target = $region21
  $region20: #{transformer_forward.13} parent=0 // pred_region
    _
  $region21: #{transformer_forward.13} parent=0 // pred_fallthru
    _
  %p21 = scmp.eq.s32.totalorder 0, 0
  // Predicated region
  $region22: #{transformer_forward.13} parent=0 // pred_check
    %p22 = pneg %p21
  $region23: #{transformer_forward.13} parent=0 // pred_check_branch
    %24 = sbr.rel (%p22) target = $region25
  $region24: #{transformer_forward.13} parent=0 // pred_region
    %v25 = vld [vmem:[%s0] sm:$0xff]
    %v26 = vld [vmem:[%s0 + $0x8] sm:$0xff]
    %vm27 = vcmask 523264
    %v28 = vsel %vm27, %v25, 0.0
    %29 = vadd.xlane.f32.xlu0 %v28
    %v30 = vpop.xlane.xlu0 %29
    %v31 = vsel %vm27, %v26, 0.0
    %32 = vadd.xlane.f32.xlu0 %v31
    %v33 = vpop.xlane.xlu0 %32
    %v34 = vrcp.pop 64.0
    %v35 = vmul.f32 64.0, %v34
    %v36 = vsub.f32 1.0, %v35
    %v37 = vmul.f32 %v34, %v36
    %v38 = vadd.f32 %v34, %v37
    %vm39 = vweird.f32 %v34
    %v40 = vsel %vm39, %v34, %v38
    %v41 = vmul.f32 %v30, %v40
    %v42 = vmul.f32 %v33, %v40
    %v43 = vsub.f32 %v25, %v41
    %v44 = vsub.f32 %v26, %v42
    %v45 = vmul.f32 %v43, %v43
    %v46 = vmul.f32 %v44, %v44
    %v47 = vsel %vm27, %v45, 0.0
    %48 = vadd.xlane.f32.xlu0 %v47
    %v49 = vpop.xlane.xlu0 %48
    %v50 = vsel %vm27, %v46, 0.0
    %51 = vadd.xlane.f32.xlu0 %v50
    %v52 = vpop.xlane.xlu0 %51
    %v53 = vrcp.pop 63.0
    %v54 = vmul.f32 63.0, %v53
    %v55 = vsub.f32 1.0, %v54
    %v56 = vmul.f32 %v53, %v55
    %v57 = vadd.f32 %v53, %v56
    %vm58 = vweird.f32 %v53
    %v59 = vsel %vm58, %v53, %v57
    %v60 = vmul.f32 %v49, %v59
    %v61 = vmul.f32 %v52, %v59
    %v62 = vld [vmem:[%s3] sm:$0x1]
    %v64 = vperm.slane %v62, 0
    %v66 = vmul.f32 %v64, %v43
    %v67 = vmul.f32 %v64, %v44
    %v68 = vrsqrt.pop %v60
    %v69 = vmul.f32 %v68, %v60
    %v70 = vmul.f32 %v69, %v68
    %v71 = vmul.f32 0.5, %v70
    %v72 = vsub.f32 1.5, %v71
    %v73 = vmul.f32 %v68, %v72
    %v74 = vmul.f32 %v60, %v73
    %vm75 = vcmp.eq.f32.partialorder %v60, inf
    %v76 = vsel %vm75, %v60, %v74
    %vm77 = vcmp.eq.f32.partialorder %v60, 0.0
    %v78 = vand.u32 %v60, 2147483648
    %v79 = vsel %vm77, %v78, %v76
    %v80 = vrsqrt.pop %v61
    %v81 = vmul.f32 %v80, %v61
    %v82 = vmul.f32 %v81, %v80
    %v83 = vmul.f32 0.5, %v82
    %v84 = vsub.f32 1.5, %v83
    %v85 = vmul.f32 %v80, %v84
    %v86 = vmul.f32 %v61, %v85
    %vm87 = vcmp.eq.f32.partialorder %v61, inf
    %v88 = vsel %vm87, %v61, %v86
    %vm89 = vcmp.eq.f32.partialorder %v61, 0.0
    %v90 = vand.u32 %v61, 2147483648
    %v91 = vsel %vm89, %v90, %v88
    %v92 = vadd.f32 %v79, 1e-06
    %v93 = vadd.f32 %v91, 1e-06
    %v94 = vrcp.pop %v92
    %v95 = vmul.f32 %v92, %v94
    %v96 = vsub.f32 1.0, %v95
    %v97 = vmul.f32 %v94, %v96
    %v98 = vadd.f32 %v94, %v97
    %vm99 = vweird.f32 %v92
    %vm100 = vweird.f32 %v94
    %vm101 = vmor %vm99, %vm100
    %v102 = vsel %vm101, %v94, %v98
    %v103 = vand.u32 2147483647, %v92
    %vm104 = vcmp.eq.f32.partialorder %v103, 8.507059e+37
    %v105 = vand.u32 %v92, 2147483648
    %v106 = vor.u32 1.1754944e-38, %v105
    %v107 = vsel %vm104, %v106, %v102
    %v108 = vmul.f32 %v66, %v107
    %v109 = vrcp.pop %v93
    %v110 = vmul.f32 %v93, %v109
    %v111 = vsub.f32 1.0, %v110
    %v112 = vmul.f32 %v109, %v111
    %v113 = vadd.f32 %v109, %v112
    %vm114 = vweird.f32 %v93
    %vm115 = vweird.f32 %v109
    %vm116 = vmor %vm114, %vm115
    %v117 = vsel %vm116, %v109, %v113
    %v118 = vand.u32 2147483647, %v93
    %vm119 = vcmp.eq.f32.partialorder %v118, 8.507059e+37
    %v120 = vand.u32 %v93, 2147483648
    %v121 = vor.u32 1.1754944e-38, %v120
    %v122 = vsel %vm119, %v121, %v117
    %v123 = vmul.f32 %v67, %v122
    %v124 = vld [vmem:[%s4] sm:$0x1]
    %v126 = vperm.slane %v124, 0
    %v128 = vadd.f32 %v108, %v126
    %v129 = vadd.f32 %v123, %v126
    %v130 = vpack.c.bf16 %v128, %v128
    %v131 = vpack.c.bf16 %v129, %v129
    %vm132 = vcmask 519168
    %133 = vst.msk [vmem:[#allocation2] sm:$0xf] %vm132, %v130
    %134 = vst.msk [vmem:[#allocation2 + $0x4] sm:$0xf] %vm132, %v131
  $region25: #{transformer_forward.13} parent=0 // pred_fallthru
    _
  %v135 = vld [vmem:[#allocation2] sm:$0xf]
  %v136 = vld [vmem:[#allocation2 + $0x4] sm:$0xf]
  %v137 = vld [vmem:[%s1] sm:$0xff]
  %v138 = vld [vmem:[%s1 + $0x8] sm:$0xff]
  %v139 = vld [vmem:[%s1 + $0x10] sm:$0xff]
  %v140 = vld [vmem:[%s1 + $0x18] sm:$0xff]
  %v141 = vld [vmem:[%s1 + $0x20] sm:$0xff]
  %v142 = vld [vmem:[%s1 + $0x28] sm:$0xff]
  %v143 = vld [vmem:[%s1 + $0x30] sm:$0xff]
  %v144 = vld [vmem:[%s1 + $0x38] sm:$0xff]
  %v145 = vld [vmem:[%s2] sm:$0x3]
  %v147 = vperm.slane %v145, 0
  %v148 = vperm.slane %v145, 1
  %v153 = vunpack.c.l.b16 %v135
  %v154 = vunpack.c.l.b16 %v136
  %v155 = vpack.c.b16 %v154, %v153
  %v164 = vunpack.c.l.b16 %v137
  %v165 = vunpack.c.h.b16 %v137
  %v166 = vunpack.c.l.b16 %v138
  %v167 = vunpack.c.h.b16 %v138
  %v168 = vunpack.c.l.b16 %v139
  %v169 = vunpack.c.h.b16 %v139
  %v170 = vunpack.c.l.b16 %v140
  %v171 = vunpack.c.h.b16 %v140
  %v172 = vunpack.c.l.b16 %v141
  %v173 = vunpack.c.h.b16 %v141
  %v174 = vunpack.c.l.b16 %v142
  %v175 = vunpack.c.h.b16 %v142
  %v176 = vunpack.c.l.b16 %v143
  %v177 = vunpack.c.h.b16 %v143
  %v178 = vunpack.c.l.b16 %v144
  %v179 = vunpack.c.h.b16 %v144
  %v180 = vpack.c.b16 %v166, %v164
  %v181 = vpack.c.b16 %v167, %v165
  %v182 = vpack.c.b16 %v170, %v168
  %v183 = vpack.c.b16 %v171, %v169
  %v184 = vpack.c.b16 %v174, %v172
  %v185 = vpack.c.b16 %v175, %v173
  %v186 = vpack.c.b16 %v178, %v176
  %v187 = vpack.c.b16 %v179, %v177
  %vm196 = vcmask 523264
  %v198 = vsel %vm196, %v155, 0
  %200 = vmatpush.bf16.msra.mxu0 0
  %201 = vmatpush.bf16.msra.mxu0 0
  %202 = vmatpush.bf16.msra.mxu0 0
  %203 = vmatpush.bf16.msra.mxu0 0
  %204 = vmatpush.bf16.msra.mxu0 %v186
  %205 = vmatpush.bf16.msra.mxu0 %v184
  %206 = vmatpush.bf16.msra.mxu0 %v182
  %207 = vmatpush.bf16.msra.mxu0 %v180
  %208 = vmatmul.bf16.gmra.mxu0 %v198
  %v209 = vpop.f32.mrf.mxu0
  %v210 = vadd.f32 %v147, %v209
  %v211 = vpop.f32.mrf.mxu0
  %v212 = vadd.f32 %v147, %v211
  %213 = vdwg.mxu0
  %214 = vmatpush.bf16.msra.mxu0 0
  %215 = vmatpush.bf16.msra.mxu0 0
  %216 = vmatpush.bf16.msra.mxu0 0
  %217 = vmatpush.bf16.msra.mxu0 0
  %218 = vmatpush.bf16.msra.mxu0 %v187
  %219 = vmatpush.bf16.msra.mxu0 %v185
  %220 = vmatpush.bf16.msra.mxu0 %v183
  %221 = vmatpush.bf16.msra.mxu0 %v181
  %222 = vmatmul.bf16.gmra.mxu0 %v198
  %v223 = vpop.f32.mrf.mxu0
  %v224 = vadd.f32 %v148, %v223
  %v225 = vpop.f32.mrf.mxu0
  %v226 = vadd.f32 %v148, %v225
  %227 = vdwg.mxu0
  %v228 = vpack.c.bf16 %v224, %v210
  %v229 = vpack.c.bf16 %v226, %v212
  %230 = vst [vmem:[%s5] sm:$0xff] %v228
  %231 = vst [vmem:[%s5 + $0x8] sm:$0xff] %v229
  // Predicated region
  $region26: #{transformer_forward.13} parent=0 // pred_check
    _
  $region27: #{transformer_forward.13} parent=0 // pred_check_branch
    %233 = sbr.rel (0) target = $region29
  $region28: #{transformer_forward.13} parent=0 // pred_region
    _
  $region29: #{transformer_forward.13} parent=0 // pred_fallthru
    _
  // Predicated region
  $region30: #{transformer_forward.13} parent=0 // pred_check
    _
  $region31: #{transformer_forward.13} parent=0 // pred_check_branch
    %235 = sbr.rel (0) target = $region33
  $region32: #{transformer_forward.13} parent=0 // pred_region
    _
  $region33: #{transformer_forward.13} parent=0 // pred_fallthru
    _

// kernel: transformer_forward.16
$region0: #{transformer_forward.16}
  #allocation0 [shape = 'u32[]', space=smem, size = 0x4, offset = 0x4, fixed_abs, tag = 'smem constant byte address 0x4 - core index']
  #allocation1 [shape = 'u32[72,128]{1,0:T(1,128)}', space=vmem, size = 0x9000, scoped, tag = 'internal scratch']
  #allocation2 [shape = 'bf16[32,64]{1,0:T(8,128)(2,1)}', space=vmem, size = 0x2000, scoped, tag = 'scratch operand']
  %s0 = inlined_call_operand.vmem [shape: f32[32,64], index: 0, kind: input, shape index: {}]
  %s1 = inlined_call_operand.vmem [shape: bf16[64,128], index: 1, kind: input, shape index: {}]
  %s2 = inlined_call_operand.vmem [shape: f32[1,128], index: 2, kind: input, shape index: {}]
  %s3 = inlined_call_operand.vmem [shape: bf16[32,128], index: 3, kind: output, shape index: {}]
  %s4 = sld [smem:[#allocation0]]
  $region26: #{transformer_forward.16} parent=0
    _
  %s6 = ssub.s32 1, %s4
  %s7 = scalar_select 0, %s6, %s4
  // Predicated region
  $region2: #{transformer_forward.16} parent=0 // pred_check
    _
  $region3: #{transformer_forward.16} parent=0 // pred_check_branch
    %9 = sbr.rel (0) target = $region5
  $region4: #{transformer_forward.16} parent=0 // pred_region
    _
  $region5: #{transformer_forward.16} parent=0 // pred_fallthru
    _
  // Predicated region
  $region6: #{transformer_forward.16} parent=0 // pred_check
    _
  $region7: #{transformer_forward.16} parent=0 // pred_check_branch
    %11 = sbr.rel (0) target = $region9
  $region8: #{transformer_forward.16} parent=0 // pred_region
    _
  $region9: #{transformer_forward.16} parent=0 // pred_fallthru
    _
  // Predicated region
  $region10: #{transformer_forward.16} parent=0 // pred_check
    _
  $region11: #{transformer_forward.16} parent=0 // pred_check_branch
    %13 = sbr.rel (0) target = $region13
  $region12: #{transformer_forward.16} parent=0 // pred_region
    _
  $region13: #{transformer_forward.16} parent=0 // pred_fallthru
    _
  %p15 = scmp.eq.s32.totalorder 0, 0
  // Predicated region
  $region14: #{transformer_forward.16} parent=0 // pred_check
    %p16 = pneg %p15
  $region15: #{transformer_forward.16} parent=0 // pred_check_branch
    %18 = sbr.rel (%p16) target = $region17
  $region16: #{transformer_forward.16} parent=0 // pred_region
    %v19 = vld [vmem:[%s0] sm:$0xff]
    %v20 = vld [vmem:[%s0 + $0x8] sm:$0xff]
    %v21 = vld [vmem:[%s0 + $0x10] sm:$0xff]
    %v22 = vld [vmem:[%s0 + $0x18] sm:$0xff]
    %v23 = vpack.c.bf16 %v19, %v19
    %v24 = vpack.c.bf16 %v20, %v20
    %v25 = vpack.c.bf16 %v21, %v21
    %v26 = vpack.c.bf16 %v22, %v22
    %vm27 = vcmask 519168
    %28 = vst.msk [vmem:[#allocation2] sm:$0xf] %vm27, %v23
    %29 = vst.msk [vmem:[#allocation2 + $0x4] sm:$0xf] %vm27, %v24
    %30 = vst.msk [vmem:[#allocation2 + $0x8] sm:$0xf] %vm27, %v25
    %31 = vst.msk [vmem:[#allocation2 + $0xc] sm:$0xf] %vm27, %v26
  $region17: #{transformer_forward.16} parent=0 // pred_fallthru
    _
  %v32 = vld [vmem:[#allocation2] sm:$0xf]
  %v33 = vld [vmem:[#allocation2 + $0x4] sm:$0xf]
  %v34 = vld [vmem:[#allocation2 + $0x8] sm:$0xf]
  %v35 = vld [vmem:[#allocation2 + $0xc] sm:$0xf]
  %v36 = vld [vmem:[%s1] sm:$0xf]
  %v37 = vld [vmem:[%s1 + $0x4] sm:$0xf]
  %v38 = vld [vmem:[%s1 + $0x8] sm:$0xf]
  %v39 = vld [vmem:[%s1 + $0xc] sm:$0xf]
  %v40 = vld [vmem:[%s1 + $0x10] sm:$0xf]
  %v41 = vld [vmem:[%s1 + $0x14] sm:$0xf]
  %v42 = vld [vmem:[%s1 + $0x18] sm:$0xf]
  %v43 = vld [vmem:[%s1 + $0x1c] sm:$0xf]
  %v44 = vld [vmem:[%s2] sm:$0x1]
  %v46 = vperm.slane %v44, 0
  %v52 = vunpack.c.l.b16 %v32
  %v53 = vunpack.c.l.b16 %v33
  %v54 = vunpack.c.l.b16 %v34
  %v55 = vunpack.c.l.b16 %v35
  %v56 = vpack.c.b16 %v53, %v52
  %v57 = vpack.c.b16 %v55, %v54
  %v66 = vunpack.c.l.b16 %v36
  %v67 = vunpack.c.l.b16 %v37
  %v68 = vunpack.c.l.b16 %v38
  %v69 = vunpack.c.l.b16 %v39
  %v70 = vunpack.c.l.b16 %v40
  %v71 = vunpack.c.l.b16 %v41
  %v72 = vunpack.c.l.b16 %v42
  %v73 = vunpack.c.l.b16 %v43
  %v74 = vpack.c.b16 %v67, %v66
  %v75 = vpack.c.b16 %v69, %v68
  %v76 = vpack.c.b16 %v71, %v70
  %v77 = vpack.c.b16 %v73, %v72
  %vm82 = vcmask 523264
  %v84 = vsel %vm82, %v56, 0
  %v87 = vsel %vm82, %v57, 0
  %89 = vmatpush.bf16.msra.mxu0 0
  %90 = vmatpush.bf16.msra.mxu0 0
  %91 = vmatpush.bf16.msra.mxu0 0
  %92 = vmatpush.bf16.msra.mxu0 0
  %93 = vmatpush.bf16.msra.mxu0 %v77
  %94 = vmatpush.bf16.msra.mxu0 %v76
  %95 = vmatpush.bf16.msra.mxu0 %v75
  %96 = vmatpush.bf16.msra.mxu0 %v74
  %97 = vmatmul.bf16.gmra.mxu0 %v84
  %v98 = vpop.f32.mrf.mxu0
  %v99 = vadd.f32 %v46, %v98
  %v100 = vpop.f32.mrf.mxu0
  %v101 = vadd.f32 %v46, %v100
  %102 = vmatmul.bf16.gmra.mxu0 %v87
  %v103 = vpop.f32.mrf.mxu0
  %v104 = vadd.f32 %v46, %v103
  %v105 = vpop.f32.mrf.mxu0
  %v106 = vadd.f32 %v46, %v105
  %107 = vdwg.mxu0
  %v108 = vpack.c.bf16 %v99, %v99
  %v109 = vpack.c.bf16 %v101, %v101
  %v110 = vpack.c.bf16 %v104, %v104
  %v111 = vpack.c.bf16 %v106, %v106
  %112 = vst [vmem:[%s3] sm:$0xf] %v108
  %113 = vst [vmem:[%s3 + $0x4] sm:$0xf] %v109
  %114 = vst [vmem:[%s3 + $0x8] sm:$0xf] %v110
  %115 = vst [vmem:[%s3 + $0xc] sm:$0xf] %v111
  // Predicated region
  $region18: #{transformer_forward.16} parent=0 // pred_check
    _
  $region19: #{transformer_forward.16} parent=0 // pred_check_branch
    %117 = sbr.rel (0) target = $region21
  $region20: #{transformer_forward.16} parent=0 // pred_region
    _
  $region21: #{transformer_forward.16} parent=0 // pred_fallthru
    _
  // Predicated region
  $region22: #{transformer_forward.16} parent=0 // pred_check
    _
  $region23: #{transformer_forward.16} parent=0 // pred_check_branch
    %119 = sbr.rel (0) target = $region25
  $region24: #{transformer_forward.16} parent=0 // pred_region
    _
  $region25: #{transformer_forward.16} parent=0 // pred_fallthru
    _

// kernel: transformer_forward.15
$region0: #{transformer_forward.15}
  #allocation0 [shape = 'u32[]', space=smem, size = 0x4, offset = 0x4, fixed_abs, tag = 'smem constant byte address 0x4 - core index']
  #allocation1 [shape = 'u32[72,128]{1,0:T(1,128)}', space=vmem, size = 0x9000, scoped, tag = 'internal scratch']
  #allocation2 [shape = 'bf16[16,64]{1,0:T(8,128)(2,1)}', space=vmem, size = 0x1000, scoped, tag = 'scratch operand']
  %s0 = inlined_call_operand.vmem [shape: f32[16,64], index: 0, kind: input, shape index: {}]
  %s1 = inlined_call_operand.vmem [shape: bf16[64,128], index: 1, kind: input, shape index: {}]
  %s2 = inlined_call_operand.vmem [shape: f32[1,128], index: 2, kind: input, shape index: {}]
  %s3 = inlined_call_operand.vmem [shape: f32[1,64], index: 3, kind: input, shape index: {}]
  %s4 = inlined_call_operand.vmem [shape: f32[1,64], index: 4, kind: input, shape index: {}]
  %s5 = inlined_call_operand.vmem [shape: bf16[16,128], index: 5, kind: output, shape index: {}]
  %s6 = sld [smem:[#allocation0]]
  $region34: #{transformer_forward.15} parent=0
    _
  %s8 = ssub.s32 1, %s6
  %s9 = scalar_select 0, %s8, %s6
  // Predicated region
  $region2: #{transformer_forward.15} parent=0 // pred_check
    _
  $region3: #{transformer_forward.15} parent=0 // pred_check_branch
    %11 = sbr.rel (0) target = $region5
  $region4: #{transformer_forward.15} parent=0 // pred_region
    _
  $region5: #{transformer_forward.15} parent=0 // pred_fallthru
    _
  // Predicated region
  $region6: #{transformer_forward.15} parent=0 // pred_check
    _
  $region7: #{transformer_forward.15} parent=0 // pred_check_branch
    %13 = sbr.rel (0) target = $region9
  $region8: #{transformer_forward.15} parent=0 // pred_region
    _
  $region9: #{transformer_forward.15} parent=0 // pred_fallthru
    _
  // Predicated region
  $region10: #{transformer_forward.15} parent=0 // pred_check
    _
  $region11: #{transformer_forward.15} parent=0 // pred_check_branch
    %15 = sbr.rel (0) target = $region13
  $region12: #{transformer_forward.15} parent=0 // pred_region
    _
  $region13: #{transformer_forward.15} parent=0 // pred_fallthru
    _
  // Predicated region
  $region14: #{transformer_forward.15} parent=0 // pred_check
    _
  $region15: #{transformer_forward.15} parent=0 // pred_check_branch
    %17 = sbr.rel (0) target = $region17
  $region16: #{transformer_forward.15} parent=0 // pred_region
    _
  $region17: #{transformer_forward.15} parent=0 // pred_fallthru
    _
  // Predicated region
  $region18: #{transformer_forward.15} parent=0 // pred_check
    _
  $region19: #{transformer_forward.15} parent=0 // pred_check_branch
    %19 = sbr.rel (0) target = $region21
  $region20: #{transformer_forward.15} parent=0 // pred_region
    _
  $region21: #{transformer_forward.15} parent=0 // pred_fallthru
    _
  %p21 = scmp.eq.s32.totalorder 0, 0
  // Predicated region
  $region22: #{transformer_forward.15} parent=0 // pred_check
    %p22 = pneg %p21
  $region23: #{transformer_forward.15} parent=0 // pred_check_branch
    %24 = sbr.rel (%p22) target = $region25
  $region24: #{transformer_forward.15} parent=0 // pred_region
    %v25 = vld [vmem:[%s0] sm:$0xff]
    %v26 = vld [vmem:[%s0 + $0x8] sm:$0xff]
    %vm27 = vcmask 523264
    %v28 = vsel %vm27, %v25, 0.0
    %29 = vadd.xlane.f32.xlu0 %v28
    %v30 = vpop.xlane.xlu0 %29
    %v31 = vsel %vm27, %v26, 0.0
    %32 = vadd.xlane.f32.xlu0 %v31
    %v33 = vpop.xlane.xlu0 %32
    %v34 = vrcp.pop 64.0
    %v35 = vmul.f32 64.0, %v34
    %v36 = vsub.f32 1.0, %v35
    %v37 = vmul.f32 %v34, %v36
    %v38 = vadd.f32 %v34, %v37
    %vm39 = vweird.f32 %v34
    %v40 = vsel %vm39, %v34, %v38
    %v41 = vmul.f32 %v30, %v40
    %v42 = vmul.f32 %v33, %v40
    %v43 = vsub.f32 %v25, %v41
    %v44 = vsub.f32 %v26, %v42
    %v45 = vmul.f32 %v43, %v43
    %v46 = vmul.f32 %v44, %v44
    %v47 = vsel %vm27, %v45, 0.0
    %48 = vadd.xlane.f32.xlu0 %v47
    %v49 = vpop.xlane.xlu0 %48
    %v50 = vsel %vm27, %v46, 0.0
    %51 = vadd.xlane.f32.xlu0 %v50
    %v52 = vpop.xlane.xlu0 %51
    %v53 = vrcp.pop 63.0
    %v54 = vmul.f32 63.0, %v53
    %v55 = vsub.f32 1.0, %v54
    %v56 = vmul.f32 %v53, %v55
    %v57 = vadd.f32 %v53, %v56
    %vm58 = vweird.f32 %v53
    %v59 = vsel %vm58, %v53, %v57
    %v60 = vmul.f32 %v49, %v59
    %v61 = vmul.f32 %v52, %v59
    %v62 = vld [vmem:[%s3] sm:$0x1]
    %v64 = vperm.slane %v62, 0
    %v66 = vmul.f32 %v64, %v43
    %v67 = vmul.f32 %v64, %v44
    %v68 = vrsqrt.pop %v60
    %v69 = vmul.f32 %v68, %v60
    %v70 = vmul.f32 %v69, %v68
    %v71 = vmul.f32 0.5, %v70
    %v72 = vsub.f32 1.5, %v71
    %v73 = vmul.f32 %v68, %v72
    %v74 = vmul.f32 %v60, %v73
    %vm75 = vcmp.eq.f32.partialorder %v60, inf
    %v76 = vsel %vm75, %v60, %v74
    %vm77 = vcmp.eq.f32.partialorder %v60, 0.0
    %v78 = vand.u32 %v60, 2147483648
    %v79 = vsel %vm77, %v78, %v76
    %v80 = vrsqrt.pop %v61
    %v81 = vmul.f32 %v80, %v61
    %v82 = vmul.f32 %v81, %v80
    %v83 = vmul.f32 0.5, %v82
    %v84 = vsub.f32 1.5, %v83
    %v85 = vmul.f32 %v80, %v84
    %v86 = vmul.f32 %v61, %v85
    %vm87 = vcmp.eq.f32.partialorder %v61, inf
    %v88 = vsel %vm87, %v61, %v86
    %vm89 = vcmp.eq.f32.partialorder %v61, 0.0
    %v90 = vand.u32 %v61, 2147483648
    %v91 = vsel %vm89, %v90, %v88
    %v92 = vadd.f32 %v79, 1e-06
    %v93 = vadd.f32 %v91, 1e-06
    %v94 = vrcp.pop %v92
    %v95 = vmul.f32 %v92, %v94
    %v96 = vsub.f32 1.0, %v95
    %v97 = vmul.f32 %v94, %v96
    %v98 = vadd.f32 %v94, %v97
    %vm99 = vweird.f32 %v92
    %vm100 = vweird.f32 %v94
    %vm101 = vmor %vm99, %vm100
    %v102 = vsel %vm101, %v94, %v98
    %v103 = vand.u32 2147483647, %v92
    %vm104 = vcmp.eq.f32.partialorder %v103, 8.507059e+37
    %v105 = vand.u32 %v92, 2147483648
    %v106 = vor.u32 1.1754944e-38, %v105
    %v107 = vsel %vm104, %v106, %v102
    %v108 = vmul.f32 %v66, %v107
    %v109 = vrcp.pop %v93
    %v110 = vmul.f32 %v93, %v109
    %v111 = vsub.f32 1.0, %v110
    %v112 = vmul.f32 %v109, %v111
    %v113 = vadd.f32 %v109, %v112
    %vm114 = vweird.f32 %v93
    %vm115 = vweird.f32 %v109
    %vm116 = vmor %vm114, %vm115
    %v117 = vsel %vm116, %v109, %v113
    %v118 = vand.u32 2147483647, %v93
    %vm119 = vcmp.eq.f32.partialorder %v118, 8.507059e+37
    %v120 = vand.u32 %v93, 2147483648
    %v121 = vor.u32 1.1754944e-38, %v120
    %v122 = vsel %vm119, %v121, %v117
    %v123 = vmul.f32 %v67, %v122
    %v124 = vld [vmem:[%s4] sm:$0x1]
    %v126 = vperm.slane %v124, 0
    %v128 = vadd.f32 %v108, %v126
    %v129 = vadd.f32 %v123, %v126
    %v130 = vpack.c.bf16 %v128, %v128
    %v131 = vpack.c.bf16 %v129, %v129
    %vm132 = vcmask 519168
    %133 = vst.msk [vmem:[#allocation2] sm:$0xf] %vm132, %v130
    %134 = vst.msk [vmem:[#allocation2 + $0x4] sm:$0xf] %vm132, %v131
  $region25: #{transformer_forward.15} parent=0 // pred_fallthru
    _
  %v135 = vld [vmem:[#allocation2] sm:$0xf]
  %v136 = vld [vmem:[#allocation2 + $0x4] sm:$0xf]
  %v137 = vld [vmem:[%s1] sm:$0xf]
  %v138 = vld [vmem:[%s1 + $0x4] sm:$0xf]
  %v139 = vld [vmem:[%s1 + $0x8] sm:$0xf]
  %v140 = vld [vmem:[%s1 + $0xc] sm:$0xf]
  %v141 = vld [vmem:[%s1 + $0x10] sm:$0xf]
  %v142 = vld [vmem:[%s1 + $0x14] sm:$0xf]
  %v143 = vld [vmem:[%s1 + $0x18] sm:$0xf]
  %v144 = vld [vmem:[%s1 + $0x1c] sm:$0xf]
  %v145 = vld [vmem:[%s2] sm:$0x1]
  %v147 = vperm.slane %v145, 0
  %v151 = vunpack.c.l.b16 %v135
  %v152 = vunpack.c.l.b16 %v136
  %v153 = vpack.c.b16 %v152, %v151
  %v162 = vunpack.c.l.b16 %v137
  %v163 = vunpack.c.l.b16 %v138
  %v164 = vunpack.c.l.b16 %v139
  %v165 = vunpack.c.l.b16 %v140
  %v166 = vunpack.c.l.b16 %v141
  %v167 = vunpack.c.l.b16 %v142
  %v168 = vunpack.c.l.b16 %v143
  %v169 = vunpack.c.l.b16 %v144
  %v170 = vpack.c.b16 %v163, %v162
  %v171 = vpack.c.b16 %v165, %v164
  %v172 = vpack.c.b16 %v167, %v166
  %v173 = vpack.c.b16 %v169, %v168
  %vm178 = vcmask 523264
  %v180 = vsel %vm178, %v153, 0
  %182 = vmatpush.bf16.msra.mxu0 0
  %183 = vmatpush.bf16.msra.mxu0 0
  %184 = vmatpush.bf16.msra.mxu0 0
  %185 = vmatpush.bf16.msra.mxu0 0
  %186 = vmatpush.bf16.msra.mxu0 %v173
  %187 = vmatpush.bf16.msra.mxu0 %v172
  %188 = vmatpush.bf16.msra.mxu0 %v171
  %189 = vmatpush.bf16.msra.mxu0 %v170
  %190 = vmatmul.bf16.gmra.mxu0 %v180
  %v191 = vpop.f32.mrf.mxu0
  %v192 = vadd.f32 %v147, %v191
  %v193 = vpop.f32.mrf.mxu0
  %v194 = vadd.f32 %v147, %v193
  %195 = vdwg.mxu0
  %v196 = vpack.c.bf16 %v192, %v192
  %v197 = vpack.c.bf16 %v194, %v194
  %198 = vst [vmem:[%s5] sm:$0xf] %v196
  %199 = vst [vmem:[%s5 + $0x4] sm:$0xf] %v197
  // Predicated region
  $region26: #{transformer_forward.15} parent=0 // pred_check
    _
  $region27: #{transformer_forward.15} parent=0 // pred_check_branch
    %201 = sbr.rel (0) target = $region29
  $region28: #{transformer_forward.15} parent=0 // pred_region
    _
  $region29: #{transformer_forward.15} parent=0 // pred_fallthru
    _
  // Predicated region
  $region30: #{transformer_forward.15} parent=0 // pred_check
    _
  $region31: #{transformer_forward.15} parent=0 // pred_check_branch
    %203 = sbr.rel (0) target = $region33
  $region32: #{transformer_forward.15} parent=0 // pred_region
    _
  $region33: #{transformer_forward.15} parent=0 // pred_fallthru
    _

// kernel: transformer_forward.14
$region0: #{transformer_forward.14}
  #allocation0 [shape = 'u32[]', space=smem, size = 0x4, offset = 0x4, fixed_abs, tag = 'smem constant byte address 0x4 - core index']
  #allocation1 [shape = 'u32[72,128]{1,0:T(1,128)}', space=vmem, size = 0x9000, scoped, tag = 'internal scratch']
  #allocation2 [shape = 'bf16[8,64]{1,0:T(8,128)(2,1)}', space=vmem, size = 0x800, scoped, tag = 'scratch operand']
  %s0 = inlined_call_operand.vmem [shape: bf16[2,8,192], index: 0, kind: input, shape index: {}]
  %s1 = inlined_call_operand.vmem [shape: s32[2,8,8], index: 1, kind: input, shape index: {}]
  %s2 = inlined_call_operand.vmem [shape: bf16[64,64], index: 2, kind: input, shape index: {}]
  %s3 = inlined_call_operand.vmem [shape: f32[1,64], index: 3, kind: input, shape index: {}]
  %s4 = inlined_call_operand.vmem [shape: f32[2,8,64], index: 4, kind: input, shape index: {}]
  %s5 = inlined_call_operand.vmem [shape: f32[2,8,64], index: 5, kind: output, shape index: {}]
  %s6 = sld [smem:[#allocation0]]
  $region53: #{transformer_forward.14} parent=0
    _
  %s8 = ssub.s32 1, %s6
  %s9 = scalar_select 0, %s8, %s6
  loop: start=0, step=1, limit=4
  $region2: #{transformer_forward.14} parent=0 // loop_pre_header
    _
  $region3: #{transformer_forward.14} parent=0 // loop_header
    %s11 = sphi 0, %s15
    %p12 = scmp.ge.s32.totalorder %s11, 4
    %s21 = sphi 0, %s23
    %s24 = sphi 0, %s21
    %s25 = sphi 0, %s24
    %s41 = sphi 0, %s25
    %s47 = sphi 0, %s49
    %s50 = sphi 0, %s47
    %s51 = sphi 0, %s50
    %s67 = sphi 0, %s51
    %s71 = sphi 0, %s71
    %s73 = sphi 0, %s71
    %s74 = sphi 0, %s73
    %s88 = sphi 0, %s74
    %s92 = sphi 0, %s92
    %s94 = sphi 0, %s92
    %s95 = sphi 0, %s94
    %s109 = sphi 0, %s95
    %s115 = sphi 0, %s117
    %s118 = sphi 0, %s115
    %s119 = sphi 0, %s118
    %s135 = sphi 0, %s119
    %s141 = sphi 0, %s143
    %s144 = sphi 0, %s141
    %s145 = sphi 0, %s144
    %s161 = sphi 0, %s145
  $region4: #{transformer_forward.14} parent=0 // loop_header_branch
    %14 = sbr.rel (%p12) target = $region8
  $region5: #{transformer_forward.14} parent=0 // loop_body
    %s16 = ssub.s32 %s11, 1
    %s17 = ssub.s32 %s11, 2
    %s18 = sadd.s32 %s11, 1
    %s19 = ssub.s32 %s11, %s18
    %p20 = scmp.eq.s32.totalorder %s19, 0
    %s22 = sadd.s32 %s21, 1
    %s23 = scalar_select %p20, %s21, %s22
    %p26 = pneg %p20
    %p27 = scmp.eq.s32.totalorder %s11, 1
    %p28 = por %p26, %p27
    %p29 = scmp.ne.s32.totalorder %s21, %s24
    %p30 = scmp.eq.s32.totalorder %s11, 0
    %p31 = por %p29, %p30
    %p32 = scmp.ne.s32.totalorder %s21, %s24
    %p33 = scmp.eq.s32.totalorder %s16, 1
    %p34 = por %p32, %p33
    %p35 = scmp.ne.s32.totalorder %s24, %s25
    %p36 = scmp.eq.s32.totalorder %s16, 0
    %p37 = por %p35, %p36
    %p38 = scmp.ne.s32.totalorder %s24, %s25
    %p39 = scmp.eq.s32.totalorder %s17, 1
    %p40 = por %p38, %p39
    %p42 = scmp.ne.s32.totalorder %s25, %s41
    %p43 = scmp.eq.s32.totalorder %s17, 0
    %p44 = por %p42, %p43
    %s45 = ssub.s32 %s11, %s18
    %p46 = scmp.eq.s32.totalorder %s45, 0
    %s48 = sadd.s32 %s47, 1
    %s49 = scalar_select %p46, %s47, %s48
    %p52 = pneg %p46
    %p53 = scmp.eq.s32.totalorder %s11, 1
    %p54 = por %p52, %p53
    %p55 = scmp.ne.s32.totalorder %s47, %s50
    %p56 = scmp.eq.s32.totalorder %s11, 0
    %p57 = por %p55, %p56
    %p58 = scmp.ne.s32.totalorder %s47, %s50
    %p59 = scmp.eq.s32.totalorder %s16, 1
    %p60 = por %p58, %p59
    %p61 = scmp.ne.s32.totalorder %s50, %s51
    %p62 = scmp.eq.s32.totalorder %s16, 0
    %p63 = por %p61, %p62
    %p64 = scmp.ne.s32.totalorder %s50, %s51
    %p65 = scmp.eq.s32.totalorder %s17, 1
    %p66 = por %p64, %p65
    %p68 = scmp.ne.s32.totalorder %s51, %s67
    %p69 = scmp.eq.s32.totalorder %s17, 0
    %p70 = por %p68, %p69
    %s72 = sadd.s32 %s71, 1
    %p75 = scmp.eq.s32.totalorder %s11, 1
    %p76 = scmp.ne.s32.totalorder %s71, %s73
    %p77 = scmp.eq.s32.totalorder %s11, 0
    %p78 = por %p76, %p77
    %p79 = scmp.ne.s32.totalorder %s71, %s73
    %p80 = scmp.eq.s32.totalorder %s16, 1
    %p81 = por %p79, %p80
    %p82 = scmp.ne.s32.totalorder %s73, %s74
    %p83 = scmp.eq.s32.totalorder %s16, 0
    %p84 = por %p82, %p83
    %p85 = scmp.ne.s32.totalorder %s73, %s74
    %p86 = scmp.eq.s32.totalorder %s17, 1
    %p87 = por %p85, %p86
    %p89 = scmp.ne.s32.totalorder %s74, %s88
    %p90 = scmp.eq.s32.totalorder %s17, 0
    %p91 = por %p89, %p90
    %s93 = sadd.s32 %s92, 1
    %p96 = scmp.eq.s32.totalorder %s11, 1
    %p97 = scmp.ne.s32.totalorder %s92, %s94
    %p98 = scmp.eq.s32.totalorder %s11, 0
    %p99 = por %p97, %p98
    %p100 = scmp.ne.s32.totalorder %s92, %s94
    %p101 = scmp.eq.s32.totalorder %s16, 1
    %p102 = por %p100, %p101
    %p103 = scmp.ne.s32.totalorder %s94, %s95
    %p104 = scmp.eq.s32.totalorder %s16, 0
    %p105 = por %p103, %p104
    %p106 = scmp.ne.s32.totalorder %s94, %s95
    %p107 = scmp.eq.s32.totalorder %s17, 1
    %p108 = por %p106, %p107
    %p110 = scmp.ne.s32.totalorder %s95, %s109
    %p111 = scmp.eq.s32.totalorder %s17, 0
    %p112 = por %p110, %p111
    %s113 = ssub.s32 %s11, %s18
    %p114 = scmp.eq.s32.totalorder %s113, 0
    %s116 = sadd.s32 %s115, 1
    %s117 = scalar_select %p114, %s115, %s116
    %p120 = pneg %p114
    %p121 = scmp.eq.s32.totalorder %s11, 1
    %p122 = por %p120, %p121
    %p123 = scmp.ne.s32.totalorder %s115, %s118
    %p124 = scmp.eq.s32.totalorder %s11, 0
    %p125 = por %p123, %p124
    %p126 = scmp.ne.s32.totalorder %s115, %s118
    %p127 = scmp.eq.s32.totalorder %s16, 1
    %p128 = por %p126, %p127
    %p129 = scmp.ne.s32.totalorder %s118, %s119
    %p130 = scmp.eq.s32.totalorder %s16, 0
    %p131 = por %p129, %p130
    %p132 = scmp.ne.s32.totalorder %s118, %s119
    %p133 = scmp.eq.s32.totalorder %s17, 1
    %p134 = por %p132, %p133
    %p136 = scmp.ne.s32.totalorder %s119, %s135
    %p137 = scmp.eq.s32.totalorder %s17, 0
    %p138 = por %p136, %p137
    %s139 = ssub.s32 %s11, %s18
    %p140 = scmp.eq.s32.totalorder %s139, 0
    %s142 = sadd.s32 %s141, 1
    %s143 = scalar_select %p140, %s141, %s142
    %p146 = pneg %p140
    %p147 = scmp.eq.s32.totalorder %s11, 1
    %p148 = por %p146, %p147
    %p149 = scmp.ne.s32.totalorder %s141, %s144
    %p150 = scmp.eq.s32.totalorder %s11, 0
    %p151 = por %p149, %p150
    %p152 = scmp.ne.s32.totalorder %s141, %s144
    %p153 = scmp.eq.s32.totalorder %s16, 1
    %p154 = por %p152, %p153
    %p155 = scmp.ne.s32.totalorder %s144, %s145
    %p156 = scmp.eq.s32.totalorder %s16, 0
    %p157 = por %p155, %p156
    %p158 = scmp.ne.s32.totalorder %s144, %s145
    %p159 = scmp.eq.s32.totalorder %s17, 1
    %p160 = por %p158, %p159
    %p162 = scmp.ne.s32.totalorder %s145, %s161
    %p163 = scmp.eq.s32.totalorder %s17, 0
    %p164 = por %p162, %p163
    %p165 = scmp.le.s32.totalorder 1, %s11
    %p166 = scmp.lt.s32.totalorder %s11, 3
    %p167 = pnand %p165, %p166
    %p168 = pneg %p167
    // Predicated region
    $region9: #{transformer_forward.14} parent=5 // pred_check
      _
    $region10: #{transformer_forward.14} parent=5 // pred_check_branch
      %170 = sbr.rel (%p167) target = $region12
    $region11: #{transformer_forward.14} parent=5 // pred_region
      %s171 = ssub.s32 %s11, 1
      // Predicated region
      $region13: #{transformer_forward.14} parent=11 // pred_check
        %p172 = pneg %p84
      $region14: #{transformer_forward.14} parent=11 // pred_check_branch
        %174 = sbr.rel (%p172) target = $region16
      $region15: #{transformer_forward.14} parent=11 // pred_region
        _
      $region16: #{transformer_forward.14} parent=11 // pred_fallthru
        _
      // Predicated region
      $region17: #{transformer_forward.14} parent=11 // pred_check
        %p175 = pneg %p105
      $region18: #{transformer_forward.14} parent=11 // pred_check_branch
        %177 = sbr.rel (%p175) target = $region20
      $region19: #{transformer_forward.14} parent=11 // pred_region
        _
      $region20: #{transformer_forward.14} parent=11 // pred_fallthru
        _
    $region12: #{transformer_forward.14} parent=5 // pred_fallthru
      _
    %p178 = scmp.lt.s32.totalorder %s11, 2
    // Predicated region
    $region21: #{transformer_forward.14} parent=5 // pred_check
      %p179 = pneg %p178
    $region22: #{transformer_forward.14} parent=5 // pred_check_branch
      %181 = sbr.rel (%p179) target = $region24
    $region23: #{transformer_forward.14} parent=5 // pred_region
      // Predicated region
      $region25: #{transformer_forward.14} parent=23 // pred_check
        %p182 = pneg %p31
      $region26: #{transformer_forward.14} parent=23 // pred_check_branch
        %184 = sbr.rel (%p182) target = $region28
      $region27: #{transformer_forward.14} parent=23 // pred_region
        %p185 = scmp.lt.s32.totalorder %s11, 1
        %s186 = scalar_select %p185, %s11, 1
        %s187 = smul.addr %s186, 2
        %s188 = smul.addr %s187, 4
        %s189 = scalar_lea.vmem %s0, %s188
      $region28: #{transformer_forward.14} parent=23 // pred_fallthru
        _
      // Predicated region
      $region29: #{transformer_forward.14} parent=23 // pred_check
        %p190 = pneg %p57
      $region30: #{transformer_forward.14} parent=23 // pred_check_branch
        %192 = sbr.rel (%p190) target = $region32
      $region31: #{transformer_forward.14} parent=23 // pred_region
        %p193 = scmp.lt.s32.totalorder %s11, 1
        %s194 = scalar_select %p193, %s11, 1
        %s195 = smul.addr %s194, 8
        %s196 = scalar_lea.vmem %s1, %s195
      $region32: #{transformer_forward.14} parent=23 // pred_fallthru
        _
      // Predicated region
      $region33: #{transformer_forward.14} parent=23 // pred_check
        %p197 = pneg %p125
      $region34: #{transformer_forward.14} parent=23 // pred_check_branch
        %199 = sbr.rel (%p197) target = $region36
      $region35: #{transformer_forward.14} parent=23 // pred_region
        %p200 = scmp.lt.s32.totalorder %s11, 1
        %s201 = scalar_select %p200, %s11, 1
        %s202 = smul.addr %s201, 8
        %s203 = scalar_lea.vmem %s4, %s202
      $region36: #{transformer_forward.14} parent=23 // pred_fallthru
        _
    $region24: #{transformer_forward.14} parent=5 // pred_fallthru
      _
    %p204 = scmp.le.s32.totalorder 1, %s11
    %p205 = scmp.lt.s32.totalorder %s11, 3
    %p206 = pnand %p204, %p205
    %p207 = pneg %p206
    // Predicated region
    $region37: #{transformer_forward.14} parent=5 // pred_check
      _
    $region38: #{transformer_forward.14} parent=5 // pred_check_branch
      %209 = sbr.rel (%p206) target = $region40
    $region39: #{transformer_forward.14} parent=5 // pred_region
      %s210 = ssub.s32 %s11, 1
      %p211 = scmp.lt.s32.totalorder %s16, 1
      %s212 = scalar_select %p211, %s16, 1
      %s213 = smul.addr %s212, 2
      %s214 = smul.addr %s213, 4
      %s215 = scalar_lea.vmem %s0, %s214
      %p216 = pneg %p37
      %p217 = pneg %p34
      %p218 = scmp.lt.s32.totalorder %s16, 1
      %s219 = scalar_select %p218, %s16, 1
      %s220 = smul.addr %s219, 8
      %s221 = scalar_lea.vmem %s1, %s220
      %p222 = pneg %p63
      %p223 = pneg %p60
      %p224 = pneg %p84
      %p225 = pneg %p81
      %p226 = pneg %p105
      %p227 = pneg %p102
      %p228 = scmp.lt.s32.totalorder %s16, 1
      %s229 = scalar_select %p228, %s16, 1
      %s230 = smul.addr %s229, 8
      %s231 = scalar_lea.vmem %s4, %s230
      %p232 = pneg %p131
      %p233 = pneg %p128
      %p234 = pneg %p157
      %p235 = pneg %p154
      %p236 = scmp.lt.s32.totalorder %s16, 1
      %s237 = scalar_select %p236, %s16, 1
      %s238 = smul.addr %s237, 8
      %s239 = scalar_lea.vmem %s5, %s238
      %p240 = scmp.lt.s32.totalorder %s16, 1
      %s241 = scalar_select %p240, %s16, 1
      %s242 = smul.addr %s241, 2
      %s243 = smul.addr %s242, 4
      %s244 = scalar_lea.vmem %s0, %s243
      %p245 = scmp.lt.s32.totalorder %s16, 1
      %s246 = scalar_select %p245, %s16, 1
      %s247 = smul.addr %s246, 8
      %s248 = scalar_lea.vmem %s1, %s247
      %p249 = scmp.lt.s32.totalorder %s16, 1
      %s250 = scalar_select %p249, %s16, 1
      %s251 = smul.addr %s250, 8
      %s252 = scalar_lea.vmem %s4, %s251
      %p253 = scmp.lt.s32.totalorder %s16, 1
      %s254 = scalar_select %p253, %s16, 1
      %s255 = smul.addr %s254, 8
      %s256 = scalar_lea.vmem %s5, %s255
      %v258 = vld [vmem:[%s248] sm:$0xff]
      %vm259 = vcmp.eq.s32.totalorder %v258, 0
      %v260 = vsel %vm259, -1e+09, 0.0
      %v261 = vld [vmem:[%s244] sm:$0xf]
      %v262 = vunpack.c.l.bf16 %v261
      %v263 = vmul.f32 %v262, 0.25
      %v264 = vpack.c.bf16 %v263, %v263
      %v266 = vunpack.c.l.b16 %v261
      %v267 = vpack.c.b16 %v266, %v266
      %268 = vrot.lane.b32.xlu0 %v267, 64
      %v269 = vpop.permute.xlu0 %268
      %vm270 = vcmask 130048
      %v272 = vsel %vm270, %v264, 0
      %v275 = vsel %vm270, %v269, 0
      %277 = vmatpush.bf16.xpose.msra.mxu0 0
      %278 = vmatpush.bf16.xpose.msra.mxu0 0
      %279 = vmatpush.bf16.xpose.msra.mxu0 0
      %280 = vmatpush.bf16.xpose.msra.mxu0 0
      %281 = vmatpush.bf16.xpose.msra.mxu0 0
      %282 = vmatpush.bf16.xpose.msra.mxu0 0
      %283 = vmatpush.bf16.xpose.msra.mxu0 0
      %284 = vmatpush.bf16.xpose.msra.mxu0 %v275
      %285 = vmatmul.bf16.gmra.mxu0 %v272
      %v286 = vpop.f32.mrf.mxu0
      %v287 = vadd.f32 %v260, %v286
      %v288 = vpop.f32.mrf.mxu0
      %289 = vdwg.mxu0
      %vm290 = vcmask 64512
      %v291 = vsel %vm290, %v287, -inf
      %292 = vmax.xlane.f32.xlu0 %v291
      %v293 = vpop.xlane.xlu0 %292
      %v294 = vsub.f32 %v287, %v293
      %v295 = vmul.f32 %v294, 1.442695
      %v296 = vpow.pop %v295
      %v297 = vsel %vm290, %v296, 0.0
      %298 = vadd.xlane.f32.xlu0 %v297
      %v299 = vpop.xlane.xlu0 %298
      %v300 = vrcp.pop %v299
      %v301 = vmul.f32 %v296, %v300
      %v302 = vpack.c.bf16 %v301, %v301
      %v303 = vld [vmem:[%s244 + $0x4] sm:$0xf]
      %v305 = vsel %vm290, %v302, 0
      %vm307 = vcmask 1043456
      %v309 = vsel %vm307, %v303, 0
      %311 = vmatpush.bf16.msra.mxu0 0
      %312 = vmatpush.bf16.msra.mxu0 0
      %313 = vmatpush.bf16.msra.mxu0 0
      %314 = vmatpush.bf16.msra.mxu0 0
      %315 = vmatpush.bf16.msra.mxu0 0
      %316 = vmatpush.bf16.msra.mxu0 0
      %317 = vmatpush.bf16.msra.mxu0 0
      %318 = vmatpush.bf16.msra.mxu0 %v309
      %319 = vmatmul.bf16.gmra.mxu0 %v305
      %v320 = vpop.f32.mrf.mxu0
      %v321 = vadd.f32 0.0, %v320
      %v322 = vpop.f32.mrf.mxu0
      %323 = vdwg.mxu0
      %v324 = vpack.c.bf16 %v321, %v321
      %vm325 = vcmask 125952
      %326 = vst.msk [vmem:[#allocation2] sm:$0xf] %vm325, %v324
      %v327 = vld [vmem:[%s244] sm:$0xf]
      %v328 = vunpack.c.l.bf16 %v327
      %v329 = vmul.f32 %v328, 0.25
      %v330 = vpack.c.bf16 %v329, %v329
      %332 = vrot.lane.b32.xlu0 %v330, 112
      %v333 = vpop.permute.xlu0 %332
      %v335 = vunpack.c.l.b16 %v327
      %v336 = vpack.c.b16 %v335, %v335
      %337 = vrot.lane.b32.xlu0 %v336, 48
      %v338 = vpop.permute.xlu0 %337
      %v340 = vsel %vm270, %v333, 0
      %v343 = vsel %vm270, %v338, 0
      %345 = vmatpush.bf16.xpose.msra.mxu0 0
      %346 = vmatpush.bf16.xpose.msra.mxu0 0
      %347 = vmatpush.bf16.xpose.msra.mxu0 0
      %348 = vmatpush.bf16.xpose.msra.mxu0 0
      %349 = vmatpush.bf16.xpose.msra.mxu0 0
      %350 = vmatpush.bf16.xpose.msra.mxu0 0
      %351 = vmatpush.bf16.xpose.msra.mxu0 0
      %352 = vmatpush.bf16.xpose.msra.mxu0 %v343
      %353 = vmatmul.bf16.gmra.mxu0 %v340
      %v354 = vpop.f32.mrf.mxu0
      %v355 = vadd.f32 %v260, %v354
      %v356 = vpop.f32.mrf.mxu0
      %357 = vdwg.mxu0
      %v358 = vsel %vm290, %v355, -inf
      %359 = vmax.xlane.f32.xlu0 %v358
      %v360 = vpop.xlane.xlu0 %359
      %v361 = vsub.f32 %v355, %v360
      %v362 = vmul.f32 %v361, 1.442695
      %v363 = vpow.pop %v362
      %v364 = vsel %vm290, %v363, 0.0
      %365 = vadd.xlane.f32.xlu0 %v364
      %v366 = vpop.xlane.xlu0 %365
      %v367 = vrcp.pop %v366
      %v368 = vmul.f32 %v363, %v367
      %v369 = vpack.c.bf16 %v368, %v368
      %v370 = vld [vmem:[%s244 + $0x4] sm:$0xf]
      %v372 = vunpack.c.l.b16 %v370
      %v373 = vpack.c.b16 %v372, %v372
      %374 = vrot.lane.b32.xlu0 %v373, 112
      %v375 = vpop.permute.xlu0 %374
      %v377 = vsel %vm290, %v369, 0
      %v380 = vsel %vm307, %v375, 0
      %382 = vmatpush.bf16.msra.mxu0 0
      %383 = vmatpush.bf16.msra.mxu0 0
      %384 = vmatpush.bf16.msra.mxu0 0
      %385 = vmatpush.bf16.msra.mxu0 0
      %386 = vmatpush.bf16.msra.mxu0 0
      %387 = vmatpush.bf16.msra.mxu0 0
      %388 = vmatpush.bf16.msra.mxu0 0
      %389 = vmatpush.bf16.msra.mxu0 %v380
      %390 = vmatmul.bf16.gmra.mxu0 %v377
      %v391 = vpop.f32.mrf.mxu0
      %v392 = vadd.f32 0.0, %v391
      %v393 = vpop.f32.mrf.mxu0
      %394 = vdwg.mxu0
      %v395 = vpack.c.bf16 %v392, %v392
      %397 = vrot.lane.b32.xlu0 %v395, 16
      %v398 = vpop.permute.xlu0 %397
      %vm400 = vcmask 257152
      %401 = vst.msk [vmem:[#allocation2] sm:$0xf] %vm400, %v398
      %v402 = vld [vmem:[%s244] sm:$0xf]
      %v403 = vunpack.c.l.bf16 %v402
      %v404 = vmul.f32 %v403, 0.25
      %v405 = vpack.c.bf16 %v404, %v404
      %407 = vrot.lane.b32.xlu0 %v405, 96
      %v408 = vpop.permute.xlu0 %407
      %v410 = vunpack.c.l.b16 %v402
      %v411 = vpack.c.b16 %v410, %v410
      %412 = vrot.lane.b32.xlu0 %v411, 32
      %v413 = vpop.permute.xlu0 %412
      %v415 = vsel %vm270, %v408, 0
      %v418 = vsel %vm270, %v413, 0
      %420 = vmatpush.bf16.xpose.msra.mxu0 0
      %421 = vmatpush.bf16.xpose.msra.mxu0 0
      %422 = vmatpush.bf16.xpose.msra.mxu0 0
      %423 = vmatpush.bf16.xpose.msra.mxu0 0
      %424 = vmatpush.bf16.xpose.msra.mxu0 0
      %425 = vmatpush.bf16.xpose.msra.mxu0 0
      %426 = vmatpush.bf16.xpose.msra.mxu0 0
      %427 = vmatpush.bf16.xpose.msra.mxu0 %v418
      %428 = vmatmul.bf16.gmra.mxu0 %v415
      %v429 = vpop.f32.mrf.mxu0
      %v430 = vadd.f32 %v260, %v429
      %v431 = vpop.f32.mrf.mxu0
      %432 = vdwg.mxu0
      %v433 = vsel %vm290, %v430, -inf
      %434 = vmax.xlane.f32.xlu0 %v433
      %v435 = vpop.xlane.xlu0 %434
      %v436 = vsub.f32 %v430, %v435
      %v437 = vmul.f32 %v436, 1.442695
      %v438 = vpow.pop %v437
      %v439 = vsel %vm290, %v438, 0.0
      %440 = vadd.xlane.f32.xlu0 %v439
      %v441 = vpop.xlane.xlu0 %440
      %v442 = vrcp.pop %v441
      %v443 = vmul.f32 %v438, %v442
      %v444 = vpack.c.bf16 %v443, %v443
      %v445 = vld [vmem:[%s244 + $0x4] sm:$0xf]
      %v447 = vunpack.c.l.b16 %v445
      %v448 = vpack.c.b16 %v447, %v447
      %449 = vrot.lane.b32.xlu0 %v448, 96
      %v450 = vpop.permute.xlu0 %449
      %v452 = vsel %vm290, %v444, 0
      %v455 = vsel %vm307, %v450, 0
      %457 = vmatpush.bf16.msra.mxu0 0
      %458 = vmatpush.bf16.msra.mxu0 0
      %459 = vmatpush.bf16.msra.mxu0 0
      %460 = vmatpush.bf16.msra.mxu0 0
      %461 = vmatpush.bf16.msra.mxu0 0
      %462 = vmatpush.bf16.msra.mxu0 0
      %463 = vmatpush.bf16.msra.mxu0 0
      %464 = vmatpush.bf16.msra.mxu0 %v455
      %465 = vmatmul.bf16.gmra.mxu0 %v452
      %v466 = vpop.f32.mrf.mxu0
      %v467 = vadd.f32 0.0, %v466
      %v468 = vpop.f32.mrf.mxu0
      %469 = vdwg.mxu0
      %v470 = vpack.c.bf16 %v467, %v467
      %472 = vrot.lane.b32.xlu0 %v470, 32
      %v473 = vpop.permute.xlu0 %472
      %vm475 = vcmask 388352
      %476 = vst.msk [vmem:[#allocation2] sm:$0xf] %vm475, %v473
      %v477 = vld [vmem:[%s244] sm:$0xf]
      %v478 = vunpack.c.l.bf16 %v477
      %v479 = vmul.f32 %v478, 0.25
      %v480 = vpack.c.bf16 %v479, %v479
      %482 = vrot.lane.b32.xlu0 %v480, 80
      %v483 = vpop.permute.xlu0 %482
      %v485 = vunpack.c.l.b16 %v477
      %v486 = vpack.c.b16 %v485, %v485
      %487 = vrot.lane.b32.xlu0 %v486, 16
      %v488 = vpop.permute.xlu0 %487
      %v490 = vsel %vm270, %v483, 0
      %v493 = vsel %vm270, %v488, 0
      %495 = vmatpush.bf16.xpose.msra.mxu0 0
      %496 = vmatpush.bf16.xpose.msra.mxu0 0
      %497 = vmatpush.bf16.xpose.msra.mxu0 0
      %498 = vmatpush.bf16.xpose.msra.mxu0 0
      %499 = vmatpush.bf16.xpose.msra.mxu0 0
      %500 = vmatpush.bf16.xpose.msra.mxu0 0
      %501 = vmatpush.bf16.xpose.msra.mxu0 0
      %502 = vmatpush.bf16.xpose.msra.mxu0 %v493
      %503 = vmatmul.bf16.gmra.mxu0 %v490
      %v504 = vpop.f32.mrf.mxu0
      %v505 = vadd.f32 %v260, %v504
      %v506 = vpop.f32.mrf.mxu0
      %507 = vdwg.mxu0
      %v508 = vsel %vm290, %v505, -inf
      %509 = vmax.xlane.f32.xlu0 %v508
      %v510 = vpop.xlane.xlu0 %509
      %v511 = vsub.f32 %v505, %v510
      %v512 = vmul.f32 %v511, 1.442695
      %v513 = vpow.pop %v512
      %v514 = vsel %vm290, %v513, 0.0
      %515 = vadd.xlane.f32.xlu0 %v514
      %v516 = vpop.xlane.xlu0 %515
      %v517 = vrcp.pop %v516
      %v518 = vmul.f32 %v513, %v517
      %v519 = vpack.c.bf16 %v518, %v518
      %v520 = vld [vmem:[%s244 + $0x4] sm:$0xf]
      %v522 = vunpack.c.l.b16 %v520
      %v523 = vpack.c.b16 %v522, %v522
      %524 = vrot.lane.b32.xlu0 %v523, 80
      %v525 = vpop.permute.xlu0 %524
      %v527 = vsel %vm290, %v519, 0
      %v530 = vsel %vm307, %v525, 0
      %532 = vmatpush.bf16.msra.mxu0 0
      %533 = vmatpush.bf16.msra.mxu0 0
      %534 = vmatpush.bf16.msra.mxu0 0
      %535 = vmatpush.bf16.msra.mxu0 0
      %536 = vmatpush.bf16.msra.mxu0 0
      %537 = vmatpush.bf16.msra.mxu0 0
      %538 = vmatpush.bf16.msra.mxu0 0
      %539 = vmatpush.bf16.msra.mxu0 %v530
      %540 = vmatmul.bf16.gmra.mxu0 %v527
      %v541 = vpop.f32.mrf.mxu0
      %v542 = vadd.f32 0.0, %v541
      %v543 = vpop.f32.mrf.mxu0
      %544 = vdwg.mxu0
      %v545 = vpack.c.bf16 %v542, %v542
      %547 = vrot.lane.b32.xlu0 %v545, 48
      %v548 = vpop.permute.xlu0 %547
      %vm550 = vcmask 519552
      %551 = vst.msk [vmem:[#allocation2] sm:$0xf] %vm550, %v548
      %v552 = vld [vmem:[#allocation2] sm:$0xf]
      %v553 = vld [vmem:[%s2] sm:$0xf]
      %v554 = vld [vmem:[%s2 + $0x4] sm:$0xf]
      %v555 = vld [vmem:[%s2 + $0x8] sm:$0xf]
      %v556 = vld [vmem:[%s2 + $0xc] sm:$0xf]
      %v557 = vld [vmem:[%s2 + $0x10] sm:$0xf]
      %v558 = vld [vmem:[%s2 + $0x14] sm:$0xf]
      %v559 = vld [vmem:[%s2 + $0x18] sm:$0xf]
      %v560 = vld [vmem:[%s2 + $0x1c] sm:$0xf]
      %v561 = vld [vmem:[%s3] sm:$0x1]
      %v563 = vperm.slane %v561, 0
      %v573 = vunpack.c.l.b16 %v553
      %v574 = vunpack.c.l.b16 %v554
      %v575 = vunpack.c.l.b16 %v555
      %v576 = vunpack.c.l.b16 %v556
      %v577 = vunpack.c.l.b16 %v557
      %v578 = vunpack.c.l.b16 %v558
      %v579 = vunpack.c.l.b16 %v559
      %v580 = vunpack.c.l.b16 %v560
      %v581 = vpack.c.b16 %v574, %v573
      %v582 = vpack.c.b16 %v576, %v575
      %v583 = vpack.c.b16 %v578, %v577
      %v584 = vpack.c.b16 %v580, %v579
      %vm589 = vcmask 523264
      %v591 = vsel %vm589, %v552, 0
      %593 = vmatpush.bf16.msra.mxu0 0
      %594 = vmatpush.bf16.msra.mxu0 0
      %595 = vmatpush.bf16.msra.mxu0 0
      %596 = vmatpush.bf16.msra.mxu0 0
      %597 = vmatpush.bf16.msra.mxu0 %v584
      %598 = vmatpush.bf16.msra.mxu0 %v583
      %599 = vmatpush.bf16.msra.mxu0 %v582
      %600 = vmatpush.bf16.msra.mxu0 %v581
      %601 = vmatmul.bf16.gmra.mxu0 %v591
      %v602 = vpop.f32.mrf.mxu0
      %v603 = vadd.f32 %v563, %v602
      %v604 = vpop.f32.mrf.mxu0
      %605 = vdwg.mxu0
      %v606 = vld [vmem:[%s252] sm:$0xff]
      %v607 = vadd.f32 %v603, %v606
      %608 = vst.msk [vmem:[%s256] sm:$0xff] %vm589, %v607
      %p609 = scmp.lt.s32.totalorder %s16, 1
      %s610 = scalar_select %p609, %s16, 1
      %s611 = smul.addr %s610, 8
      %s612 = scalar_lea.vmem %s5, %s611
      // Predicated region
      $region41: #{transformer_forward.14} parent=39 // pred_check
        %p613 = pneg %p154
      $region42: #{transformer_forward.14} parent=39 // pred_check_branch
        %615 = sbr.rel (%p613) target = $region44
      $region43: #{transformer_forward.14} parent=39 // pred_region
        _
      $region44: #{transformer_forward.14} parent=39 // pred_fallthru
        _
    $region40: #{transformer_forward.14} parent=5 // pred_fallthru
      _
    %p616 = scmp.le.s32.totalorder 2, %s11
    // Predicated region
    $region45: #{transformer_forward.14} parent=5 // pred_check
      %p617 = pneg %p616
    $region46: #{transformer_forward.14} parent=5 // pred_check_branch
      %619 = sbr.rel (%p617) target = $region48
    $region47: #{transformer_forward.14} parent=5 // pred_region
      %s620 = ssub.s32 %s11, 2
      // Predicated region
      $region49: #{transformer_forward.14} parent=47 // pred_check
        %p621 = pneg %p160
      $region50: #{transformer_forward.14} parent=47 // pred_check_branch
        %623 = sbr.rel (%p621) target = $region52
      $region51: #{transformer_forward.14} parent=47 // pred_region
        %p624 = scmp.lt.s32.totalorder %s17, 1
        %s625 = scalar_select %p624, %s17, 1
        %s626 = smul.addr %s625, 8
        %s627 = scalar_lea.vmem %s5, %s626
      $region52: #{transformer_forward.14} parent=47 // pred_fallthru
        _
    $region48: #{transformer_forward.14} parent=5 // pred_fallthru
      _
  $region6: #{transformer_forward.14} parent=0 // loop_footer
    %s15 = sadd.s32 1, %s11
  $region7: #{transformer_forward.14} parent=0 // loop_footer_branch
    %10 = sbr.rel target = $region3
  $region8: #{transformer_forward.14} parent=0 // loop_exit
    _

// kernel: transformer_forward.18
$region0: #{transformer_forward.18}
  #allocation0 [shape = 'u32[]', space=smem, size = 0x4, offset = 0x4, fixed_abs, tag = 'smem constant byte address 0x4 - core index']
  #allocation1 [shape = 'u32[72,128]{1,0:T(1,128)}', space=vmem, size = 0x9000, scoped, tag = 'internal scratch']
  #allocation2 [shape = 'bf16[16,64]{1,0:T(8,128)(2,1)}', space=vmem, size = 0x1000, scoped, tag = 'scratch operand']
  #allocation3 [shape = 'f32[16,64]{1,0:T(8,128)}', space=vmem, size = 0x2000, scoped, tag = 'scratch operand']
  %s0 = inlined_call_operand.vmem [shape: f32[16,64], index: 0, kind: input, shape index: {}]
  %s1 = inlined_call_operand.vmem [shape: f32[1,64], index: 1, kind: input, shape index: {}]
  %s2 = inlined_call_operand.vmem [shape: f32[1,64], index: 2, kind: input, shape index: {}]
  %s3 = inlined_call_operand.vmem [shape: bf16[64,128], index: 3, kind: input, shape index: {}]
  %s4 = inlined_call_operand.vmem [shape: f32[1,128], index: 4, kind: input, shape index: {}]
  %s5 = inlined_call_operand.vmem [shape: bf16[128,64], index: 5, kind: input, shape index: {}]
  %s6 = inlined_call_operand.vmem [shape: f32[1,64], index: 6, kind: input, shape index: {}]
  %s7 = inlined_call_operand.vmem [shape: f32[16,64], index: 7, kind: output, shape index: {}]
  %s8 = sld [smem:[#allocation0]]
  $region46: #{transformer_forward.18} parent=0
    _
  %s10 = ssub.s32 1, %s8
  %s11 = scalar_select 0, %s10, %s8
  // Predicated region
  $region2: #{transformer_forward.18} parent=0 // pred_check
    _
  $region3: #{transformer_forward.18} parent=0 // pred_check_branch
    %13 = sbr.rel (0) target = $region5
  $region4: #{transformer_forward.18} parent=0 // pred_region
    _
  $region5: #{transformer_forward.18} parent=0 // pred_fallthru
    _
  // Predicated region
  $region6: #{transformer_forward.18} parent=0 // pred_check
    _
  $region7: #{transformer_forward.18} parent=0 // pred_check_branch
    %15 = sbr.rel (0) target = $region9
  $region8: #{transformer_forward.18} parent=0 // pred_region
    _
  $region9: #{transformer_forward.18} parent=0 // pred_fallthru
    _
  // Predicated region
  $region10: #{transformer_forward.18} parent=0 // pred_check
    _
  $region11: #{transformer_forward.18} parent=0 // pred_check_branch
    %17 = sbr.rel (0) target = $region13
  $region12: #{transformer_forward.18} parent=0 // pred_region
    _
  $region13: #{transformer_forward.18} parent=0 // pred_fallthru
    _
  // Predicated region
  $region14: #{transformer_forward.18} parent=0 // pred_check
    _
  $region15: #{transformer_forward.18} parent=0 // pred_check_branch
    %19 = sbr.rel (0) target = $region17
  $region16: #{transformer_forward.18} parent=0 // pred_region
    _
  $region17: #{transformer_forward.18} parent=0 // pred_fallthru
    _
  // Predicated region
  $region18: #{transformer_forward.18} parent=0 // pred_check
    _
  $region19: #{transformer_forward.18} parent=0 // pred_check_branch
    %21 = sbr.rel (0) target = $region21
  $region20: #{transformer_forward.18} parent=0 // pred_region
    _
  $region21: #{transformer_forward.18} parent=0 // pred_fallthru
    _
  // Predicated region
  $region22: #{transformer_forward.18} parent=0 // pred_check
    _
  $region23: #{transformer_forward.18} parent=0 // pred_check_branch
    %23 = sbr.rel (0) target = $region25
  $region24: #{transformer_forward.18} parent=0 // pred_region
    _
  $region25: #{transformer_forward.18} parent=0 // pred_fallthru
    _
  // Predicated region
  $region26: #{transformer_forward.18} parent=0 // pred_check
    _
  $region27: #{transformer_forward.18} parent=0 // pred_check_branch
    %25 = sbr.rel (0) target = $region29
  $region28: #{transformer_forward.18} parent=0 // pred_region
    _
  $region29: #{transformer_forward.18} parent=0 // pred_fallthru
    _
  %p27 = scmp.eq.s32.totalorder 0, 0
  // Predicated region
  $region30: #{transformer_forward.18} parent=0 // pred_check
    %p28 = pneg %p27
  $region31: #{transformer_forward.18} parent=0 // pred_check_branch
    %30 = sbr.rel (%p28) target = $region33
  $region32: #{transformer_forward.18} parent=0 // pred_region
    %v31 = vld [vmem:[%s0] sm:$0xff]
    %v32 = vld [vmem:[%s0 + $0x8] sm:$0xff]
    %vm33 = vcmask 523264
    %v34 = vsel %vm33, %v31, 0.0
    %35 = vadd.xlane.f32.xlu0 %v34
    %v36 = vpop.xlane.xlu0 %35
    %v37 = vsel %vm33, %v32, 0.0
    %38 = vadd.xlane.f32.xlu0 %v37
    %v39 = vpop.xlane.xlu0 %38
    %v40 = vrcp.pop 64.0
    %v41 = vmul.f32 64.0, %v40
    %v42 = vsub.f32 1.0, %v41
    %v43 = vmul.f32 %v40, %v42
    %v44 = vadd.f32 %v40, %v43
    %vm45 = vweird.f32 %v40
    %v46 = vsel %vm45, %v40, %v44
    %v47 = vmul.f32 %v36, %v46
    %v48 = vmul.f32 %v39, %v46
    %v49 = vsub.f32 %v31, %v47
    %v50 = vsub.f32 %v32, %v48
    %v51 = vmul.f32 %v49, %v49
    %v52 = vmul.f32 %v50, %v50
    %v53 = vsel %vm33, %v51, 0.0
    %54 = vadd.xlane.f32.xlu0 %v53
    %v55 = vpop.xlane.xlu0 %54
    %v56 = vsel %vm33, %v52, 0.0
    %57 = vadd.xlane.f32.xlu0 %v56
    %v58 = vpop.xlane.xlu0 %57
    %v59 = vrcp.pop 63.0
    %v60 = vmul.f32 63.0, %v59
    %v61 = vsub.f32 1.0, %v60
    %v62 = vmul.f32 %v59, %v61
    %v63 = vadd.f32 %v59, %v62
    %vm64 = vweird.f32 %v59
    %v65 = vsel %vm64, %v59, %v63
    %v66 = vmul.f32 %v55, %v65
    %v67 = vmul.f32 %v58, %v65
    %v68 = vld [vmem:[%s1] sm:$0x1]
    %v70 = vperm.slane %v68, 0
    %v72 = vmul.f32 %v70, %v49
    %v73 = vmul.f32 %v70, %v50
    %v74 = vrsqrt.pop %v66
    %v75 = vmul.f32 %v74, %v66
    %v76 = vmul.f32 %v75, %v74
    %v77 = vmul.f32 0.5, %v76
    %v78 = vsub.f32 1.5, %v77
    %v79 = vmul.f32 %v74, %v78
    %v80 = vmul.f32 %v66, %v79
    %vm81 = vcmp.eq.f32.partialorder %v66, inf
    %v82 = vsel %vm81, %v66, %v80
    %vm83 = vcmp.eq.f32.partialorder %v66, 0.0
    %v84 = vand.u32 %v66, 2147483648
    %v85 = vsel %vm83, %v84, %v82
    %v86 = vrsqrt.pop %v67
    %v87 = vmul.f32 %v86, %v67
    %v88 = vmul.f32 %v87, %v86
    %v89 = vmul.f32 0.5, %v88
    %v90 = vsub.f32 1.5, %v89
    %v91 = vmul.f32 %v86, %v90
    %v92 = vmul.f32 %v67, %v91
    %vm93 = vcmp.eq.f32.partialorder %v67, inf
    %v94 = vsel %vm93, %v67, %v92
    %vm95 = vcmp.eq.f32.partialorder %v67, 0.0
    %v96 = vand.u32 %v67, 2147483648
    %v97 = vsel %vm95, %v96, %v94
    %v98 = vadd.f32 %v85, 1e-06
    %v99 = vadd.f32 %v97, 1e-06
    %v100 = vrcp.pop %v98
    %v101 = vmul.f32 %v98, %v100
    %v102 = vsub.f32 1.0, %v101
    %v103 = vmul.f32 %v100, %v102
    %v104 = vadd.f32 %v100, %v103
    %vm105 = vweird.f32 %v98
    %vm106 = vweird.f32 %v100
    %vm107 = vmor %vm105, %vm106
    %v108 = vsel %vm107, %v100, %v104
    %v109 = vand.u32 2147483647, %v98
    %vm110 = vcmp.eq.f32.partialorder %v109, 8.507059e+37
    %v111 = vand.u32 %v98, 2147483648
    %v112 = vor.u32 1.1754944e-38, %v111
    %v113 = vsel %vm110, %v112, %v108
    %v114 = vmul.f32 %v72, %v113
    %v115 = vrcp.pop %v99
    %v116 = vmul.f32 %v99, %v115
    %v117 = vsub.f32 1.0, %v116
    %v118 = vmul.f32 %v115, %v117
    %v119 = vadd.f32 %v115, %v118
    %vm120 = vweird.f32 %v99
    %vm121 = vweird.f32 %v115
    %vm122 = vmor %vm120, %vm121
    %v123 = vsel %vm122, %v115, %v119
    %v124 = vand.u32 2147483647, %v99
    %vm125 = vcmp.eq.f32.partialorder %v124, 8.507059e+37
    %v126 = vand.u32 %v99, 2147483648
    %v127 = vor.u32 1.1754944e-38, %v126
    %v128 = vsel %vm125, %v127, %v123
    %v129 = vmul.f32 %v73, %v128
    %v130 = vld [vmem:[%s2] sm:$0x1]
    %v132 = vperm.slane %v130, 0
    %v134 = vadd.f32 %v114, %v132
    %v135 = vadd.f32 %v129, %v132
    %v136 = vpack.c.bf16 %v134, %v134
    %v137 = vpack.c.bf16 %v135, %v135
    %vm138 = vcmask 519168
    %139 = vst.msk [vmem:[#allocation2] sm:$0xf] %vm138, %v136
    %140 = vst.msk [vmem:[#allocation2 + $0x4] sm:$0xf] %vm138, %v137
    %141 = vst.msk [vmem:[#allocation3] sm:$0xff] %vm33, 0.0
    %142 = vst.msk [vmem:[#allocation3 + $0x8] sm:$0xff] %vm33, 0.0
  $region33: #{transformer_forward.18} parent=0 // pred_fallthru
    _
  %v143 = vld [vmem:[#allocation2] sm:$0xf]
  %v144 = vld [vmem:[#allocation2 + $0x4] sm:$0xf]
  %v145 = vld [vmem:[%s3] sm:$0xf]
  %v146 = vld [vmem:[%s3 + $0x4] sm:$0xf]
  %v147 = vld [vmem:[%s3 + $0x8] sm:$0xf]
  %v148 = vld [vmem:[%s3 + $0xc] sm:$0xf]
  %v149 = vld [vmem:[%s3 + $0x10] sm:$0xf]
  %v150 = vld [vmem:[%s3 + $0x14] sm:$0xf]
  %v151 = vld [vmem:[%s3 + $0x18] sm:$0xf]
  %v152 = vld [vmem:[%s3 + $0x1c] sm:$0xf]
  %v153 = vld [vmem:[%s4] sm:$0x1]
  %v155 = vperm.slane %v153, 0
  %v159 = vunpack.c.l.b16 %v143
  %v160 = vunpack.c.l.b16 %v144
  %v161 = vpack.c.b16 %v160, %v159
  %v170 = vunpack.c.l.b16 %v145
  %v171 = vunpack.c.l.b16 %v146
  %v172 = vunpack.c.l.b16 %v147
  %v173 = vunpack.c.l.b16 %v148
  %v174 = vunpack.c.l.b16 %v149
  %v175 = vunpack.c.l.b16 %v150
  %v176 = vunpack.c.l.b16 %v151
  %v177 = vunpack.c.l.b16 %v152
  %v178 = vpack.c.b16 %v171, %v170
  %v179 = vpack.c.b16 %v173, %v172
  %v180 = vpack.c.b16 %v175, %v174
  %v181 = vpack.c.b16 %v177, %v176
  %vm186 = vcmask 523264
  %v188 = vsel %vm186, %v161, 0
  %190 = vmatpush.bf16.msra.mxu0 0
  %191 = vmatpush.bf16.msra.mxu0 0
  %192 = vmatpush.bf16.msra.mxu0 0
  %193 = vmatpush.bf16.msra.mxu0 0
  %194 = vmatpush.bf16.msra.mxu0 %v181
  %195 = vmatpush.bf16.msra.mxu0 %v180
  %196 = vmatpush.bf16.msra.mxu0 %v179
  %197 = vmatpush.bf16.msra.mxu0 %v178
  %198 = vmatmul.bf16.gmra.mxu0 %v188
  %v199 = vpop.f32.mrf.mxu0
  %v200 = vadd.f32 %v155, %v199
  %v201 = vpop.f32.mrf.mxu0
  %v202 = vadd.f32 %v155, %v201
  %203 = vdwg.mxu0
  %v204 = vmax.f32 %v200, 0.0
  %v205 = vmax.f32 %v202, 0.0
  %v206 = vld [vmem:[#allocation3] sm:$0xff]
  %v207 = vld [vmem:[#allocation3 + $0x8] sm:$0xff]
  %v208 = vpack.c.bf16 %v205, %v204
  %v209 = vld [vmem:[%s5] sm:$0xf]
  %v210 = vld [vmem:[%s5 + $0x4] sm:$0xf]
  %v211 = vld [vmem:[%s5 + $0x8] sm:$0xf]
  %v212 = vld [vmem:[%s5 + $0xc] sm:$0xf]
  %v213 = vld [vmem:[%s5 + $0x10] sm:$0xf]
  %v214 = vld [vmem:[%s5 + $0x14] sm:$0xf]
  %v215 = vld [vmem:[%s5 + $0x18] sm:$0xf]
  %v216 = vld [vmem:[%s5 + $0x1c] sm:$0xf]
  %v217 = vld [vmem:[%s5 + $0x20] sm:$0xf]
  %v218 = vld [vmem:[%s5 + $0x24] sm:$0xf]
  %v219 = vld [vmem:[%s5 + $0x28] sm:$0xf]
  %v220 = vld [vmem:[%s5 + $0x2c] sm:$0xf]
  %v221 = vld [vmem:[%s5 + $0x30] sm:$0xf]
  %v222 = vld [vmem:[%s5 + $0x34] sm:$0xf]
  %v223 = vld [vmem:[%s5 + $0x38] sm:$0xf]
  %v224 = vld [vmem:[%s5 + $0x3c] sm:$0xf]
  %v241 = vunpack.c.l.b16 %v209
  %v242 = vunpack.c.l.b16 %v210
  %v243 = vunpack.c.l.b16 %v211
  %v244 = vunpack.c.l.b16 %v212
  %v245 = vunpack.c.l.b16 %v213
  %v246 = vunpack.c.l.b16 %v214
  %v247 = vunpack.c.l.b16 %v215
  %v248 = vunpack.c.l.b16 %v216
  %v249 = vunpack.c.l.b16 %v217
  %v250 = vunpack.c.l.b16 %v218
  %v251 = vunpack.c.l.b16 %v219
  %v252 = vunpack.c.l.b16 %v220
  %v253 = vunpack.c.l.b16 %v221
  %v254 = vunpack.c.l.b16 %v222
  %v255 = vunpack.c.l.b16 %v223
  %v256 = vunpack.c.l.b16 %v224
  %v257 = vpack.c.b16 %v242, %v241
  %v258 = vpack.c.b16 %v244, %v243
  %v259 = vpack.c.b16 %v246, %v245
  %v260 = vpack.c.b16 %v248, %v247
  %v261 = vpack.c.b16 %v250, %v249
  %v262 = vpack.c.b16 %v252, %v251
  %v263 = vpack.c.b16 %v254, %v253
  %v264 = vpack.c.b16 %v256, %v255
  %273 = vmatpush.bf16.msra.mxu0 %v264
  %274 = vmatpush.bf16.msra.mxu0 %v263
  %275 = vmatpush.bf16.msra.mxu0 %v262
  %276 = vmatpush.bf16.msra.mxu0 %v261
  %277 = vmatpush.bf16.msra.mxu0 %v260
  %278 = vmatpush.bf16.msra.mxu0 %v259
  %279 = vmatpush.bf16.msra.mxu0 %v258
  %280 = vmatpush.bf16.msra.mxu0 %v257
  %281 = vmatmul.bf16.gmra.mxu0 %v208
  %v282 = vpop.f32.mrf.mxu0
  %v283 = vadd.f32 0.0, %v282
  %v284 = vpop.f32.mrf.mxu0
  %v285 = vadd.f32 0.0, %v284
  %286 = vdwg.mxu0
  %v287 = vadd.f32 %v206, %v283
  %v288 = vadd.f32 %v207, %v285
  %289 = vst.msk [vmem:[#allocation3] sm:$0xff] %vm186, %v287
  %290 = vst.msk [vmem:[#allocation3 + $0x8] sm:$0xff] %vm186, %v288
  // Predicated region
  $region34: #{transformer_forward.18} parent=0 // pred_check
    %p291 = pneg %p27
  $region35: #{transformer_forward.18} parent=0 // pred_check_branch
    %293 = sbr.rel (%p291) target = $region37
  $region36: #{transformer_forward.18} parent=0 // pred_region
    %v294 = vld [vmem:[#allocation3] sm:$0xff]
    %v295 = vld [vmem:[#allocation3 + $0x8] sm:$0xff]
    %v296 = vld [vmem:[%s6] sm:$0x1]
    %v298 = vperm.slane %v296, 0
    %v300 = vadd.f32 %v294, %v298
    %v301 = vadd.f32 %v295, %v298
    %v302 = vld [vmem:[%s0] sm:$0xff]
    %v303 = vld [vmem:[%s0 + $0x8] sm:$0xff]
    %v304 = vadd.f32 %v300, %v302
    %v305 = vadd.f32 %v301, %v303
    %306 = vst.msk [vmem:[%s7] sm:$0xff] %vm186, %v304
    %307 = vst.msk [vmem:[%s7 + $0x8] sm:$0xff] %vm186, %v305
  $region37: #{transformer_forward.18} parent=0 // pred_fallthru
    _
  // Predicated region
  $region38: #{transformer_forward.18} parent=0 // pred_check
    _
  $region39: #{transformer_forward.18} parent=0 // pred_check_branch
    %309 = sbr.rel (0) target = $region41
  $region40: #{transformer_forward.18} parent=0 // pred_region
    _
  $region41: #{transformer_forward.18} parent=0 // pred_fallthru
    _
  // Predicated region
  $region42: #{transformer_forward.18} parent=0 // pred_check
    _
  $region43: #{transformer_forward.18} parent=0 // pred_check_branch
    %311 = sbr.rel (0) target = $region45
  $region44: #{transformer_forward.18} parent=0 // pred_region
    _
  $region45: #{transformer_forward.18} parent=0 // pred_fallthru
    _

// kernel: transformer_forward.25
$region0: #{transformer_forward.25}
  #allocation0 [shape = 'u32[]', space=smem, size = 0x4, offset = 0x4, fixed_abs, tag = 'smem constant byte address 0x4 - core index']
  #allocation1 [shape = 'u32[72,128]{1,0:T(1,128)}', space=vmem, size = 0x9000, scoped, tag = 'internal scratch']
  #allocation2 [shape = 'bf16[16,64]{1,0:T(8,128)(2,1)}', space=vmem, size = 0x1000, scoped, tag = 'scratch operand']
  %s0 = inlined_call_operand.vmem [shape: f32[16,64], index: 0, kind: input, shape index: {}]
  %s1 = inlined_call_operand.vmem [shape: bf16[64,128], index: 1, kind: input, shape index: {}]
  %s2 = inlined_call_operand.vmem [shape: f32[1,128], index: 2, kind: input, shape index: {}]
  %s3 = inlined_call_operand.vmem [shape: f32[1,64], index: 3, kind: input, shape index: {}]
  %s4 = inlined_call_operand.vmem [shape: f32[1,64], index: 4, kind: input, shape index: {}]
  %s5 = inlined_call_operand.vmem [shape: f32[16,128], index: 5, kind: output, shape index: {}]
  %s6 = sld [smem:[#allocation0]]
  $region34: #{transformer_forward.25} parent=0
    _
  %s8 = ssub.s32 1, %s6
  %s9 = scalar_select 0, %s8, %s6
  // Predicated region
  $region2: #{transformer_forward.25} parent=0 // pred_check
    _
  $region3: #{transformer_forward.25} parent=0 // pred_check_branch
    %11 = sbr.rel (0) target = $region5
  $region4: #{transformer_forward.25} parent=0 // pred_region
    _
  $region5: #{transformer_forward.25} parent=0 // pred_fallthru
    _
  // Predicated region
  $region6: #{transformer_forward.25} parent=0 // pred_check
    _
  $region7: #{transformer_forward.25} parent=0 // pred_check_branch
    %13 = sbr.rel (0) target = $region9
  $region8: #{transformer_forward.25} parent=0 // pred_region
    _
  $region9: #{transformer_forward.25} parent=0 // pred_fallthru
    _
  // Predicated region
  $region10: #{transformer_forward.25} parent=0 // pred_check
    _
  $region11: #{transformer_forward.25} parent=0 // pred_check_branch
    %15 = sbr.rel (0) target = $region13
  $region12: #{transformer_forward.25} parent=0 // pred_region
    _
  $region13: #{transformer_forward.25} parent=0 // pred_fallthru
    _
  // Predicated region
  $region14: #{transformer_forward.25} parent=0 // pred_check
    _
  $region15: #{transformer_forward.25} parent=0 // pred_check_branch
    %17 = sbr.rel (0) target = $region17
  $region16: #{transformer_forward.25} parent=0 // pred_region
    _
  $region17: #{transformer_forward.25} parent=0 // pred_fallthru
    _
  // Predicated region
  $region18: #{transformer_forward.25} parent=0 // pred_check
    _
  $region19: #{transformer_forward.25} parent=0 // pred_check_branch
    %19 = sbr.rel (0) target = $region21
  $region20: #{transformer_forward.25} parent=0 // pred_region
    _
  $region21: #{transformer_forward.25} parent=0 // pred_fallthru
    _
  %p21 = scmp.eq.s32.totalorder 0, 0
  // Predicated region
  $region22: #{transformer_forward.25} parent=0 // pred_check
    %p22 = pneg %p21
  $region23: #{transformer_forward.25} parent=0 // pred_check_branch
    %24 = sbr.rel (%p22) target = $region25
  $region24: #{transformer_forward.25} parent=0 // pred_region
    %v25 = vld [vmem:[%s0] sm:$0xff]
    %v26 = vld [vmem:[%s0 + $0x8] sm:$0xff]
    %vm27 = vcmask 523264
    %v28 = vsel %vm27, %v25, 0.0
    %29 = vadd.xlane.f32.xlu0 %v28
    %v30 = vpop.xlane.xlu0 %29
    %v31 = vsel %vm27, %v26, 0.0
    %32 = vadd.xlane.f32.xlu0 %v31
    %v33 = vpop.xlane.xlu0 %32
    %v34 = vrcp.pop 64.0
    %v35 = vmul.f32 64.0, %v34
    %v36 = vsub.f32 1.0, %v35
    %v37 = vmul.f32 %v34, %v36
    %v38 = vadd.f32 %v34, %v37
    %vm39 = vweird.f32 %v34
    %v40 = vsel %vm39, %v34, %v38
    %v41 = vmul.f32 %v30, %v40
    %v42 = vmul.f32 %v33, %v40
    %v43 = vsub.f32 %v25, %v41
    %v44 = vsub.f32 %v26, %v42
    %v45 = vmul.f32 %v43, %v43
    %v46 = vmul.f32 %v44, %v44
    %v47 = vsel %vm27, %v45, 0.0
    %48 = vadd.xlane.f32.xlu0 %v47
    %v49 = vpop.xlane.xlu0 %48
    %v50 = vsel %vm27, %v46, 0.0
    %51 = vadd.xlane.f32.xlu0 %v50
    %v52 = vpop.xlane.xlu0 %51
    %v53 = vrcp.pop 63.0
    %v54 = vmul.f32 63.0, %v53
    %v55 = vsub.f32 1.0, %v54
    %v56 = vmul.f32 %v53, %v55
    %v57 = vadd.f32 %v53, %v56
    %vm58 = vweird.f32 %v53
    %v59 = vsel %vm58, %v53, %v57
    %v60 = vmul.f32 %v49, %v59
    %v61 = vmul.f32 %v52, %v59
    %v62 = vld [vmem:[%s3] sm:$0x1]
    %v64 = vperm.slane %v62, 0
    %v66 = vmul.f32 %v64, %v43
    %v67 = vmul.f32 %v64, %v44
    %v68 = vrsqrt.pop %v60
    %v69 = vmul.f32 %v68, %v60
    %v70 = vmul.f32 %v69, %v68
    %v71 = vmul.f32 0.5, %v70
    %v72 = vsub.f32 1.5, %v71
    %v73 = vmul.f32 %v68, %v72
    %v74 = vmul.f32 %v60, %v73
    %vm75 = vcmp.eq.f32.partialorder %v60, inf
    %v76 = vsel %vm75, %v60, %v74
    %vm77 = vcmp.eq.f32.partialorder %v60, 0.0
    %v78 = vand.u32 %v60, 2147483648
    %v79 = vsel %vm77, %v78, %v76
    %v80 = vrsqrt.pop %v61
    %v81 = vmul.f32 %v80, %v61
    %v82 = vmul.f32 %v81, %v80
    %v83 = vmul.f32 0.5, %v82
    %v84 = vsub.f32 1.5, %v83
    %v85 = vmul.f32 %v80, %v84
    %v86 = vmul.f32 %v61, %v85
    %vm87 = vcmp.eq.f32.partialorder %v61, inf
    %v88 = vsel %vm87, %v61, %v86
    %vm89 = vcmp.eq.f32.partialorder %v61, 0.0
    %v90 = vand.u32 %v61, 2147483648
    %v91 = vsel %vm89, %v90, %v88
    %v92 = vadd.f32 %v79, 1e-06
    %v93 = vadd.f32 %v91, 1e-06
    %v94 = vrcp.pop %v92
    %v95 = vmul.f32 %v92, %v94
    %v96 = vsub.f32 1.0, %v95
    %v97 = vmul.f32 %v94, %v96
    %v98 = vadd.f32 %v94, %v97
    %vm99 = vweird.f32 %v92
    %vm100 = vweird.f32 %v94
    %vm101 = vmor %vm99, %vm100
    %v102 = vsel %vm101, %v94, %v98
    %v103 = vand.u32 2147483647, %v92
    %vm104 = vcmp.eq.f32.partialorder %v103, 8.507059e+37
    %v105 = vand.u32 %v92, 2147483648
    %v106 = vor.u32 1.1754944e-38, %v105
    %v107 = vsel %vm104, %v106, %v102
    %v108 = vmul.f32 %v66, %v107
    %v109 = vrcp.pop %v93
    %v110 = vmul.f32 %v93, %v109
    %v111 = vsub.f32 1.0, %v110
    %v112 = vmul.f32 %v109, %v111
    %v113 = vadd.f32 %v109, %v112
    %vm114 = vweird.f32 %v93
    %vm115 = vweird.f32 %v109
    %vm116 = vmor %vm114, %vm115
    %v117 = vsel %vm116, %v109, %v113
    %v118 = vand.u32 2147483647, %v93
    %vm119 = vcmp.eq.f32.partialorder %v118, 8.507059e+37
    %v120 = vand.u32 %v93, 2147483648
    %v121 = vor.u32 1.1754944e-38, %v120
    %v122 = vsel %vm119, %v121, %v117
    %v123 = vmul.f32 %v67, %v122
    %v124 = vld [vmem:[%s4] sm:$0x1]
    %v126 = vperm.slane %v124, 0
    %v128 = vadd.f32 %v108, %v126
    %v129 = vadd.f32 %v123, %v126
    %v130 = vpack.c.bf16 %v128, %v128
    %v131 = vpack.c.bf16 %v129, %v129
    %vm132 = vcmask 519168
    %133 = vst.msk [vmem:[#allocation2] sm:$0xf] %vm132, %v130
    %134 = vst.msk [vmem:[#allocation2 + $0x4] sm:$0xf] %vm132, %v131
  $region25: #{transformer_forward.25} parent=0 // pred_fallthru
    _
  %v135 = vld [vmem:[#allocation2] sm:$0xf]
  %v136 = vld [vmem:[#allocation2 + $0x4] sm:$0xf]
  %v137 = vld [vmem:[%s1] sm:$0xf]
  %v138 = vld [vmem:[%s1 + $0x4] sm:$0xf]
  %v139 = vld [vmem:[%s1 + $0x8] sm:$0xf]
  %v140 = vld [vmem:[%s1 + $0xc] sm:$0xf]
  %v141 = vld [vmem:[%s1 + $0x10] sm:$0xf]
  %v142 = vld [vmem:[%s1 + $0x14] sm:$0xf]
  %v143 = vld [vmem:[%s1 + $0x18] sm:$0xf]
  %v144 = vld [vmem:[%s1 + $0x1c] sm:$0xf]
  %v145 = vld [vmem:[%s2] sm:$0x1]
  %v147 = vperm.slane %v145, 0
  %v151 = vunpack.c.l.b16 %v135
  %v152 = vunpack.c.l.b16 %v136
  %v153 = vpack.c.b16 %v152, %v151
  %v162 = vunpack.c.l.b16 %v137
  %v163 = vunpack.c.l.b16 %v138
  %v164 = vunpack.c.l.b16 %v139
  %v165 = vunpack.c.l.b16 %v140
  %v166 = vunpack.c.l.b16 %v141
  %v167 = vunpack.c.l.b16 %v142
  %v168 = vunpack.c.l.b16 %v143
  %v169 = vunpack.c.l.b16 %v144
  %v170 = vpack.c.b16 %v163, %v162
  %v171 = vpack.c.b16 %v165, %v164
  %v172 = vpack.c.b16 %v167, %v166
  %v173 = vpack.c.b16 %v169, %v168
  %vm178 = vcmask 523264
  %v180 = vsel %vm178, %v153, 0
  %182 = vmatpush.bf16.msra.mxu0 0
  %183 = vmatpush.bf16.msra.mxu0 0
  %184 = vmatpush.bf16.msra.mxu0 0
  %185 = vmatpush.bf16.msra.mxu0 0
  %186 = vmatpush.bf16.msra.mxu0 %v173
  %187 = vmatpush.bf16.msra.mxu0 %v172
  %188 = vmatpush.bf16.msra.mxu0 %v171
  %189 = vmatpush.bf16.msra.mxu0 %v170
  %190 = vmatmul.bf16.gmra.mxu0 %v180
  %v191 = vpop.f32.mrf.mxu0
  %v192 = vadd.f32 %v147, %v191
  %v193 = vpop.f32.mrf.mxu0
  %v194 = vadd.f32 %v147, %v193
  %195 = vdwg.mxu0
  %196 = vst [vmem:[%s5] sm:$0xff] %v192
  %197 = vst [vmem:[%s5 + $0x8] sm:$0xff] %v194
  // Predicated region
  $region26: #{transformer_forward.25} parent=0 // pred_check
    _
  $region27: #{transformer_forward.25} parent=0 // pred_check_branch
    %199 = sbr.rel (0) target = $region29
  $region28: #{transformer_forward.25} parent=0 // pred_region
    _
  $region29: #{transformer_forward.25} parent=0 // pred_fallthru
    _
  // Predicated region
  $region30: #{transformer_forward.25} parent=0 // pred_check
    _
  $region31: #{transformer_forward.25} parent=0 // pred_check_branch
    %201 = sbr.rel (0) target = $region33
  $region32: #{transformer_forward.25} parent=0 // pred_region
    _
  $region33: #{transformer_forward.25} parent=0 // pred_fallthru
    _

// kernel: transformer_forward.17
$region0: #{transformer_forward.17}
  #allocation0 [shape = 'u32[]', space=smem, size = 0x4, offset = 0x4, fixed_abs, tag = 'smem constant byte address 0x4 - core index']
  #allocation1 [shape = 'u32[72,128]{1,0:T(1,128)}', space=vmem, size = 0x9000, scoped, tag = 'internal scratch']
  #allocation2 [shape = 'bf16[8,64]{1,0:T(8,128)(2,1)}', space=vmem, size = 0x800, scoped, tag = 'scratch operand']
  %s0 = inlined_call_operand.vmem [shape: bf16[2,8,64], index: 0, kind: input, shape index: {}]
  %s1 = inlined_call_operand.vmem [shape: bf16[2,16,128], index: 1, kind: input, shape index: {}]
  %s2 = inlined_call_operand.vmem [shape: s32[2,1,16], index: 2, kind: input, shape index: {}]
  %s3 = inlined_call_operand.vmem [shape: bf16[64,64], index: 3, kind: input, shape index: {}]
  %s4 = inlined_call_operand.vmem [shape: f32[1,64], index: 4, kind: input, shape index: {}]
  %s5 = inlined_call_operand.vmem [shape: f32[2,8,64], index: 5, kind: input, shape index: {}]
  %s6 = inlined_call_operand.vmem [shape: f32[2,8,64], index: 6, kind: output, shape index: {}]
  %s7 = sld [smem:[#allocation0]]
  $region57: #{transformer_forward.17} parent=0
    _
  %s9 = ssub.s32 1, %s7
  %s10 = scalar_select 0, %s9, %s7
  loop: start=0, step=1, limit=4
  $region2: #{transformer_forward.17} parent=0 // loop_pre_header
    _
  $region3: #{transformer_forward.17} parent=0 // loop_header
    %s12 = sphi 0, %s16
    %p13 = scmp.ge.s32.totalorder %s12, 4
    %s22 = sphi 0, %s24
    %s25 = sphi 0, %s22
    %s26 = sphi 0, %s25
    %s42 = sphi 0, %s26
    %s48 = sphi 0, %s50
    %s51 = sphi 0, %s48
    %s52 = sphi 0, %s51
    %s68 = sphi 0, %s52
    %s74 = sphi 0, %s76
    %s77 = sphi 0, %s74
    %s78 = sphi 0, %s77
    %s94 = sphi 0, %s78
    %s98 = sphi 0, %s98
    %s100 = sphi 0, %s98
    %s101 = sphi 0, %s100
    %s115 = sphi 0, %s101
    %s119 = sphi 0, %s119
    %s121 = sphi 0, %s119
    %s122 = sphi 0, %s121
    %s136 = sphi 0, %s122
    %s142 = sphi 0, %s144
    %s145 = sphi 0, %s142
    %s146 = sphi 0, %s145
    %s162 = sphi 0, %s146
    %s168 = sphi 0, %s170
    %s171 = sphi 0, %s168
    %s172 = sphi 0, %s171
    %s188 = sphi 0, %s172
  $region4: #{transformer_forward.17} parent=0 // loop_header_branch
    %15 = sbr.rel (%p13) target = $region8
  $region5: #{transformer_forward.17} parent=0 // loop_body
    %s17 = ssub.s32 %s12, 1
    %s18 = ssub.s32 %s12, 2
    %s19 = sadd.s32 %s12, 1
    %s20 = ssub.s32 %s12, %s19
    %p21 = scmp.eq.s32.totalorder %s20, 0
    %s23 = sadd.s32 %s22, 1
    %s24 = scalar_select %p21, %s22, %s23
    %p27 = pneg %p21
    %p28 = scmp.eq.s32.totalorder %s12, 1
    %p29 = por %p27, %p28
    %p30 = scmp.ne.s32.totalorder %s22, %s25
    %p31 = scmp.eq.s32.totalorder %s12, 0
    %p32 = por %p30, %p31
    %p33 = scmp.ne.s32.totalorder %s22, %s25
    %p34 = scmp.eq.s32.totalorder %s17, 1
    %p35 = por %p33, %p34
    %p36 = scmp.ne.s32.totalorder %s25, %s26
    %p37 = scmp.eq.s32.totalorder %s17, 0
    %p38 = por %p36, %p37
    %p39 = scmp.ne.s32.totalorder %s25, %s26
    %p40 = scmp.eq.s32.totalorder %s18, 1
    %p41 = por %p39, %p40
    %p43 = scmp.ne.s32.totalorder %s26, %s42
    %p44 = scmp.eq.s32.totalorder %s18, 0
    %p45 = por %p43, %p44
    %s46 = ssub.s32 %s12, %s19
    %p47 = scmp.eq.s32.totalorder %s46, 0
    %s49 = sadd.s32 %s48, 1
    %s50 = scalar_select %p47, %s48, %s49
    %p53 = pneg %p47
    %p54 = scmp.eq.s32.totalorder %s12, 1
    %p55 = por %p53, %p54
    %p56 = scmp.ne.s32.totalorder %s48, %s51
    %p57 = scmp.eq.s32.totalorder %s12, 0
    %p58 = por %p56, %p57
    %p59 = scmp.ne.s32.totalorder %s48, %s51
    %p60 = scmp.eq.s32.totalorder %s17, 1
    %p61 = por %p59, %p60
    %p62 = scmp.ne.s32.totalorder %s51, %s52
    %p63 = scmp.eq.s32.totalorder %s17, 0
    %p64 = por %p62, %p63
    %p65 = scmp.ne.s32.totalorder %s51, %s52
    %p66 = scmp.eq.s32.totalorder %s18, 1
    %p67 = por %p65, %p66
    %p69 = scmp.ne.s32.totalorder %s52, %s68
    %p70 = scmp.eq.s32.totalorder %s18, 0
    %p71 = por %p69, %p70
    %s72 = ssub.s32 %s12, %s19
    %p73 = scmp.eq.s32.totalorder %s72, 0
    %s75 = sadd.s32 %s74, 1
    %s76 = scalar_select %p73, %s74, %s75
    %p79 = pneg %p73
    %p80 = scmp.eq.s32.totalorder %s12, 1
    %p81 = por %p79, %p80
    %p82 = scmp.ne.s32.totalorder %s74, %s77
    %p83 = scmp.eq.s32.totalorder %s12, 0
    %p84 = por %p82, %p83
    %p85 = scmp.ne.s32.totalorder %s74, %s77
    %p86 = scmp.eq.s32.totalorder %s17, 1
    %p87 = por %p85, %p86
    %p88 = scmp.ne.s32.totalorder %s77, %s78
    %p89 = scmp.eq.s32.totalorder %s17, 0
    %p90 = por %p88, %p89
    %p91 = scmp.ne.s32.totalorder %s77, %s78
    %p92 = scmp.eq.s32.totalorder %s18, 1
    %p93 = por %p91, %p92
    %p95 = scmp.ne.s32.totalorder %s78, %s94
    %p96 = scmp.eq.s32.totalorder %s18, 0
    %p97 = por %p95, %p96
    %s99 = sadd.s32 %s98, 1
    %p102 = scmp.eq.s32.totalorder %s12, 1
    %p103 = scmp.ne.s32.totalorder %s98, %s100
    %p104 = scmp.eq.s32.totalorder %s12, 0
    %p105 = por %p103, %p104
    %p106 = scmp.ne.s32.totalorder %s98, %s100
    %p107 = scmp.eq.s32.totalorder %s17, 1
    %p108 = por %p106, %p107
    %p109 = scmp.ne.s32.totalorder %s100, %s101
    %p110 = scmp.eq.s32.totalorder %s17, 0
    %p111 = por %p109, %p110
    %p112 = scmp.ne.s32.totalorder %s100, %s101
    %p113 = scmp.eq.s32.totalorder %s18, 1
    %p114 = por %p112, %p113
    %p116 = scmp.ne.s32.totalorder %s101, %s115
    %p117 = scmp.eq.s32.totalorder %s18, 0
    %p118 = por %p116, %p117
    %s120 = sadd.s32 %s119, 1
    %p123 = scmp.eq.s32.totalorder %s12, 1
    %p124 = scmp.ne.s32.totalorder %s119, %s121
    %p125 = scmp.eq.s32.totalorder %s12, 0
    %p126 = por %p124, %p125
    %p127 = scmp.ne.s32.totalorder %s119, %s121
    %p128 = scmp.eq.s32.totalorder %s17, 1
    %p129 = por %p127, %p128
    %p130 = scmp.ne.s32.totalorder %s121, %s122
    %p131 = scmp.eq.s32.totalorder %s17, 0
    %p132 = por %p130, %p131
    %p133 = scmp.ne.s32.totalorder %s121, %s122
    %p134 = scmp.eq.s32.totalorder %s18, 1
    %p135 = por %p133, %p134
    %p137 = scmp.ne.s32.totalorder %s122, %s136
    %p138 = scmp.eq.s32.totalorder %s18, 0
    %p139 = por %p137, %p138
    %s140 = ssub.s32 %s12, %s19
    %p141 = scmp.eq.s32.totalorder %s140, 0
    %s143 = sadd.s32 %s142, 1
    %s144 = scalar_select %p141, %s142, %s143
    %p147 = pneg %p141
    %p148 = scmp.eq.s32.totalorder %s12, 1
    %p149 = por %p147, %p148
    %p150 = scmp.ne.s32.totalorder %s142, %s145
    %p151 = scmp.eq.s32.totalorder %s12, 0
    %p152 = por %p150, %p151
    %p153 = scmp.ne.s32.totalorder %s142, %s145
    %p154 = scmp.eq.s32.totalorder %s17, 1
    %p155 = por %p153, %p154
    %p156 = scmp.ne.s32.totalorder %s145, %s146
    %p157 = scmp.eq.s32.totalorder %s17, 0
    %p158 = por %p156, %p157
    %p159 = scmp.ne.s32.totalorder %s145, %s146
    %p160 = scmp.eq.s32.totalorder %s18, 1
    %p161 = por %p159, %p160
    %p163 = scmp.ne.s32.totalorder %s146, %s162
    %p164 = scmp.eq.s32.totalorder %s18, 0
    %p165 = por %p163, %p164
    %s166 = ssub.s32 %s12, %s19
    %p167 = scmp.eq.s32.totalorder %s166, 0
    %s169 = sadd.s32 %s168, 1
    %s170 = scalar_select %p167, %s168, %s169
    %p173 = pneg %p167
    %p174 = scmp.eq.s32.totalorder %s12, 1
    %p175 = por %p173, %p174
    %p176 = scmp.ne.s32.totalorder %s168, %s171
    %p177 = scmp.eq.s32.totalorder %s12, 0
    %p178 = por %p176, %p177
    %p179 = scmp.ne.s32.totalorder %s168, %s171
    %p180 = scmp.eq.s32.totalorder %s17, 1
    %p181 = por %p179, %p180
    %p182 = scmp.ne.s32.totalorder %s171, %s172
    %p183 = scmp.eq.s32.totalorder %s17, 0
    %p184 = por %p182, %p183
    %p185 = scmp.ne.s32.totalorder %s171, %s172
    %p186 = scmp.eq.s32.totalorder %s18, 1
    %p187 = por %p185, %p186
    %p189 = scmp.ne.s32.totalorder %s172, %s188
    %p190 = scmp.eq.s32.totalorder %s18, 0
    %p191 = por %p189, %p190
    %p192 = scmp.le.s32.totalorder 1, %s12
    %p193 = scmp.lt.s32.totalorder %s12, 3
    %p194 = pnand %p192, %p193
    %p195 = pneg %p194
    // Predicated region
    $region9: #{transformer_forward.17} parent=5 // pred_check
      _
    $region10: #{transformer_forward.17} parent=5 // pred_check_branch
      %197 = sbr.rel (%p194) target = $region12
    $region11: #{transformer_forward.17} parent=5 // pred_region
      %s198 = ssub.s32 %s12, 1
      // Predicated region
      $region13: #{transformer_forward.17} parent=11 // pred_check
        %p199 = pneg %p111
      $region14: #{transformer_forward.17} parent=11 // pred_check_branch
        %201 = sbr.rel (%p199) target = $region16
      $region15: #{transformer_forward.17} parent=11 // pred_region
        _
      $region16: #{transformer_forward.17} parent=11 // pred_fallthru
        _
      // Predicated region
      $region17: #{transformer_forward.17} parent=11 // pred_check
        %p202 = pneg %p132
      $region18: #{transformer_forward.17} parent=11 // pred_check_branch
        %204 = sbr.rel (%p202) target = $region20
      $region19: #{transformer_forward.17} parent=11 // pred_region
        _
      $region20: #{transformer_forward.17} parent=11 // pred_fallthru
        _
    $region12: #{transformer_forward.17} parent=5 // pred_fallthru
      _
    %p205 = scmp.lt.s32.totalorder %s12, 2
    // Predicated region
    $region21: #{transformer_forward.17} parent=5 // pred_check
      %p206 = pneg %p205
    $region22: #{transformer_forward.17} parent=5 // pred_check_branch
      %208 = sbr.rel (%p206) target = $region24
    $region23: #{transformer_forward.17} parent=5 // pred_region
      // Predicated region
      $region25: #{transformer_forward.17} parent=23 // pred_check
        %p209 = pneg %p32
      $region26: #{transformer_forward.17} parent=23 // pred_check_branch
        %211 = sbr.rel (%p209) target = $region28
      $region27: #{transformer_forward.17} parent=23 // pred_region
        %p212 = scmp.lt.s32.totalorder %s12, 1
        %s213 = scalar_select %p212, %s12, 1
        %s214 = smul.addr %s213, 4
        %s215 = scalar_lea.vmem %s0, %s214
      $region28: #{transformer_forward.17} parent=23 // pred_fallthru
        _
      // Predicated region
      $region29: #{transformer_forward.17} parent=23 // pred_check
        %p216 = pneg %p58
      $region30: #{transformer_forward.17} parent=23 // pred_check_branch
        %218 = sbr.rel (%p216) target = $region32
      $region31: #{transformer_forward.17} parent=23 // pred_region
        %p219 = scmp.lt.s32.totalorder %s12, 1
        %s220 = scalar_select %p219, %s12, 1
        %s221 = smul.addr %s220, 2
        %s222 = smul.addr %s221, 4
        %s223 = scalar_lea.vmem %s1, %s222
      $region32: #{transformer_forward.17} parent=23 // pred_fallthru
        _
      // Predicated region
      $region33: #{transformer_forward.17} parent=23 // pred_check
        %p224 = pneg %p84
      $region34: #{transformer_forward.17} parent=23 // pred_check_branch
        %226 = sbr.rel (%p224) target = $region36
      $region35: #{transformer_forward.17} parent=23 // pred_region
        %p227 = scmp.lt.s32.totalorder %s12, 1
        %s228 = scalar_select %p227, %s12, 1
        %s229 = scalar_lea.vmem %s2, %s228
      $region36: #{transformer_forward.17} parent=23 // pred_fallthru
        _
      // Predicated region
      $region37: #{transformer_forward.17} parent=23 // pred_check
        %p230 = pneg %p152
      $region38: #{transformer_forward.17} parent=23 // pred_check_branch
        %232 = sbr.rel (%p230) target = $region40
      $region39: #{transformer_forward.17} parent=23 // pred_region
        %p233 = scmp.lt.s32.totalorder %s12, 1
        %s234 = scalar_select %p233, %s12, 1
        %s235 = smul.addr %s234, 8
        %s236 = scalar_lea.vmem %s5, %s235
      $region40: #{transformer_forward.17} parent=23 // pred_fallthru
        _
    $region24: #{transformer_forward.17} parent=5 // pred_fallthru
      _
    %p237 = scmp.le.s32.totalorder 1, %s12
    %p238 = scmp.lt.s32.totalorder %s12, 3
    %p239 = pnand %p237, %p238
    %p240 = pneg %p239
    // Predicated region
    $region41: #{transformer_forward.17} parent=5 // pred_check
      _
    $region42: #{transformer_forward.17} parent=5 // pred_check_branch
      %242 = sbr.rel (%p239) target = $region44
    $region43: #{transformer_forward.17} parent=5 // pred_region
      %s243 = ssub.s32 %s12, 1
      %p244 = scmp.lt.s32.totalorder %s17, 1
      %s245 = scalar_select %p244, %s17, 1
      %s246 = smul.addr %s245, 4
      %s247 = scalar_lea.vmem %s0, %s246
      %p248 = pneg %p38
      %p249 = pneg %p35
      %p250 = scmp.lt.s32.totalorder %s17, 1
      %s251 = scalar_select %p250, %s17, 1
      %s252 = smul.addr %s251, 2
      %s253 = smul.addr %s252, 4
      %s254 = scalar_lea.vmem %s1, %s253
      %p255 = pneg %p64
      %p256 = pneg %p61
      %p257 = scmp.lt.s32.totalorder %s17, 1
      %s258 = scalar_select %p257, %s17, 1
      %s259 = scalar_lea.vmem %s2, %s258
      %p260 = pneg %p90
      %p261 = pneg %p87
      %p262 = pneg %p111
      %p263 = pneg %p108
      %p264 = pneg %p132
      %p265 = pneg %p129
      %p266 = scmp.lt.s32.totalorder %s17, 1
      %s267 = scalar_select %p266, %s17, 1
      %s268 = smul.addr %s267, 8
      %s269 = scalar_lea.vmem %s5, %s268
      %p270 = pneg %p158
      %p271 = pneg %p155
      %p272 = pneg %p184
      %p273 = pneg %p181
      %p274 = scmp.lt.s32.totalorder %s17, 1
      %s275 = scalar_select %p274, %s17, 1
      %s276 = smul.addr %s275, 8
      %s277 = scalar_lea.vmem %s6, %s276
      %p278 = scmp.lt.s32.totalorder %s17, 1
      %s279 = scalar_select %p278, %s17, 1
      %s280 = smul.addr %s279, 4
      %s281 = scalar_lea.vmem %s0, %s280
      %p282 = scmp.lt.s32.totalorder %s17, 1
      %s283 = scalar_select %p282, %s17, 1
      %s284 = smul.addr %s283, 2
      %s285 = smul.addr %s284, 4
      %s286 = scalar_lea.vmem %s1, %s285
      %p287 = scmp.lt.s32.totalorder %s17, 1
      %s288 = scalar_select %p287, %s17, 1
      %s289 = scalar_lea.vmem %s2, %s288
      %p290 = scmp.lt.s32.totalorder %s17, 1
      %s291 = scalar_select %p290, %s17, 1
      %s292 = smul.addr %s291, 8
      %s293 = scalar_lea.vmem %s5, %s292
      %p294 = scmp.lt.s32.totalorder %s17, 1
      %s295 = scalar_select %p294, %s17, 1
      %s296 = smul.addr %s295, 8
      %s297 = scalar_lea.vmem %s6, %s296
      %v299 = vld [vmem:[%s289] sm:$0x1]
      %vm300 = vcmp.eq.s32.totalorder %v299, 0
      %v301 = vsel %vm300, -1e+09, 0.0
      %v303 = vperm.slane %v301, 0
      %v305 = vld [vmem:[%s281] sm:$0xf]
      %v306 = vunpack.c.l.bf16 %v305
      %v307 = vmul.f32 %v306, 0.25
      %v308 = vpack.c.bf16 %v307, %v307
      %v309 = vld [vmem:[%s286] sm:$0xf]
      %v310 = vld [vmem:[%s286 + $0x4] sm:$0xf]
      %v313 = vunpack.c.l.b16 %v309
      %v314 = vunpack.c.l.b16 %v310
      %v315 = vpack.c.b16 %v314, %v313
      %vm316 = vcmask 130048
      %v318 = vsel %vm316, %v308, 0
      %v321 = vsel %vm316, %v315, 0
      %323 = vmatpush.bf16.xpose.msra.mxu0 0
      %324 = vmatpush.bf16.xpose.msra.mxu0 0
      %325 = vmatpush.bf16.xpose.msra.mxu0 0
      %326 = vmatpush.bf16.xpose.msra.mxu0 0
      %327 = vmatpush.bf16.xpose.msra.mxu0 0
      %328 = vmatpush.bf16.xpose.msra.mxu0 0
      %329 = vmatpush.bf16.xpose.msra.mxu0 0
      %330 = vmatpush.bf16.xpose.msra.mxu0 %v321
      %331 = vmatmul.bf16.gmra.mxu0 %v318
      %v332 = vpop.f32.mrf.mxu0
      %v333 = vadd.f32 %v303, %v332
      %v334 = vpop.f32.mrf.mxu0
      %335 = vdwg.mxu0
      %v336 = vsel %vm316, %v333, -inf
      %337 = vmax.xlane.f32.xlu0 %v336
      %v338 = vpop.xlane.xlu0 %337
      %v339 = vsub.f32 %v333, %v338
      %v340 = vmul.f32 %v339, 1.442695
      %v341 = vpow.pop %v340
      %v342 = vsel %vm316, %v341, 0.0
      %343 = vadd.xlane.f32.xlu0 %v342
      %v344 = vpop.xlane.xlu0 %343
      %v345 = vrcp.pop %v344
      %v346 = vmul.f32 %v341, %v345
      %v347 = vpack.c.bf16 %v346, %v346
      %348 = vrot.lane.b32.xlu0 %v315, 64
      %v349 = vpop.permute.xlu0 %348
      %v352 = vsel %vm316, %v347, 0
      %354 = vmatpush.bf16.msra.mxu0 0
      %355 = vmatpush.bf16.msra.mxu0 0
      %356 = vmatpush.bf16.msra.mxu0 0
      %357 = vmatpush.bf16.msra.mxu0 0
      %358 = vmatpush.bf16.msra.mxu0 0
      %359 = vmatpush.bf16.msra.mxu0 0
      %360 = vmatpush.bf16.msra.mxu0 0
      %361 = vmatpush.bf16.msra.mxu0 %v349
      %362 = vmatmul.bf16.gmra.mxu0 %v352
      %v363 = vpop.f32.mrf.mxu0
      %v364 = vadd.f32 0.0, %v363
      %v365 = vpop.f32.mrf.mxu0
      %366 = vdwg.mxu0
      %v367 = vpack.c.bf16 %v364, %v364
      %vm368 = vcmask 125952
      %369 = vst.msk [vmem:[#allocation2] sm:$0xf] %vm368, %v367
      %v370 = vld [vmem:[%s281] sm:$0xf]
      %v371 = vunpack.c.l.bf16 %v370
      %v372 = vmul.f32 %v371, 0.25
      %v373 = vpack.c.bf16 %v372, %v372
      %v374 = vld [vmem:[%s286] sm:$0xf]
      %v375 = vld [vmem:[%s286 + $0x4] sm:$0xf]
      %377 = vrot.lane.b32.xlu0 %v373, 112
      %v378 = vpop.permute.xlu0 %377
      %v381 = vunpack.c.l.b16 %v374
      %v382 = vunpack.c.l.b16 %v375
      %v383 = vpack.c.b16 %v382, %v381
      %384 = vrot.lane.b32.xlu0 %v383, 112
      %v385 = vpop.permute.xlu0 %384
      %v387 = vsel %vm316, %v378, 0
      %v390 = vsel %vm316, %v385, 0
      %392 = vmatpush.bf16.xpose.msra.mxu0 0
      %393 = vmatpush.bf16.xpose.msra.mxu0 0
      %394 = vmatpush.bf16.xpose.msra.mxu0 0
      %395 = vmatpush.bf16.xpose.msra.mxu0 0
      %396 = vmatpush.bf16.xpose.msra.mxu0 0
      %397 = vmatpush.bf16.xpose.msra.mxu0 0
      %398 = vmatpush.bf16.xpose.msra.mxu0 0
      %399 = vmatpush.bf16.xpose.msra.mxu0 %v390
      %400 = vmatmul.bf16.gmra.mxu0 %v387
      %v401 = vpop.f32.mrf.mxu0
      %v402 = vadd.f32 %v303, %v401
      %v403 = vpop.f32.mrf.mxu0
      %404 = vdwg.mxu0
      %v405 = vsel %vm316, %v402, -inf
      %406 = vmax.xlane.f32.xlu0 %v405
      %v407 = vpop.xlane.xlu0 %406
      %v408 = vsub.f32 %v402, %v407
      %v409 = vmul.f32 %v408, 1.442695
      %v410 = vpow.pop %v409
      %v411 = vsel %vm316, %v410, 0.0
      %412 = vadd.xlane.f32.xlu0 %v411
      %v413 = vpop.xlane.xlu0 %412
      %v414 = vrcp.pop %v413
      %v415 = vmul.f32 %v410, %v414
      %v416 = vpack.c.bf16 %v415, %v415
      %417 = vrot.lane.b32.xlu0 %v383, 48
      %v418 = vpop.permute.xlu0 %417
      %v421 = vsel %vm316, %v416, 0
      %423 = vmatpush.bf16.msra.mxu0 0
      %424 = vmatpush.bf16.msra.mxu0 0
      %425 = vmatpush.bf16.msra.mxu0 0
      %426 = vmatpush.bf16.msra.mxu0 0
      %427 = vmatpush.bf16.msra.mxu0 0
      %428 = vmatpush.bf16.msra.mxu0 0
      %429 = vmatpush.bf16.msra.mxu0 0
      %430 = vmatpush.bf16.msra.mxu0 %v418
      %431 = vmatmul.bf16.gmra.mxu0 %v421
      %v432 = vpop.f32.mrf.mxu0
      %v433 = vadd.f32 0.0, %v432
      %v434 = vpop.f32.mrf.mxu0
      %435 = vdwg.mxu0
      %v436 = vpack.c.bf16 %v433, %v433
      %438 = vrot.lane.b32.xlu0 %v436, 16
      %v439 = vpop.permute.xlu0 %438
      %vm441 = vcmask 257152
      %442 = vst.msk [vmem:[#allocation2] sm:$0xf] %vm441, %v439
      %v443 = vld [vmem:[%s281] sm:$0xf]
      %v444 = vunpack.c.l.bf16 %v443
      %v445 = vmul.f32 %v444, 0.25
      %v446 = vpack.c.bf16 %v445, %v445
      %v447 = vld [vmem:[%s286] sm:$0xf]
      %v448 = vld [vmem:[%s286 + $0x4] sm:$0xf]
      %450 = vrot.lane.b32.xlu0 %v446, 96
      %v451 = vpop.permute.xlu0 %450
      %v454 = vunpack.c.l.b16 %v447
      %v455 = vunpack.c.l.b16 %v448
      %v456 = vpack.c.b16 %v455, %v454
      %457 = vrot.lane.b32.xlu0 %v456, 96
      %v458 = vpop.permute.xlu0 %457
      %v460 = vsel %vm316, %v451, 0
      %v463 = vsel %vm316, %v458, 0
      %465 = vmatpush.bf16.xpose.msra.mxu0 0
      %466 = vmatpush.bf16.xpose.msra.mxu0 0
      %467 = vmatpush.bf16.xpose.msra.mxu0 0
      %468 = vmatpush.bf16.xpose.msra.mxu0 0
      %469 = vmatpush.bf16.xpose.msra.mxu0 0
      %470 = vmatpush.bf16.xpose.msra.mxu0 0
      %471 = vmatpush.bf16.xpose.msra.mxu0 0
      %472 = vmatpush.bf16.xpose.msra.mxu0 %v463
      %473 = vmatmul.bf16.gmra.mxu0 %v460
      %v474 = vpop.f32.mrf.mxu0
      %v475 = vadd.f32 %v303, %v474
      %v476 = vpop.f32.mrf.mxu0
      %477 = vdwg.mxu0
      %v478 = vsel %vm316, %v475, -inf
      %479 = vmax.xlane.f32.xlu0 %v478
      %v480 = vpop.xlane.xlu0 %479
      %v481 = vsub.f32 %v475, %v480
      %v482 = vmul.f32 %v481, 1.442695
      %v483 = vpow.pop %v482
      %v484 = vsel %vm316, %v483, 0.0
      %485 = vadd.xlane.f32.xlu0 %v484
      %v486 = vpop.xlane.xlu0 %485
      %v487 = vrcp.pop %v486
      %v488 = vmul.f32 %v483, %v487
      %v489 = vpack.c.bf16 %v488, %v488
      %490 = vrot.lane.b32.xlu0 %v456, 32
      %v491 = vpop.permute.xlu0 %490
      %v494 = vsel %vm316, %v489, 0
      %496 = vmatpush.bf16.msra.mxu0 0
      %497 = vmatpush.bf16.msra.mxu0 0
      %498 = vmatpush.bf16.msra.mxu0 0
      %499 = vmatpush.bf16.msra.mxu0 0
      %500 = vmatpush.bf16.msra.mxu0 0
      %501 = vmatpush.bf16.msra.mxu0 0
      %502 = vmatpush.bf16.msra.mxu0 0
      %503 = vmatpush.bf16.msra.mxu0 %v491
      %504 = vmatmul.bf16.gmra.mxu0 %v494
      %v505 = vpop.f32.mrf.mxu0
      %v506 = vadd.f32 0.0, %v505
      %v507 = vpop.f32.mrf.mxu0
      %508 = vdwg.mxu0
      %v509 = vpack.c.bf16 %v506, %v506
      %511 = vrot.lane.b32.xlu0 %v509, 32
      %v512 = vpop.permute.xlu0 %511
      %vm514 = vcmask 388352
      %515 = vst.msk [vmem:[#allocation2] sm:$0xf] %vm514, %v512
      %v516 = vld [vmem:[%s281] sm:$0xf]
      %v517 = vunpack.c.l.bf16 %v516
      %v518 = vmul.f32 %v517, 0.25
      %v519 = vpack.c.bf16 %v518, %v518
      %v520 = vld [vmem:[%s286] sm:$0xf]
      %v521 = vld [vmem:[%s286 + $0x4] sm:$0xf]
      %523 = vrot.lane.b32.xlu0 %v519, 80
      %v524 = vpop.permute.xlu0 %523
      %v527 = vunpack.c.l.b16 %v520
      %v528 = vunpack.c.l.b16 %v521
      %v529 = vpack.c.b16 %v528, %v527
      %530 = vrot.lane.b32.xlu0 %v529, 80
      %v531 = vpop.permute.xlu0 %530
      %v533 = vsel %vm316, %v524, 0
      %v536 = vsel %vm316, %v531, 0
      %538 = vmatpush.bf16.xpose.msra.mxu0 0
      %539 = vmatpush.bf16.xpose.msra.mxu0 0
      %540 = vmatpush.bf16.xpose.msra.mxu0 0
      %541 = vmatpush.bf16.xpose.msra.mxu0 0
      %542 = vmatpush.bf16.xpose.msra.mxu0 0
      %543 = vmatpush.bf16.xpose.msra.mxu0 0
      %544 = vmatpush.bf16.xpose.msra.mxu0 0
      %545 = vmatpush.bf16.xpose.msra.mxu0 %v536
      %546 = vmatmul.bf16.gmra.mxu0 %v533
      %v547 = vpop.f32.mrf.mxu0
      %v548 = vadd.f32 %v303, %v547
      %v549 = vpop.f32.mrf.mxu0
      %550 = vdwg.mxu0
      %v551 = vsel %vm316, %v548, -inf
      %552 = vmax.xlane.f32.xlu0 %v551
      %v553 = vpop.xlane.xlu0 %552
      %v554 = vsub.f32 %v548, %v553
      %v555 = vmul.f32 %v554, 1.442695
      %v556 = vpow.pop %v555
      %v557 = vsel %vm316, %v556, 0.0
      %558 = vadd.xlane.f32.xlu0 %v557
      %v559 = vpop.xlane.xlu0 %558
      %v560 = vrcp.pop %v559
      %v561 = vmul.f32 %v556, %v560
      %v562 = vpack.c.bf16 %v561, %v561
      %563 = vrot.lane.b32.xlu0 %v529, 16
      %v564 = vpop.permute.xlu0 %563
      %v567 = vsel %vm316, %v562, 0
      %569 = vmatpush.bf16.msra.mxu0 0
      %570 = vmatpush.bf16.msra.mxu0 0
      %571 = vmatpush.bf16.msra.mxu0 0
      %572 = vmatpush.bf16.msra.mxu0 0
      %573 = vmatpush.bf16.msra.mxu0 0
      %574 = vmatpush.bf16.msra.mxu0 0
      %575 = vmatpush.bf16.msra.mxu0 0
      %576 = vmatpush.bf16.msra.mxu0 %v564
      %577 = vmatmul.bf16.gmra.mxu0 %v567
      %v578 = vpop.f32.mrf.mxu0
      %v579 = vadd.f32 0.0, %v578
      %v580 = vpop.f32.mrf.mxu0
      %581 = vdwg.mxu0
      %v582 = vpack.c.bf16 %v579, %v579
      %584 = vrot.lane.b32.xlu0 %v582, 48
      %v585 = vpop.permute.xlu0 %584
      %vm587 = vcmask 519552
      %588 = vst.msk [vmem:[#allocation2] sm:$0xf] %vm587, %v585
      %v589 = vld [vmem:[#allocation2] sm:$0xf]
      %v590 = vld [vmem:[%s3] sm:$0xf]
      %v591 = vld [vmem:[%s3 + $0x4] sm:$0xf]
      %v592 = vld [vmem:[%s3 + $0x8] sm:$0xf]
      %v593 = vld [vmem:[%s3 + $0xc] sm:$0xf]
      %v594 = vld [vmem:[%s3 + $0x10] sm:$0xf]
      %v595 = vld [vmem:[%s3 + $0x14] sm:$0xf]
      %v596 = vld [vmem:[%s3 + $0x18] sm:$0xf]
      %v597 = vld [vmem:[%s3 + $0x1c] sm:$0xf]
      %v598 = vld [vmem:[%s4] sm:$0x1]
      %v600 = vperm.slane %v598, 0
      %v610 = vunpack.c.l.b16 %v590
      %v611 = vunpack.c.l.b16 %v591
      %v612 = vunpack.c.l.b16 %v592
      %v613 = vunpack.c.l.b16 %v593
      %v614 = vunpack.c.l.b16 %v594
      %v615 = vunpack.c.l.b16 %v595
      %v616 = vunpack.c.l.b16 %v596
      %v617 = vunpack.c.l.b16 %v597
      %v618 = vpack.c.b16 %v611, %v610
      %v619 = vpack.c.b16 %v613, %v612
      %v620 = vpack.c.b16 %v615, %v614
      %v621 = vpack.c.b16 %v617, %v616
      %vm626 = vcmask 523264
      %v628 = vsel %vm626, %v589, 0
      %630 = vmatpush.bf16.msra.mxu0 0
      %631 = vmatpush.bf16.msra.mxu0 0
      %632 = vmatpush.bf16.msra.mxu0 0
      %633 = vmatpush.bf16.msra.mxu0 0
      %634 = vmatpush.bf16.msra.mxu0 %v621
      %635 = vmatpush.bf16.msra.mxu0 %v620
      %636 = vmatpush.bf16.msra.mxu0 %v619
      %637 = vmatpush.bf16.msra.mxu0 %v618
      %638 = vmatmul.bf16.gmra.mxu0 %v628
      %v639 = vpop.f32.mrf.mxu0
      %v640 = vadd.f32 %v600, %v639
      %v641 = vpop.f32.mrf.mxu0
      %642 = vdwg.mxu0
      %v643 = vld [vmem:[%s293] sm:$0xff]
      %v644 = vadd.f32 %v640, %v643
      %645 = vst.msk [vmem:[%s297] sm:$0xff] %vm626, %v644
      %p646 = scmp.lt.s32.totalorder %s17, 1
      %s647 = scalar_select %p646, %s17, 1
      %s648 = smul.addr %s647, 8
      %s649 = scalar_lea.vmem %s6, %s648
      // Predicated region
      $region45: #{transformer_forward.17} parent=43 // pred_check
        %p650 = pneg %p181
      $region46: #{transformer_forward.17} parent=43 // pred_check_branch
        %652 = sbr.rel (%p650) target = $region48
      $region47: #{transformer_forward.17} parent=43 // pred_region
        _
      $region48: #{transformer_forward.17} parent=43 // pred_fallthru
        _
    $region44: #{transformer_forward.17} parent=5 // pred_fallthru
      _
    %p653 = scmp.le.s32.totalorder 2, %s12
    // Predicated region
    $region49: #{transformer_forward.17} parent=5 // pred_check
      %p654 = pneg %p653
    $region50: #{transformer_forward.17} parent=5 // pred_check_branch
      %656 = sbr.rel (%p654) target = $region52
    $region51: #{transformer_forward.17} parent=5 // pred_region
      %s657 = ssub.s32 %s12, 2
      // Predicated region
      $region53: #{transformer_forward.17} parent=51 // pred_check
        %p658 = pneg %p187
      $region54: #{transformer_forward.17} parent=51 // pred_check_branch
        %660 = sbr.rel (%p658) target = $region56
      $region55: #{transformer_forward.17} parent=51 // pred_region
        %p661 = scmp.lt.s32.totalorder %s18, 1
        %s662 = scalar_select %p661, %s18, 1
        %s663 = smul.addr %s662, 8
        %s664 = scalar_lea.vmem %s6, %s663
      $region56: #{transformer_forward.17} parent=51 // pred_fallthru
        _
    $region52: #{transformer_forward.17} parent=5 // pred_fallthru
      _
  $region6: #{transformer_forward.17} parent=0 // loop_footer
    %s16 = sadd.s32 1, %s12
  $region7: #{transformer_forward.17} parent=0 // loop_footer_branch
    %11 = sbr.rel target = $region3
  $region8: #{transformer_forward.17} parent=0 // loop_exit
    _

</llo_original>
